<compile_context>
chip_gen: v5e
topology: v5e:2x2
jax: 0.10.0
libtpu: 0.0.40
codegen_flags: <defaults>
</compile_context>

<pallas_src>
import jax
import jax.numpy as jnp
from jax import lax
from jax.experimental import pallas as pl
from jax.experimental.pallas import tpu as pltpu

# ----------------------------- model sizes ---------------------------------
HIDDEN = 128                 # nn.LSTM hidden_size (module default)
EMB_DIM = 2 * HIDDEN         # embedding_dim (must equal 2H so output[i]=out)
VOCAB = 50
B, N, L = 2, 8, 8            # batch of episodes, samples per episode, seq len


# ----------------------------- Pallas kernel --------------------------------
def bilstm_sum_kernel(x_ref, w_in_ref, b_in_ref, whh_f_ref, whh_b_ref,
                      out_ref, gin_f_ref, gin_b_ref):
    """x_ref: (L*M, D) bf16; w_in_ref: (D, 8H) bf16; b_in_ref: (1, 8H) f32;
    whh_*_ref: (H, 4H) bf16; out_ref: (M, 2H) f32;
    gin_*_ref: (L*M, 4H) f32 VMEM scratch (per-direction input gates)."""
    M = out_ref.shape[0]
    H = out_ref.shape[1] // 2
    steps = x_ref.shape[0] // M
    G = 4 * H
    H3 = 3 * H

    # --- input projection for both directions, hoisted off the recurrence ---
    # Single fat-M MXU matmul (L*M rows), f32 accumulation + f32 bias.
    gin_all = jnp.dot(x_ref[...], w_in_ref[...],
                      preferred_element_type=jnp.float32) + b_in_ref[...]
    gin_f_ref[...] = gin_all[:, :G]
    gin_b_ref[...] = gin_all[:, G:]

    whh_f = whh_f_ref[...]
    whh_b = whh_b_ref[...]
    cdt = whh_f.dtype

    def lstm_step(gates, h, c):
        # gate column order is (i, f, o, g): one wide sigmoid + one tanh.
        sig = jax.nn.sigmoid(gates[:, :H3])
        g_g = jnp.tanh(gates[:, H3:])
        c_new = sig[:, H:2 * H] * c + sig[:, :H] * g_g
        h_new = sig[:, 2 * H:H3] * jnp.tanh(c_new)
        return h_new, c_new

    zeros = jnp.zeros((M, H), jnp.float32)
    h_f, c_f, acc_f = zeros, zeros, zeros
    h_b, c_b, acc_b = zeros, zeros, zeros

    # Fused fwd/bwd recurrence, fully unrolled (L is small & static) so the
    # two independent h@whh matmuls and EUP gate math of each step co-issue.
    for t in range(steps):
        tb = steps - 1 - t
        g_f = (gin_f_ref[t * M:(t + 1) * M, :]
               + jnp.dot(h_f.astype(cdt), whh_f,
                         preferred_element_type=jnp.float32))
        g_b = (gin_b_ref[tb * M:(tb + 1) * M, :]
               + jnp.dot(h_b.astype(cdt), whh_b,
                         preferred_element_type=jnp.float32))
        h_f, c_f = lstm_step(g_f, h_f, c_f)
        h_b, c_b = lstm_step(g_b, h_b, c_b)
        acc_f = acc_f + h_f
        acc_b = acc_b + h_b

    # Single lane-dense (M, 2H) output, written in two 128-lane halves.
    out_ref[:, :H] = acc_f.astype(out_ref.dtype)
    out_ref[:, H:] = acc_b.astype(out_ref.dtype)


# ------------------------------- wrapper -------------------------------------
def rnnseq_forward(text, emb_table, params):
    """text: (B, N, L) int32; emb_table: (VOCAB, D);
    params: (wih_f, whh_f, b_f, wih_b, whh_b, b_b) in PyTorch gate order
    (i, f, g, o), stored pre-transposed as (D,4H) / (H,4H) / (1,4H)."""
    wih_f, whh_f, b_f, wih_b, whh_b, b_b = params
    Bn, Nn, Ln = text.shape
    Dn = emb_table.shape[1]
    H = whh_f.shape[0]
    M = Bn * Nn

    # host-side gate-column permutation (i,f,g,o) -> (i,f,o,g)
    def perm(w):
        return jnp.concatenate(
            [w[..., :2 * H], w[..., 3 * H:4 * H], w[..., 2 * H:3 * H]],
            axis=-1)

    # combined input projection for both directions; bf16 MXU operands.
    w_in = jnp.concatenate([perm(wih_f), perm(wih_b)],
                           axis=-1).astype(jnp.bfloat16)        # (D, 8H)
    b_in = jnp.concatenate([perm(b_f), perm(b_b)], axis=-1)     # (1, 8H) f32
    whh_fp = perm(whh_f).astype(jnp.bfloat16)                   # (H, 4H)
    whh_bp = perm(whh_b).astype(jnp.bfloat16)                   # (H, 4H)

    # Embedding gather with time-major indices so no activation transpose is
    # needed: (L, B*N) ids -> (L*B*N, D) activations, row = t*(B*N) + b*N + n.
    # TODO(synk): move the gather in-kernel (scalar-prefetch token ids + DMA
    # rows of emb_table) and, on v7x, split the two directions across the 2
    # TensorCores via a 2-point parallel grid.
    text_t = jnp.transpose(text, (2, 0, 1)).reshape(Ln, M)
    x = emb_table.astype(jnp.bfloat16)[text_t].reshape(Ln * M, Dn)

    grid_spec = pltpu.PrefetchScalarGridSpec(
        num_scalar_prefetch=0,
        grid=(1,),
        in_specs=[
            pl.BlockSpec((Ln * M, Dn), lambda i: (0, 0)),     # x
            pl.BlockSpec((Dn, 8 * H), lambda i: (0, 0)),      # w_in
            pl.BlockSpec((1, 8 * H), lambda i: (0, 0)),       # b_in
            pl.BlockSpec((H, 4 * H), lambda i: (0, 0)),       # whh fwd
            pl.BlockSpec((H, 4 * H), lambda i: (0, 0)),       # whh bwd
        ],
        out_specs=pl.BlockSpec((M, 2 * H), lambda i: (0, 0)),
        scratch_shapes=[
            pltpu.VMEM((Ln * M, 4 * H), jnp.float32),   # fwd input-gate preacts
            pltpu.VMEM((Ln * M, 4 * H), jnp.float32),   # bwd input-gate preacts
        ],
    )

    out = pl.pallas_call(
        bilstm_sum_kernel,
        out_shape=jax.ShapeDtypeStruct((M, 2 * H), jnp.float32),
        grid_spec=grid_spec,
        compiler_params=pltpu.CompilerParams(
            dimension_semantics=("arbitrary",)),
    )(x, w_in, b_in, whh_fp, whh_bp)

    return out.reshape(Bn, Nn, 2 * H)


# ------------------------- pure-JAX reference -------------------------------
def _ref_bilstm_sum(ebd, params):
    wih_f, whh_f, b_f, wih_b, whh_b, b_b = params
    H = whh_f.shape[0]

    def cell(carry, x_t, wih, whh, bias):
        h, c = carry
        g = x_t @ wih + h @ whh + bias           # PyTorch gate order (i,f,g,o)
        i = jax.nn.sigmoid(g[:, :H])
        f = jax.nn.sigmoid(g[:, H:2 * H])
        gg = jnp.tanh(g[:, 2 * H:3 * H])
        o = jax.nn.sigmoid(g[:, 3 * H:])
        c = f * c + i * gg
        h = o * jnp.tanh(c)
        return (h, c), h

    def run(xi, wih, whh, bias, reverse):
        n = xi.shape[0]
        xs = jnp.swapaxes(xi, 0, 1)              # (L, N, D)
        if reverse:
            xs = xs[::-1]
        init = (jnp.zeros((n, H), jnp.float32), jnp.zeros((n, H), jnp.float32))
        _, hs = lax.scan(lambda c_, xt: cell(c_, xt, wih, whh, bias), init, xs)
        return hs.sum(axis=0)

    outs = []
    for i in range(ebd.shape[0]):
        f = run(ebd[i], wih_f, whh_f, b_f, False)
        bw = run(ebd[i], wih_b, whh_b, b_b, True)
        outs.append(jnp.concatenate([f, bw], axis=-1))
    return jnp.stack(outs)


# --------------------------------- main --------------------------------------
if __name__ == "__main__":
    key = jax.random.PRNGKey(0)
    k_emb, k_txt, k1, k2, k3, k4, k5, k6 = jax.random.split(key, 8)

    # deterministic "checkpoint-free" parameters
    emb_table = jax.random.normal(k_emb, (VOCAB, EMB_DIM), jnp.float32) * 0.1
    text = jax.random.randint(k_txt, (B, N, L), 0, VOCAB, jnp.int32)

    s = 0.1
    # PyTorch layout is (4H, D)/(4H, H); we store pre-transposed (D,4H)/(H,4H).
    wih_f = jax.random.normal(k1, (EMB_DIM, 4 * HIDDEN), jnp.float32) * s
    whh_f = jax.random.normal(k2, (HIDDEN, 4 * HIDDEN), jnp.float32) * s
    b_f = jax.random.normal(k3, (1, 4 * HIDDEN), jnp.float32) * s   # b_ih+b_hh
    wih_b = jax.random.normal(k4, (EMB_DIM, 4 * HIDDEN), jnp.float32) * s
    whh_b = jax.random.normal(k5, (HIDDEN, 4 * HIDDEN), jnp.float32) * s
    b_b = jax.random.normal(k6, (1, 4 * HIDDEN), jnp.float32) * s
    params = (wih_f, whh_f, b_f, wih_b, whh_b, b_b)

    out = rnnseq_forward(text, emb_table, params)
    out = jax.block_until_ready(out)
    assert out.shape == (B, N, 2 * HIDDEN), out.shape

    ref = _ref_bilstm_sum(emb_table[text], params)
    # bf16 MXU operands (f32 accumulation / f32 gate math) -> loosened tol.
    err = float(jnp.max(jnp.abs(out - ref)))
    assert jnp.allclose(out, ref, atol=2e-2, rtol=2e-2), err

    print("KERNEL_OK")
</pallas_src>

<mosaic_0001>
module attributes {stable_mosaic.version = 11 : i64} {
  func.func @bilstm_sum_kernel(%arg0: i32, %arg1: memref<128x256xbf16, #tpu.memory_space<vmem>>, %arg2: memref<256x1024xbf16, #tpu.memory_space<vmem>>, %arg3: memref<1x1024xf32, #tpu.memory_space<vmem>>, %arg4: memref<128x512xbf16, #tpu.memory_space<vmem>>, %arg5: memref<128x512xbf16, #tpu.memory_space<vmem>>, %arg6: memref<16x256xf32, #tpu.memory_space<vmem>>, %arg7: memref<128x512xf32, #tpu.memory_space<vmem>>, %arg8: memref<128x512xf32, #tpu.memory_space<vmem>>) attributes {dimension_semantics = [#tpu.dimension_semantics<arbitrary>], iteration_bounds = array<i64: 1>, scalar_prefetch = 0 : i64, scratch_operands = 2 : i64, tpu.core_type = #tpu.core_type<tc>, window_params = [{pipeline_mode = #tpu.pipeline_mode<synchronous>, transform_indices = @transform_0, window_bounds = array<i64: 128, 256>}, {pipeline_mode = #tpu.pipeline_mode<synchronous>, transform_indices = @transform_1, window_bounds = array<i64: 256, 1024>}, {pipeline_mode = #tpu.pipeline_mode<synchronous>, transform_indices = @transform_2, window_bounds = array<i64: 1, 1024>}, {pipeline_mode = #tpu.pipeline_mode<synchronous>, transform_indices = @transform_3, window_bounds = array<i64: 128, 512>}, {pipeline_mode = #tpu.pipeline_mode<synchronous>, transform_indices = @transform_4, window_bounds = array<i64: 128, 512>}, {pipeline_mode = #tpu.pipeline_mode<synchronous>, transform_indices = @transform_5, window_bounds = array<i64: 16, 256>}]} {
    %c0 = arith.constant 0 : index
    %c0_0 = arith.constant 0 : index
    %0 = vector.load %arg1[%c0, %c0_0] : memref<128x256xbf16, #tpu.memory_space<vmem>>, vector<128x256xbf16>
    %c0_1 = arith.constant 0 : index
    %c0_2 = arith.constant 0 : index
    %1 = vector.load %arg2[%c0_1, %c0_2] : memref<256x1024xbf16, #tpu.memory_space<vmem>>, vector<256x1024xbf16>
    %cst = arith.constant dense<0.000000e+00> : vector<128x1024xf32>
    %2 = tpu.matmul %0, %1, %cst {dimension_numbers = #tpu.dot_dimension_numbers<[1], [0], [0], [1], [0, 0, 1, 1], [], []>} : vector<128x256xbf16>, vector<256x1024xbf16>, vector<128x1024xf32> -> vector<128x1024xf32>
    %c0_3 = arith.constant 0 : index
    %c0_4 = arith.constant 0 : index
    %3 = vector.load %arg3[%c0_3, %c0_4] : memref<1x1024xf32, #tpu.memory_space<vmem>>, vector<1x1024xf32>
    %4 = vector.broadcast %3 : vector<1x1024xf32> to vector<128x1024xf32>
    %5 = arith.addf %2, %4 : vector<128x1024xf32>
    %6 = vector.extract_strided_slice %5 {offsets = [0, 0], sizes = [128, 512], strides = [1, 1]} : vector<128x1024xf32> to vector<128x512xf32>
    %c0_5 = arith.constant 0 : index
    %c0_6 = arith.constant 0 : index
    %7 = vector.load %arg7[%c0_5, %c0_6] : memref<128x512xf32, #tpu.memory_space<vmem>>, vector<128x512xf32>
    tpu.vector_store %arg7[%c0_5, %c0_6], %6 {strides = array<i32>} : memref<128x512xf32, #tpu.memory_space<vmem>>, vector<128x512xf32>,
    %8 = vector.extract_strided_slice %5 {offsets = [0, 512], sizes = [128, 512], strides = [1, 1]} : vector<128x1024xf32> to vector<128x512xf32>
    %c0_7 = arith.constant 0 : index
    %c0_8 = arith.constant 0 : index
    %9 = vector.load %arg8[%c0_7, %c0_8] : memref<128x512xf32, #tpu.memory_space<vmem>>, vector<128x512xf32>
    tpu.vector_store %arg8[%c0_7, %c0_8], %8 {strides = array<i32>} : memref<128x512xf32, #tpu.memory_space<vmem>>, vector<128x512xf32>,
    %c0_9 = arith.constant 0 : index
    %c0_10 = arith.constant 0 : index
    %10 = vector.load %arg4[%c0_9, %c0_10] : memref<128x512xbf16, #tpu.memory_space<vmem>>, vector<128x512xbf16>
    %c0_11 = arith.constant 0 : index
    %c0_12 = arith.constant 0 : index
    %11 = vector.load %arg5[%c0_11, %c0_12] : memref<128x512xbf16, #tpu.memory_space<vmem>>, vector<128x512xbf16>
    %cst_13 = arith.constant 0.000000e+00 : f32
    %12 = vector.broadcast %cst_13 : f32 to vector<16x128xf32>
    %c0_14 = arith.constant 0 : index
    %c0_15 = arith.constant 0 : index
    %13 = vector.load %arg7[%c0_14, %c0_15] : memref<128x512xf32, #tpu.memory_space<vmem>>, vector<16x512xf32>
    %14 = arith.truncf %12 : vector<16x128xf32> to vector<16x128xbf16>
    %cst_16 = arith.constant dense<0.000000e+00> : vector<16x512xf32>
    %15 = tpu.matmul %14, %10, %cst_16 {dimension_numbers = #tpu.dot_dimension_numbers<[1], [0], [0], [1], [0, 0, 1, 1], [], []>} : vector<16x128xbf16>, vector<128x512xbf16>, vector<16x512xf32> -> vector<16x512xf32>
    %16 = arith.addf %13, %15 : vector<16x512xf32>
    %c112 = arith.constant 112 : index
    %c0_17 = arith.constant 0 : index
    %17 = vector.load %arg8[%c112, %c0_17] : memref<128x512xf32, #tpu.memory_space<vmem>>, vector<16x512xf32>
    %18 = arith.truncf %12 : vector<16x128xf32> to vector<16x128xbf16>
    %cst_18 = arith.constant dense<0.000000e+00> : vector<16x512xf32>
    %19 = tpu.matmul %18, %11, %cst_18 {dimension_numbers = #tpu.dot_dimension_numbers<[1], [0], [0], [1], [0, 0, 1, 1], [], []>} : vector<16x128xbf16>, vector<128x512xbf16>, vector<16x512xf32> -> vector<16x512xf32>
    %20 = arith.addf %17, %19 : vector<16x512xf32>
    %21 = vector.extract_strided_slice %16 {offsets = [0, 0], sizes = [16, 384], strides = [1, 1]} : vector<16x512xf32> to vector<16x384xf32>
    %22 = arith.negf %21 : vector<16x384xf32>
    %23 = math.exp %22 : vector<16x384xf32>
    %cst_19 = arith.constant 1.000000e+00 : f32
    %24 = vector.broadcast %cst_19 : f32 to vector<16x384xf32>
    %25 = arith.addf %24, %23 : vector<16x384xf32>
    %26 = arith.divf %24, %25 : vector<16x384xf32>
    %27 = vector.extract_strided_slice %16 {offsets = [0, 384], sizes = [16, 128], strides = [1, 1]} : vector<16x512xf32> to vector<16x128xf32>
    %28 = math.tanh %27 : vector<16x128xf32>
    %29 = vector.extract_strided_slice %26 {offsets = [0, 128], sizes = [16, 128], strides = [1, 1]} : vector<16x384xf32> to vector<16x128xf32>
    %30 = arith.mulf %29, %12 : vector<16x128xf32>
    %31 = vector.extract_strided_slice %26 {offsets = [0, 0], sizes = [16, 128], strides = [1, 1]} : vector<16x384xf32> to vector<16x128xf32>
    %32 = arith.mulf %31, %28 : vector<16x128xf32>
    %33 = arith.addf %30, %32 : vector<16x128xf32>
    %34 = vector.extract_strided_slice %26 {offsets = [0, 256], sizes = [16, 128], strides = [1, 1]} : vector<16x384xf32> to vector<16x128xf32>
    %35 = math.tanh %33 : vector<16x128xf32>
    %36 = arith.mulf %34, %35 : vector<16x128xf32>
    %37 = vector.extract_strided_slice %20 {offsets = [0, 0], sizes = [16, 384], strides = [1, 1]} : vector<16x512xf32> to vector<16x384xf32>
    %38 = arith.negf %37 : vector<16x384xf32>
    %39 = math.exp %38 : vector<16x384xf32>
    %cst_20 = arith.constant 1.000000e+00 : f32
    %40 = vector.broadcast %cst_20 : f32 to vector<16x384xf32>
    %41 = arith.addf %40, %39 : vector<16x384xf32>
    %42 = arith.divf %40, %41 : vector<16x384xf32>
    %43 = vector.extract_strided_slice %20 {offsets = [0, 384], sizes = [16, 128], strides = [1, 1]} : vector<16x512xf32> to vector<16x128xf32>
    %44 = math.tanh %43 : vector<16x128xf32>
    %45 = vector.extract_strided_slice %42 {offsets = [0, 128], sizes = [16, 128], strides = [1, 1]} : vector<16x384xf32> to vector<16x128xf32>
    %46 = arith.mulf %45, %12 : vector<16x128xf32>
    %47 = vector.extract_strided_slice %42 {offsets = [0, 0], sizes = [16, 128], strides = [1, 1]} : vector<16x384xf32> to vector<16x128xf32>
    %48 = arith.mulf %47, %44 : vector<16x128xf32>
    %49 = arith.addf %46, %48 : vector<16x128xf32>
    %50 = vector.extract_strided_slice %42 {offsets = [0, 256], sizes = [16, 128], strides = [1, 1]} : vector<16x384xf32> to vector<16x128xf32>
    %51 = math.tanh %49 : vector<16x128xf32>
    %52 = arith.mulf %50, %51 : vector<16x128xf32>
    %53 = arith.addf %12, %36 : vector<16x128xf32>
    %54 = arith.addf %12, %52 : vector<16x128xf32>
    %c16 = arith.constant 16 : index
    %c0_21 = arith.constant 0 : index
    %55 = vector.load %arg7[%c16, %c0_21] : memref<128x512xf32, #tpu.memory_space<vmem>>, vector<16x512xf32>
    %56 = arith.truncf %36 : vector<16x128xf32> to vector<16x128xbf16>
    %cst_22 = arith.constant dense<0.000000e+00> : vector<16x512xf32>
    %57 = tpu.matmul %56, %10, %cst_22 {dimension_numbers = #tpu.dot_dimension_numbers<[1], [0], [0], [1], [0, 0, 1, 1], [], []>} : vector<16x128xbf16>, vector<128x512xbf16>, vector<16x512xf32> -> vector<16x512xf32>
    %58 = arith.addf %55, %57 : vector<16x512xf32>
    %c96 = arith.constant 96 : index
    %c0_23 = arith.constant 0 : index
    %59 = vector.load %arg8[%c96, %c0_23] : memref<128x512xf32, #tpu.memory_space<vmem>>, vector<16x512xf32>
    %60 = arith.truncf %52 : vector<16x128xf32> to vector<16x128xbf16>
    %cst_24 = arith.constant dense<0.000000e+00> : vector<16x512xf32>
    %61 = tpu.matmul %60, %11, %cst_24 {dimension_numbers = #tpu.dot_dimension_numbers<[1], [0], [0], [1], [0, 0, 1, 1], [], []>} : vector<16x128xbf16>, vector<128x512xbf16>, vector<16x512xf32> -> vector<16x512xf32>
    %62 = arith.addf %59, %61 : vector<16x512xf32>
    %63 = vector.extract_strided_slice %58 {offsets = [0, 0], sizes = [16, 384], strides = [1, 1]} : vector<16x512xf32> to vector<16x384xf32>
    %64 = arith.negf %63 : vector<16x384xf32>
    %65 = math.exp %64 : vector<16x384xf32>
    %cst_25 = arith.constant 1.000000e+00 : f32
    %66 = vector.broadcast %cst_25 : f32 to vector<16x384xf32>
    %67 = arith.addf %66, %65 : vector<16x384xf32>
    %68 = arith.divf %66, %67 : vector<16x384xf32>
    %69 = vector.extract_strided_slice %58 {offsets = [0, 384], sizes = [16, 128], strides = [1, 1]} : vector<16x512xf32> to vector<16x128xf32>
    %70 = math.tanh %69 : vector<16x128xf32>
    %71 = vector.extract_strided_slice %68 {offsets = [0, 128], sizes = [16, 128], strides = [1, 1]} : vector<16x384xf32> to vector<16x128xf32>
    %72 = arith.mulf %71, %33 : vector<16x128xf32>
    %73 = vector.extract_strided_slice %68 {offsets = [0, 0], sizes = [16, 128], strides = [1, 1]} : vector<16x384xf32> to vector<16x128xf32>
    %74 = arith.mulf %73, %70 : vector<16x128xf32>
    %75 = arith.addf %72, %74 : vector<16x128xf32>
    %76 = vector.extract_strided_slice %68 {offsets = [0, 256], sizes = [16, 128], strides = [1, 1]} : vector<16x384xf32> to vector<16x128xf32>
    %77 = math.tanh %75 : vector<16x128xf32>
    %78 = arith.mulf %76, %77 : vector<16x128xf32>
    %79 = vector.extract_strided_slice %62 {offsets = [0, 0], sizes = [16, 384], strides = [1, 1]} : vector<16x512xf32> to vector<16x384xf32>
    %80 = arith.negf %79 : vector<16x384xf32>
    %81 = math.exp %80 : vector<16x384xf32>
    %cst_26 = arith.constant 1.000000e+00 : f32
    %82 = vector.broadcast %cst_26 : f32 to vector<16x384xf32>
    %83 = arith.addf %82, %81 : vector<16x384xf32>
    %84 = arith.divf %82, %83 : vector<16x384xf32>
    %85 = vector.extract_strided_slice %62 {offsets = [0, 384], sizes = [16, 128], strides = [1, 1]} : vector<16x512xf32> to vector<16x128xf32>
    %86 = math.tanh %85 : vector<16x128xf32>
    %87 = vector.extract_strided_slice %84 {offsets = [0, 128], sizes = [16, 128], strides = [1, 1]} : vector<16x384xf32> to vector<16x128xf32>
    %88 = arith.mulf %87, %49 : vector<16x128xf32>
    %89 = vector.extract_strided_slice %84 {offsets = [0, 0], sizes = [16, 128], strides = [1, 1]} : vector<16x384xf32> to vector<16x128xf32>
    %90 = arith.mulf %89, %86 : vector<16x128xf32>
    %91 = arith.addf %88, %90 : vector<16x128xf32>
    %92 = vector.extract_strided_slice %84 {offsets = [0, 256], sizes = [16, 128], strides = [1, 1]} : vector<16x384xf32> to vector<16x128xf32>
    %93 = math.tanh %91 : vector<16x128xf32>
    %94 = arith.mulf %92, %93 : vector<16x128xf32>
    %95 = arith.addf %53, %78 : vector<16x128xf32>
    %96 = arith.addf %54, %94 : vector<16x128xf32>
    %c32 = arith.constant 32 : index
    %c0_27 = arith.constant 0 : index
    %97 = vector.load %arg7[%c32, %c0_27] : memref<128x512xf32, #tpu.memory_space<vmem>>, vector<16x512xf32>
    %98 = arith.truncf %78 : vector<16x128xf32> to vector<16x128xbf16>
    %cst_28 = arith.constant dense<0.000000e+00> : vector<16x512xf32>
    %99 = tpu.matmul %98, %10, %cst_28 {dimension_numbers = #tpu.dot_dimension_numbers<[1], [0], [0], [1], [0, 0, 1, 1], [], []>} : vector<16x128xbf16>, vector<128x512xbf16>, vector<16x512xf32> -> vector<16x512xf32>
    %100 = arith.addf %97, %99 : vector<16x512xf32>
    %c80 = arith.constant 80 : index
    %c0_29 = arith.constant 0 : index
    %101 = vector.load %arg8[%c80, %c0_29] : memref<128x512xf32, #tpu.memory_space<vmem>>, vector<16x512xf32>
    %102 = arith.truncf %94 : vector<16x128xf32> to vector<16x128xbf16>
    %cst_30 = arith.constant dense<0.000000e+00> : vector<16x512xf32>
    %103 = tpu.matmul %102, %11, %cst_30 {dimension_numbers = #tpu.dot_dimension_numbers<[1], [0], [0], [1], [0, 0, 1, 1], [], []>} : vector<16x128xbf16>, vector<128x512xbf16>, vector<16x512xf32> -> vector<16x512xf32>
    %104 = arith.addf %101, %103 : vector<16x512xf32>
    %105 = vector.extract_strided_slice %100 {offsets = [0, 0], sizes = [16, 384], strides = [1, 1]} : vector<16x512xf32> to vector<16x384xf32>
    %106 = arith.negf %105 : vector<16x384xf32>
    %107 = math.exp %106 : vector<16x384xf32>
    %cst_31 = arith.constant 1.000000e+00 : f32
    %108 = vector.broadcast %cst_31 : f32 to vector<16x384xf32>
    %109 = arith.addf %108, %107 : vector<16x384xf32>
    %110 = arith.divf %108, %109 : vector<16x384xf32>
    %111 = vector.extract_strided_slice %100 {offsets = [0, 384], sizes = [16, 128], strides = [1, 1]} : vector<16x512xf32> to vector<16x128xf32>
    %112 = math.tanh %111 : vector<16x128xf32>
    %113 = vector.extract_strided_slice %110 {offsets = [0, 128], sizes = [16, 128], strides = [1, 1]} : vector<16x384xf32> to vector<16x128xf32>
    %114 = arith.mulf %113, %75 : vector<16x128xf32>
    %115 = vector.extract_strided_slice %110 {offsets = [0, 0], sizes = [16, 128], strides = [1, 1]} : vector<16x384xf32> to vector<16x128xf32>
    %116 = arith.mulf %115, %112 : vector<16x128xf32>
    %117 = arith.addf %114, %116 : vector<16x128xf32>
    %118 = vector.extract_strided_slice %110 {offsets = [0, 256], sizes = [16, 128], strides = [1, 1]} : vector<16x384xf32> to vector<16x128xf32>
    %119 = math.tanh %117 : vector<16x128xf32>
    %120 = arith.mulf %118, %119 : vector<16x128xf32>
    %121 = vector.extract_strided_slice %104 {offsets = [0, 0], sizes = [16, 384], strides = [1, 1]} : vector<16x512xf32> to vector<16x384xf32>
    %122 = arith.negf %121 : vector<16x384xf32>
    %123 = math.exp %122 : vector<16x384xf32>
    %cst_32 = arith.constant 1.000000e+00 : f32
    %124 = vector.broadcast %cst_32 : f32 to vector<16x384xf32>
    %125 = arith.addf %124, %123 : vector<16x384xf32>
    %126 = arith.divf %124, %125 : vector<16x384xf32>
    %127 = vector.extract_strided_slice %104 {offsets = [0, 384], sizes = [16, 128], strides = [1, 1]} : vector<16x512xf32> to vector<16x128xf32>
    %128 = math.tanh %127 : vector<16x128xf32>
    %129 = vector.extract_strided_slice %126 {offsets = [0, 128], sizes = [16, 128], strides = [1, 1]} : vector<16x384xf32> to vector<16x128xf32>
    %130 = arith.mulf %129, %91 : vector<16x128xf32>
    %131 = vector.extract_strided_slice %126 {offsets = [0, 0], sizes = [16, 128], strides = [1, 1]} : vector<16x384xf32> to vector<16x128xf32>
    %132 = arith.mulf %131, %128 : vector<16x128xf32>
    %133 = arith.addf %130, %132 : vector<16x128xf32>
    %134 = vector.extract_strided_slice %126 {offsets = [0, 256], sizes = [16, 128], strides = [1, 1]} : vector<16x384xf32> to vector<16x128xf32>
    %135 = math.tanh %133 : vector<16x128xf32>
    %136 = arith.mulf %134, %135 : vector<16x128xf32>
    %137 = arith.addf %95, %120 : vector<16x128xf32>
    %138 = arith.addf %96, %136 : vector<16x128xf32>
    %c48 = arith.constant 48 : index
    %c0_33 = arith.constant 0 : index
    %139 = vector.load %arg7[%c48, %c0_33] : memref<128x512xf32, #tpu.memory_space<vmem>>, vector<16x512xf32>
    %140 = arith.truncf %120 : vector<16x128xf32> to vector<16x128xbf16>
    %cst_34 = arith.constant dense<0.000000e+00> : vector<16x512xf32>
    %141 = tpu.matmul %140, %10, %cst_34 {dimension_numbers = #tpu.dot_dimension_numbers<[1], [0], [0], [1], [0, 0, 1, 1], [], []>} : vector<16x128xbf16>, vector<128x512xbf16>, vector<16x512xf32> -> vector<16x512xf32>
    %142 = arith.addf %139, %141 : vector<16x512xf32>
    %c64 = arith.constant 64 : index
    %c0_35 = arith.constant 0 : index
    %143 = vector.load %arg8[%c64, %c0_35] : memref<128x512xf32, #tpu.memory_space<vmem>>, vector<16x512xf32>
    %144 = arith.truncf %136 : vector<16x128xf32> to vector<16x128xbf16>
    %cst_36 = arith.constant dense<0.000000e+00> : vector<16x512xf32>
    %145 = tpu.matmul %144, %11, %cst_36 {dimension_numbers = #tpu.dot_dimension_numbers<[1], [0], [0], [1], [0, 0, 1, 1], [], []>} : vector<16x128xbf16>, vector<128x512xbf16>, vector<16x512xf32> -> vector<16x512xf32>
    %146 = arith.addf %143, %145 : vector<16x512xf32>
    %147 = vector.extract_strided_slice %142 {offsets = [0, 0], sizes = [16, 384], strides = [1, 1]} : vector<16x512xf32> to vector<16x384xf32>
    %148 = arith.negf %147 : vector<16x384xf32>
    %149 = math.exp %148 : vector<16x384xf32>
    %cst_37 = arith.constant 1.000000e+00 : f32
    %150 = vector.broadcast %cst_37 : f32 to vector<16x384xf32>
    %151 = arith.addf %150, %149 : vector<16x384xf32>
    %152 = arith.divf %150, %151 : vector<16x384xf32>
    %153 = vector.extract_strided_slice %142 {offsets = [0, 384], sizes = [16, 128], strides = [1, 1]} : vector<16x512xf32> to vector<16x128xf32>
    %154 = math.tanh %153 : vector<16x128xf32>
    %155 = vector.extract_strided_slice %152 {offsets = [0, 128], sizes = [16, 128], strides = [1, 1]} : vector<16x384xf32> to vector<16x128xf32>
    %156 = arith.mulf %155, %117 : vector<16x128xf32>
    %157 = vector.extract_strided_slice %152 {offsets = [0, 0], sizes = [16, 128], strides = [1, 1]} : vector<16x384xf32> to vector<16x128xf32>
    %158 = arith.mulf %157, %154 : vector<16x128xf32>
    %159 = arith.addf %156, %158 : vector<16x128xf32>
    %160 = vector.extract_strided_slice %152 {offsets = [0, 256], sizes = [16, 128], strides = [1, 1]} : vector<16x384xf32> to vector<16x128xf32>
    %161 = math.tanh %159 : vector<16x128xf32>
    %162 = arith.mulf %160, %161 : vector<16x128xf32>
    %163 = vector.extract_strided_slice %146 {offsets = [0, 0], sizes = [16, 384], strides = [1, 1]} : vector<16x512xf32> to vector<16x384xf32>
    %164 = arith.negf %163 : vector<16x384xf32>
    %165 = math.exp %164 : vector<16x384xf32>
    %cst_38 = arith.constant 1.000000e+00 : f32
    %166 = vector.broadcast %cst_38 : f32 to vector<16x384xf32>
    %167 = arith.addf %166, %165 : vector<16x384xf32>
    %168 = arith.divf %166, %167 : vector<16x384xf32>
    %169 = vector.extract_strided_slice %146 {offsets = [0, 384], sizes = [16, 128], strides = [1, 1]} : vector<16x512xf32> to vector<16x128xf32>
    %170 = math.tanh %169 : vector<16x128xf32>
    %171 = vector.extract_strided_slice %168 {offsets = [0, 128], sizes = [16, 128], strides = [1, 1]} : vector<16x384xf32> to vector<16x128xf32>
    %172 = arith.mulf %171, %133 : vector<16x128xf32>
    %173 = vector.extract_strided_slice %168 {offsets = [0, 0], sizes = [16, 128], strides = [1, 1]} : vector<16x384xf32> to vector<16x128xf32>
    %174 = arith.mulf %173, %170 : vector<16x128xf32>
    %175 = arith.addf %172, %174 : vector<16x128xf32>
    %176 = vector.extract_strided_slice %168 {offsets = [0, 256], sizes = [16, 128], strides = [1, 1]} : vector<16x384xf32> to vector<16x128xf32>
    %177 = math.tanh %175 : vector<16x128xf32>
    %178 = arith.mulf %176, %177 : vector<16x128xf32>
    %179 = arith.addf %137, %162 : vector<16x128xf32>
    %180 = arith.addf %138, %178 : vector<16x128xf32>
    %c64_39 = arith.constant 64 : index
    %c0_40 = arith.constant 0 : index
    %181 = vector.load %arg7[%c64_39, %c0_40] : memref<128x512xf32, #tpu.memory_space<vmem>>, vector<16x512xf32>
    %182 = arith.truncf %162 : vector<16x128xf32> to vector<16x128xbf16>
    %cst_41 = arith.constant dense<0.000000e+00> : vector<16x512xf32>
    %183 = tpu.matmul %182, %10, %cst_41 {dimension_numbers = #tpu.dot_dimension_numbers<[1], [0], [0], [1], [0, 0, 1, 1], [], []>} : vector<16x128xbf16>, vector<128x512xbf16>, vector<16x512xf32> -> vector<16x512xf32>
    %184 = arith.addf %181, %183 : vector<16x512xf32>
    %c48_42 = arith.constant 48 : index
    %c0_43 = arith.constant 0 : index
    %185 = vector.load %arg8[%c48_42, %c0_43] : memref<128x512xf32, #tpu.memory_space<vmem>>, vector<16x512xf32>
    %186 = arith.truncf %178 : vector<16x128xf32> to vector<16x128xbf16>
    %cst_44 = arith.constant dense<0.000000e+00> : vector<16x512xf32>
    %187 = tpu.matmul %186, %11, %cst_44 {dimension_numbers = #tpu.dot_dimension_numbers<[1], [0], [0], [1], [0, 0, 1, 1], [], []>} : vector<16x128xbf16>, vector<128x512xbf16>, vector<16x512xf32> -> vector<16x512xf32>
    %188 = arith.addf %185, %187 : vector<16x512xf32>
    %189 = vector.extract_strided_slice %184 {offsets = [0, 0], sizes = [16, 384], strides = [1, 1]} : vector<16x512xf32> to vector<16x384xf32>
    %190 = arith.negf %189 : vector<16x384xf32>
    %191 = math.exp %190 : vector<16x384xf32>
    %cst_45 = arith.constant 1.000000e+00 : f32
    %192 = vector.broadcast %cst_45 : f32 to vector<16x384xf32>
    %193 = arith.addf %192, %191 : vector<16x384xf32>
    %194 = arith.divf %192, %193 : vector<16x384xf32>
    %195 = vector.extract_strided_slice %184 {offsets = [0, 384], sizes = [16, 128], strides = [1, 1]} : vector<16x512xf32> to vector<16x128xf32>
    %196 = math.tanh %195 : vector<16x128xf32>
    %197 = vector.extract_strided_slice %194 {offsets = [0, 128], sizes = [16, 128], strides = [1, 1]} : vector<16x384xf32> to vector<16x128xf32>
    %198 = arith.mulf %197, %159 : vector<16x128xf32>
    %199 = vector.extract_strided_slice %194 {offsets = [0, 0], sizes = [16, 128], strides = [1, 1]} : vector<16x384xf32> to vector<16x128xf32>
    %200 = arith.mulf %199, %196 : vector<16x128xf32>
    %201 = arith.addf %198, %200 : vector<16x128xf32>
    %202 = vector.extract_strided_slice %194 {offsets = [0, 256], sizes = [16, 128], strides = [1, 1]} : vector<16x384xf32> to vector<16x128xf32>
    %203 = math.tanh %201 : vector<16x128xf32>
    %204 = arith.mulf %202, %203 : vector<16x128xf32>
    %205 = vector.extract_strided_slice %188 {offsets = [0, 0], sizes = [16, 384], strides = [1, 1]} : vector<16x512xf32> to vector<16x384xf32>
    %206 = arith.negf %205 : vector<16x384xf32>
    %207 = math.exp %206 : vector<16x384xf32>
    %cst_46 = arith.constant 1.000000e+00 : f32
    %208 = vector.broadcast %cst_46 : f32 to vector<16x384xf32>
    %209 = arith.addf %208, %207 : vector<16x384xf32>
    %210 = arith.divf %208, %209 : vector<16x384xf32>
    %211 = vector.extract_strided_slice %188 {offsets = [0, 384], sizes = [16, 128], strides = [1, 1]} : vector<16x512xf32> to vector<16x128xf32>
    %212 = math.tanh %211 : vector<16x128xf32>
    %213 = vector.extract_strided_slice %210 {offsets = [0, 128], sizes = [16, 128], strides = [1, 1]} : vector<16x384xf32> to vector<16x128xf32>
    %214 = arith.mulf %213, %175 : vector<16x128xf32>
    %215 = vector.extract_strided_slice %210 {offsets = [0, 0], sizes = [16, 128], strides = [1, 1]} : vector<16x384xf32> to vector<16x128xf32>
    %216 = arith.mulf %215, %212 : vector<16x128xf32>
    %217 = arith.addf %214, %216 : vector<16x128xf32>
    %218 = vector.extract_strided_slice %210 {offsets = [0, 256], sizes = [16, 128], strides = [1, 1]} : vector<16x384xf32> to vector<16x128xf32>
    %219 = math.tanh %217 : vector<16x128xf32>
    %220 = arith.mulf %218, %219 : vector<16x128xf32>
    %221 = arith.addf %179, %204 : vector<16x128xf32>
    %222 = arith.addf %180, %220 : vector<16x128xf32>
    %c80_47 = arith.constant 80 : index
    %c0_48 = arith.constant 0 : index
    %223 = vector.load %arg7[%c80_47, %c0_48] : memref<128x512xf32, #tpu.memory_space<vmem>>, vector<16x512xf32>
    %224 = arith.truncf %204 : vector<16x128xf32> to vector<16x128xbf16>
    %cst_49 = arith.constant dense<0.000000e+00> : vector<16x512xf32>
    %225 = tpu.matmul %224, %10, %cst_49 {dimension_numbers = #tpu.dot_dimension_numbers<[1], [0], [0], [1], [0, 0, 1, 1], [], []>} : vector<16x128xbf16>, vector<128x512xbf16>, vector<16x512xf32> -> vector<16x512xf32>
    %226 = arith.addf %223, %225 : vector<16x512xf32>
    %c32_50 = arith.constant 32 : index
    %c0_51 = arith.constant 0 : index
    %227 = vector.load %arg8[%c32_50, %c0_51] : memref<128x512xf32, #tpu.memory_space<vmem>>, vector<16x512xf32>
    %228 = arith.truncf %220 : vector<16x128xf32> to vector<16x128xbf16>
    %cst_52 = arith.constant dense<0.000000e+00> : vector<16x512xf32>
    %229 = tpu.matmul %228, %11, %cst_52 {dimension_numbers = #tpu.dot_dimension_numbers<[1], [0], [0], [1], [0, 0, 1, 1], [], []>} : vector<16x128xbf16>, vector<128x512xbf16>, vector<16x512xf32> -> vector<16x512xf32>
    %230 = arith.addf %227, %229 : vector<16x512xf32>
    %231 = vector.extract_strided_slice %226 {offsets = [0, 0], sizes = [16, 384], strides = [1, 1]} : vector<16x512xf32> to vector<16x384xf32>
    %232 = arith.negf %231 : vector<16x384xf32>
    %233 = math.exp %232 : vector<16x384xf32>
    %cst_53 = arith.constant 1.000000e+00 : f32
    %234 = vector.broadcast %cst_53 : f32 to vector<16x384xf32>
    %235 = arith.addf %234, %233 : vector<16x384xf32>
    %236 = arith.divf %234, %235 : vector<16x384xf32>
    %237 = vector.extract_strided_slice %226 {offsets = [0, 384], sizes = [16, 128], strides = [1, 1]} : vector<16x512xf32> to vector<16x128xf32>
    %238 = math.tanh %237 : vector<16x128xf32>
    %239 = vector.extract_strided_slice %236 {offsets = [0, 128], sizes = [16, 128], strides = [1, 1]} : vector<16x384xf32> to vector<16x128xf32>
    %240 = arith.mulf %239, %201 : vector<16x128xf32>
    %241 = vector.extract_strided_slice %236 {offsets = [0, 0], sizes = [16, 128], strides = [1, 1]} : vector<16x384xf32> to vector<16x128xf32>
    %242 = arith.mulf %241, %238 : vector<16x128xf32>
    %243 = arith.addf %240, %242 : vector<16x128xf32>
    %244 = vector.extract_strided_slice %236 {offsets = [0, 256], sizes = [16, 128], strides = [1, 1]} : vector<16x384xf32> to vector<16x128xf32>
    %245 = math.tanh %243 : vector<16x128xf32>
    %246 = arith.mulf %244, %245 : vector<16x128xf32>
    %247 = vector.extract_strided_slice %230 {offsets = [0, 0], sizes = [16, 384], strides = [1, 1]} : vector<16x512xf32> to vector<16x384xf32>
    %248 = arith.negf %247 : vector<16x384xf32>
    %249 = math.exp %248 : vector<16x384xf32>
    %cst_54 = arith.constant 1.000000e+00 : f32
    %250 = vector.broadcast %cst_54 : f32 to vector<16x384xf32>
    %251 = arith.addf %250, %249 : vector<16x384xf32>
    %252 = arith.divf %250, %251 : vector<16x384xf32>
    %253 = vector.extract_strided_slice %230 {offsets = [0, 384], sizes = [16, 128], strides = [1, 1]} : vector<16x512xf32> to vector<16x128xf32>
    %254 = math.tanh %253 : vector<16x128xf32>
    %255 = vector.extract_strided_slice %252 {offsets = [0, 128], sizes = [16, 128], strides = [1, 1]} : vector<16x384xf32> to vector<16x128xf32>
    %256 = arith.mulf %255, %217 : vector<16x128xf32>
    %257 = vector.extract_strided_slice %252 {offsets = [0, 0], sizes = [16, 128], strides = [1, 1]} : vector<16x384xf32> to vector<16x128xf32>
    %258 = arith.mulf %257, %254 : vector<16x128xf32>
    %259 = arith.addf %256, %258 : vector<16x128xf32>
    %260 = vector.extract_strided_slice %252 {offsets = [0, 256], sizes = [16, 128], strides = [1, 1]} : vector<16x384xf32> to vector<16x128xf32>
    %261 = math.tanh %259 : vector<16x128xf32>
    %262 = arith.mulf %260, %261 : vector<16x128xf32>
    %263 = arith.addf %221, %246 : vector<16x128xf32>
    %264 = arith.addf %222, %262 : vector<16x128xf32>
    %c96_55 = arith.constant 96 : index
    %c0_56 = arith.constant 0 : index
    %265 = vector.load %arg7[%c96_55, %c0_56] : memref<128x512xf32, #tpu.memory_space<vmem>>, vector<16x512xf32>
    %266 = arith.truncf %246 : vector<16x128xf32> to vector<16x128xbf16>
    %cst_57 = arith.constant dense<0.000000e+00> : vector<16x512xf32>
    %267 = tpu.matmul %266, %10, %cst_57 {dimension_numbers = #tpu.dot_dimension_numbers<[1], [0], [0], [1], [0, 0, 1, 1], [], []>} : vector<16x128xbf16>, vector<128x512xbf16>, vector<16x512xf32> -> vector<16x512xf32>
    %268 = arith.addf %265, %267 : vector<16x512xf32>
    %c16_58 = arith.constant 16 : index
    %c0_59 = arith.constant 0 : index
    %269 = vector.load %arg8[%c16_58, %c0_59] : memref<128x512xf32, #tpu.memory_space<vmem>>, vector<16x512xf32>
    %270 = arith.truncf %262 : vector<16x128xf32> to vector<16x128xbf16>
    %cst_60 = arith.constant dense<0.000000e+00> : vector<16x512xf32>
    %271 = tpu.matmul %270, %11, %cst_60 {dimension_numbers = #tpu.dot_dimension_numbers<[1], [0], [0], [1], [0, 0, 1, 1], [], []>} : vector<16x128xbf16>, vector<128x512xbf16>, vector<16x512xf32> -> vector<16x512xf32>
    %272 = arith.addf %269, %271 : vector<16x512xf32>
    %273 = vector.extract_strided_slice %268 {offsets = [0, 0], sizes = [16, 384], strides = [1, 1]} : vector<16x512xf32> to vector<16x384xf32>
    %274 = arith.negf %273 : vector<16x384xf32>
    %275 = math.exp %274 : vector<16x384xf32>
    %cst_61 = arith.constant 1.000000e+00 : f32
    %276 = vector.broadcast %cst_61 : f32 to vector<16x384xf32>
    %277 = arith.addf %276, %275 : vector<16x384xf32>
    %278 = arith.divf %276, %277 : vector<16x384xf32>
    %279 = vector.extract_strided_slice %268 {offsets = [0, 384], sizes = [16, 128], strides = [1, 1]} : vector<16x512xf32> to vector<16x128xf32>
    %280 = math.tanh %279 : vector<16x128xf32>
    %281 = vector.extract_strided_slice %278 {offsets = [0, 128], sizes = [16, 128], strides = [1, 1]} : vector<16x384xf32> to vector<16x128xf32>
    %282 = arith.mulf %281, %243 : vector<16x128xf32>
    %283 = vector.extract_strided_slice %278 {offsets = [0, 0], sizes = [16, 128], strides = [1, 1]} : vector<16x384xf32> to vector<16x128xf32>
    %284 = arith.mulf %283, %280 : vector<16x128xf32>
    %285 = arith.addf %282, %284 : vector<16x128xf32>
    %286 = vector.extract_strided_slice %278 {offsets = [0, 256], sizes = [16, 128], strides = [1, 1]} : vector<16x384xf32> to vector<16x128xf32>
    %287 = math.tanh %285 : vector<16x128xf32>
    %288 = arith.mulf %286, %287 : vector<16x128xf32>
    %289 = vector.extract_strided_slice %272 {offsets = [0, 0], sizes = [16, 384], strides = [1, 1]} : vector<16x512xf32> to vector<16x384xf32>
    %290 = arith.negf %289 : vector<16x384xf32>
    %291 = math.exp %290 : vector<16x384xf32>
    %cst_62 = arith.constant 1.000000e+00 : f32
    %292 = vector.broadcast %cst_62 : f32 to vector<16x384xf32>
    %293 = arith.addf %292, %291 : vector<16x384xf32>
    %294 = arith.divf %292, %293 : vector<16x384xf32>
    %295 = vector.extract_strided_slice %272 {offsets = [0, 384], sizes = [16, 128], strides = [1, 1]} : vector<16x512xf32> to vector<16x128xf32>
    %296 = math.tanh %295 : vector<16x128xf32>
    %297 = vector.extract_strided_slice %294 {offsets = [0, 128], sizes = [16, 128], strides = [1, 1]} : vector<16x384xf32> to vector<16x128xf32>
    %298 = arith.mulf %297, %259 : vector<16x128xf32>
    %299 = vector.extract_strided_slice %294 {offsets = [0, 0], sizes = [16, 128], strides = [1, 1]} : vector<16x384xf32> to vector<16x128xf32>
    %300 = arith.mulf %299, %296 : vector<16x128xf32>
    %301 = arith.addf %298, %300 : vector<16x128xf32>
    %302 = vector.extract_strided_slice %294 {offsets = [0, 256], sizes = [16, 128], strides = [1, 1]} : vector<16x384xf32> to vector<16x128xf32>
    %303 = math.tanh %301 : vector<16x128xf32>
    %304 = arith.mulf %302, %303 : vector<16x128xf32>
    %305 = arith.addf %263, %288 : vector<16x128xf32>
    %306 = arith.addf %264, %304 : vector<16x128xf32>
    %c112_63 = arith.constant 112 : index
    %c0_64 = arith.constant 0 : index
    %307 = vector.load %arg7[%c112_63, %c0_64] : memref<128x512xf32, #tpu.memory_space<vmem>>, vector<16x512xf32>
    %308 = arith.truncf %288 : vector<16x128xf32> to vector<16x128xbf16>
    %cst_65 = arith.constant dense<0.000000e+00> : vector<16x512xf32>
    %309 = tpu.matmul %308, %10, %cst_65 {dimension_numbers = #tpu.dot_dimension_numbers<[1], [0], [0], [1], [0, 0, 1, 1], [], []>} : vector<16x128xbf16>, vector<128x512xbf16>, vector<16x512xf32> -> vector<16x512xf32>
    %310 = arith.addf %307, %309 : vector<16x512xf32>
    %c0_66 = arith.constant 0 : index
    %c0_67 = arith.constant 0 : index
    %311 = vector.load %arg8[%c0_66, %c0_67] : memref<128x512xf32, #tpu.memory_space<vmem>>, vector<16x512xf32>
    %312 = arith.truncf %304 : vector<16x128xf32> to vector<16x128xbf16>
    %cst_68 = arith.constant dense<0.000000e+00> : vector<16x512xf32>
    %313 = tpu.matmul %312, %11, %cst_68 {dimension_numbers = #tpu.dot_dimension_numbers<[1], [0], [0], [1], [0, 0, 1, 1], [], []>} : vector<16x128xbf16>, vector<128x512xbf16>, vector<16x512xf32> -> vector<16x512xf32>
    %314 = arith.addf %311, %313 : vector<16x512xf32>
    %315 = vector.extract_strided_slice %310 {offsets = [0, 0], sizes = [16, 384], strides = [1, 1]} : vector<16x512xf32> to vector<16x384xf32>
    %316 = arith.negf %315 : vector<16x384xf32>
    %317 = math.exp %316 : vector<16x384xf32>
    %cst_69 = arith.constant 1.000000e+00 : f32
    %318 = vector.broadcast %cst_69 : f32 to vector<16x384xf32>
    %319 = arith.addf %318, %317 : vector<16x384xf32>
    %320 = arith.divf %318, %319 : vector<16x384xf32>
    %321 = vector.extract_strided_slice %310 {offsets = [0, 384], sizes = [16, 128], strides = [1, 1]} : vector<16x512xf32> to vector<16x128xf32>
    %322 = math.tanh %321 : vector<16x128xf32>
    %323 = vector.extract_strided_slice %320 {offsets = [0, 128], sizes = [16, 128], strides = [1, 1]} : vector<16x384xf32> to vector<16x128xf32>
    %324 = arith.mulf %323, %285 : vector<16x128xf32>
    %325 = vector.extract_strided_slice %320 {offsets = [0, 0], sizes = [16, 128], strides = [1, 1]} : vector<16x384xf32> to vector<16x128xf32>
    %326 = arith.mulf %325, %322 : vector<16x128xf32>
    %327 = arith.addf %324, %326 : vector<16x128xf32>
    %328 = vector.extract_strided_slice %320 {offsets = [0, 256], sizes = [16, 128], strides = [1, 1]} : vector<16x384xf32> to vector<16x128xf32>
    %329 = math.tanh %327 : vector<16x128xf32>
    %330 = arith.mulf %328, %329 : vector<16x128xf32>
    %331 = vector.extract_strided_slice %314 {offsets = [0, 0], sizes = [16, 384], strides = [1, 1]} : vector<16x512xf32> to vector<16x384xf32>
    %332 = arith.negf %331 : vector<16x384xf32>
    %333 = math.exp %332 : vector<16x384xf32>
    %cst_70 = arith.constant 1.000000e+00 : f32
    %334 = vector.broadcast %cst_70 : f32 to vector<16x384xf32>
    %335 = arith.addf %334, %333 : vector<16x384xf32>
    %336 = arith.divf %334, %335 : vector<16x384xf32>
    %337 = vector.extract_strided_slice %314 {offsets = [0, 384], sizes = [16, 128], strides = [1, 1]} : vector<16x512xf32> to vector<16x128xf32>
    %338 = math.tanh %337 : vector<16x128xf32>
    %339 = vector.extract_strided_slice %336 {offsets = [0, 128], sizes = [16, 128], strides = [1, 1]} : vector<16x384xf32> to vector<16x128xf32>
    %340 = arith.mulf %339, %301 : vector<16x128xf32>
    %341 = vector.extract_strided_slice %336 {offsets = [0, 0], sizes = [16, 128], strides = [1, 1]} : vector<16x384xf32> to vector<16x128xf32>
    %342 = arith.mulf %341, %338 : vector<16x128xf32>
    %343 = arith.addf %340, %342 : vector<16x128xf32>
    %344 = vector.extract_strided_slice %336 {offsets = [0, 256], sizes = [16, 128], strides = [1, 1]} : vector<16x384xf32> to vector<16x128xf32>
    %345 = math.tanh %343 : vector<16x128xf32>
    %346 = arith.mulf %344, %345 : vector<16x128xf32>
    %347 = arith.addf %305, %330 : vector<16x128xf32>
    %348 = arith.addf %306, %346 : vector<16x128xf32>
    %c0_71 = arith.constant 0 : index
    %c0_72 = arith.constant 0 : index
    %349 = vector.load %arg6[%c0_71, %c0_72] : memref<16x256xf32, #tpu.memory_space<vmem>>, vector<16x128xf32>
    tpu.vector_store %arg6[%c0_71, %c0_72], %347 {strides = array<i32>} : memref<16x256xf32, #tpu.memory_space<vmem>>, vector<16x128xf32>,
    %c0_73 = arith.constant 0 : index
    %c128 = arith.constant 128 : index
    %350 = vector.load %arg6[%c0_73, %c128] : memref<16x256xf32, #tpu.memory_space<vmem>>, vector<16x128xf32>
    tpu.vector_store %arg6[%c0_73, %c128], %348 {strides = array<i32>} : memref<16x256xf32, #tpu.memory_space<vmem>>, vector<16x128xf32>,
    return
  }
  func.func @transform_0(%arg0: i32) -> (i32, i32) {
    %c0_i32 = arith.constant 0 : i32
    %c0_i32_0 = arith.constant 0 : i32
    %c0_i32_1 = arith.constant 0 : i32
    return %c0_i32, %c0_i32_0 : i32, i32
  }
  func.func @transform_1(%arg0: i32) -> (i32, i32) {
    %c0_i32 = arith.constant 0 : i32
    %c0_i32_0 = arith.constant 0 : i32
    %c0_i32_1 = arith.constant 0 : i32
    return %c0_i32, %c0_i32_0 : i32, i32
  }
  func.func @transform_2(%arg0: i32) -> (i32, i32) {
    %c0_i32 = arith.constant 0 : i32
    %c0_i32_0 = arith.constant 0 : i32
    %c0_i32_1 = arith.constant 0 : i32
    return %c0_i32, %c0_i32_0 : i32, i32
  }
  func.func @transform_3(%arg0: i32) -> (i32, i32) {
    %c0_i32 = arith.constant 0 : i32
    %c0_i32_0 = arith.constant 0 : i32
    %c0_i32_1 = arith.constant 0 : i32
    return %c0_i32, %c0_i32_0 : i32, i32
  }
  func.func @transform_4(%arg0: i32) -> (i32, i32) {
    %c0_i32 = arith.constant 0 : i32
    %c0_i32_0 = arith.constant 0 : i32
    %c0_i32_1 = arith.constant 0 : i32
    return %c0_i32, %c0_i32_0 : i32, i32
  }
  func.func @transform_5(%arg0: i32) -> (i32, i32) {
    %c0_i32 = arith.constant 0 : i32
    %c0_i32_0 = arith.constant 0 : i32
    %c0_i32_1 = arith.constant 0 : i32
    return %c0_i32, %c0_i32_0 : i32, i32
  }
}

</mosaic_0001>

<llo_original>
// kernel: tpu_custom_call.1
$region0: #{tpu_custom_call.1}
  #allocation0 [shape = 'u32[]', space=smem, size = 0x4, offset = 0x4, fixed_abs, tag = 'smem constant byte address 0x4 - core index']
  #allocation1 [shape = 'u32[72,128]{1,0:T(1,128)}', space=vmem, size = 0x9000, scoped, tag = 'internal scratch']
  #allocation2 [shape = 'f32[128,512]{1,0:T(8,128)}', space=vmem, size = 0x40000, scoped, tag = 'scratch operand']
  #allocation3 [shape = 'f32[128,512]{1,0:T(8,128)}', space=vmem, size = 0x40000, scoped, tag = 'scratch operand']
  %s0 = inlined_call_operand.hbm [shape: bf16[128,256], index: 0, kind: input, shape index: {}]
  %s1 = inlined_call_operand.hbm [shape: bf16[256,1024], index: 1, kind: input, shape index: {}]
  %s2 = inlined_call_operand.hbm [shape: f32[1,1024], index: 2, kind: input, shape index: {}]
  %s3 = inlined_call_operand.hbm [shape: bf16[128,512], index: 3, kind: input, shape index: {}]
  %s4 = inlined_call_operand.hbm [shape: bf16[128,512], index: 4, kind: input, shape index: {}]
  %s5 = inlined_call_operand.hbm [shape: f32[16,256], index: 5, kind: output, shape index: {}]
  %s6 = sld [smem:[#allocation0]]
  $region50: #{tpu_custom_call.1} parent=0
    _
  %s8 = ssub.s32 1, %s6
  %s9 = scalar_select 0, %s8, %s6
  $region1: #{tpu_custom_call.1} parent=0
    #allocation4 [shape = 'u8[65536]{0}', space=vmem, size = 0x10000, scoped, tag = 'input window, operand 0, single buffered']
    #allocation5 [shape = 's32[1]{0}', space=sflag, size = 0x4, scoped, tag = 'scoped memory for tpu_custom_call.1']
    #allocation6 [shape = 's32[1]{0}', space=sflag, size = 0x4, scoped, tag = 'scoped memory for tpu_custom_call.1']
    #allocation7 [shape = 'u8[524288]{0}', space=vmem, size = 0x80000, scoped, tag = 'input window, operand 1, single buffered']
    #allocation8 [shape = 's32[1]{0}', space=sflag, size = 0x4, scoped, tag = 'scoped memory for tpu_custom_call.1']
    #allocation9 [shape = 'u8[4096]{0}', space=vmem, size = 0x1000, scoped, tag = 'input window, operand 2, single buffered']
    #allocation10 [shape = 'u8[131072]{0}', space=vmem, size = 0x20000, scoped, tag = 'input window, operand 3, single buffered']
    #allocation11 [shape = 's32[1]{0}', space=sflag, size = 0x4, scoped, tag = 'scoped memory for tpu_custom_call.1']
    #allocation12 [shape = 'u8[131072]{0}', space=vmem, size = 0x20000, scoped, tag = 'input window, operand 4, single buffered']
    #allocation13 [shape = 'u8[16384]{0}', space=vmem, size = 0x4000, scoped, tag = 'output window, operand 0, single buffered']
    %10 = vsyncpa [#allocation5], 0
    %11 = vsyncpa [#allocation8], 0
    %12 = vsyncpa [#allocation11], 0
    %13 = vsyncpa [#allocation6], 0
    // Predicated region
    $region2: #{tpu_custom_call.1} parent=1 // pred_check
      _
    $region3: #{tpu_custom_call.1} parent=1 // pred_check_branch
      %15 = sbr.rel (0) target = $region5
    $region4: #{tpu_custom_call.1} parent=1 // pred_region
      %17 = vsyncadd [#allocation5], 0
      %s18 = sshll.u32 %s0, 4
      %s19 = int_to_ptr.hbm [resolvable:$true] %s18
      %s20 = sshll.u32 [#allocation4], 4
      %s21 = int_to_ptr.vmem [resolvable:$true] %s20
      %26 = dma.hbm_to_vmem [thread:$0]  %s19, 2048, %s21, [#allocation5], 128, 128, 8
    $region5: #{tpu_custom_call.1} parent=1 // pred_fallthru
      _
    // Predicated region
    $region6: #{tpu_custom_call.1} parent=1 // pred_check
      _
    $region7: #{tpu_custom_call.1} parent=1 // pred_check_branch
      %28 = sbr.rel (0) target = $region9
    $region8: #{tpu_custom_call.1} parent=1 // pred_region
      %30 = vsyncadd [#allocation8], 0
      %s31 = sshll.u32 %s1, 4
      %s32 = int_to_ptr.hbm [resolvable:$true] %s31
      %s33 = sshll.u32 [#allocation7], 4
      %s34 = int_to_ptr.vmem [resolvable:$true] %s33
      %39 = dma.hbm_to_vmem [thread:$0]  %s32, 16384, %s34, [#allocation8], 512, 512, 32
    $region9: #{tpu_custom_call.1} parent=1 // pred_fallthru
      _
    // Predicated region
    $region10: #{tpu_custom_call.1} parent=1 // pred_check
      _
    $region11: #{tpu_custom_call.1} parent=1 // pred_check_branch
      %41 = sbr.rel (0) target = $region13
    $region12: #{tpu_custom_call.1} parent=1 // pred_region
      %43 = vsyncadd [#allocation8], 0
      %s45 = sshll.u32 %s2, 4
      %s46 = int_to_ptr.hbm [resolvable:$true] %s45
      %s47 = sshll.u32 [#allocation9], 4
      %s48 = int_to_ptr.vmem [resolvable:$true] %s47
      %50 = dma.hbm_to_vmem [thread:$0]  %s46, 128, %s48, [#allocation8]
    $region13: #{tpu_custom_call.1} parent=1 // pred_fallthru
      _
    // Predicated region
    $region14: #{tpu_custom_call.1} parent=1 // pred_check
      _
    $region15: #{tpu_custom_call.1} parent=1 // pred_check_branch
      %52 = sbr.rel (0) target = $region17
    $region16: #{tpu_custom_call.1} parent=1 // pred_region
      %54 = vsyncadd [#allocation11], 0
      %s55 = sshll.u32 %s3, 4
      %s56 = int_to_ptr.hbm [resolvable:$true] %s55
      %s57 = sshll.u32 [#allocation10], 4
      %s58 = int_to_ptr.vmem [resolvable:$true] %s57
      %63 = dma.hbm_to_vmem [thread:$0]  %s56, 4096, %s58, [#allocation11], 256, 256, 16
    $region17: #{tpu_custom_call.1} parent=1 // pred_fallthru
      _
    // Predicated region
    $region18: #{tpu_custom_call.1} parent=1 // pred_check
      _
    $region19: #{tpu_custom_call.1} parent=1 // pred_check_branch
      %65 = sbr.rel (0) target = $region21
    $region20: #{tpu_custom_call.1} parent=1 // pred_region
      %67 = vsyncadd [#allocation11], 0
      %s68 = sshll.u32 %s4, 4
      %s69 = int_to_ptr.hbm [resolvable:$true] %s68
      %s70 = sshll.u32 [#allocation12], 4
      %s71 = int_to_ptr.vmem [resolvable:$true] %s70
      %76 = dma.hbm_to_vmem [thread:$0]  %s69, 4096, %s71, [#allocation11], 256, 256, 16
    $region21: #{tpu_custom_call.1} parent=1 // pred_fallthru
      _
    // Predicated region
    $region22: #{tpu_custom_call.1} parent=1 // pred_check
      _
    $region23: #{tpu_custom_call.1} parent=1 // pred_check_branch
      %78 = sbr.rel (0) target = $region25
    $region24: #{tpu_custom_call.1} parent=1 // pred_region
      %80 = dma.done [#allocation5], 2048
    $region25: #{tpu_custom_call.1} parent=1 // pred_fallthru
      _
    // Predicated region
    $region26: #{tpu_custom_call.1} parent=1 // pred_check
      _
    $region27: #{tpu_custom_call.1} parent=1 // pred_check_branch
      %82 = sbr.rel (0) target = $region29
    $region28: #{tpu_custom_call.1} parent=1 // pred_region
      %84 = dma.done [#allocation8], 16384
    $region29: #{tpu_custom_call.1} parent=1 // pred_fallthru
      _
    // Predicated region
    $region30: #{tpu_custom_call.1} parent=1 // pred_check
      _
    $region31: #{tpu_custom_call.1} parent=1 // pred_check_branch
      %86 = sbr.rel (0) target = $region33
    $region32: #{tpu_custom_call.1} parent=1 // pred_region
      %88 = dma.done [#allocation8], 128
    $region33: #{tpu_custom_call.1} parent=1 // pred_fallthru
      _
    // Predicated region
    $region34: #{tpu_custom_call.1} parent=1 // pred_check
      _
    $region35: #{tpu_custom_call.1} parent=1 // pred_check_branch
      %90 = sbr.rel (0) target = $region37
    $region36: #{tpu_custom_call.1} parent=1 // pred_region
      %92 = dma.done [#allocation11], 4096
    $region37: #{tpu_custom_call.1} parent=1 // pred_fallthru
      _
    // Predicated region
    $region38: #{tpu_custom_call.1} parent=1 // pred_check
      _
    $region39: #{tpu_custom_call.1} parent=1 // pred_check_branch
      %94 = sbr.rel (0) target = $region41
    $region40: #{tpu_custom_call.1} parent=1 // pred_region
      %96 = dma.done [#allocation11], 4096
    $region41: #{tpu_custom_call.1} parent=1 // pred_fallthru
      _
    %v98 = vld [vmem:[#allocation4] sm:$0xff]
    %v99 = vld [vmem:[#allocation4 + $0x8] sm:$0xff]
    %v100 = vld [vmem:[#allocation4 + $0x10] sm:$0xff]
    %v101 = vld [vmem:[#allocation4 + $0x18] sm:$0xff]
    %v102 = vld [vmem:[#allocation4 + $0x20] sm:$0xff]
    %v103 = vld [vmem:[#allocation4 + $0x28] sm:$0xff]
    %v104 = vld [vmem:[#allocation4 + $0x30] sm:$0xff]
    %v105 = vld [vmem:[#allocation4 + $0x38] sm:$0xff]
    %v106 = vld [vmem:[#allocation4 + $0x40] sm:$0xff]
    %v107 = vld [vmem:[#allocation4 + $0x48] sm:$0xff]
    %v108 = vld [vmem:[#allocation4 + $0x50] sm:$0xff]
    %v109 = vld [vmem:[#allocation4 + $0x58] sm:$0xff]
    %v110 = vld [vmem:[#allocation4 + $0x60] sm:$0xff]
    %v111 = vld [vmem:[#allocation4 + $0x68] sm:$0xff]
    %v112 = vld [vmem:[#allocation4 + $0x70] sm:$0xff]
    %v113 = vld [vmem:[#allocation4 + $0x78] sm:$0xff]
    %v114 = vld [vmem:[#allocation7] sm:$0xff]
    %v115 = vld [vmem:[#allocation7 + $0x8] sm:$0xff]
    %v116 = vld [vmem:[#allocation7 + $0x10] sm:$0xff]
    %v117 = vld [vmem:[#allocation7 + $0x18] sm:$0xff]
    %v118 = vld [vmem:[#allocation7 + $0x20] sm:$0xff]
    %v119 = vld [vmem:[#allocation7 + $0x28] sm:$0xff]
    %v120 = vld [vmem:[#allocation7 + $0x30] sm:$0xff]
    %v121 = vld [vmem:[#allocation7 + $0x38] sm:$0xff]
    %v122 = vld [vmem:[#allocation7 + $0x40] sm:$0xff]
    %v123 = vld [vmem:[#allocation7 + $0x48] sm:$0xff]
    %v124 = vld [vmem:[#allocation7 + $0x50] sm:$0xff]
    %v125 = vld [vmem:[#allocation7 + $0x58] sm:$0xff]
    %v126 = vld [vmem:[#allocation7 + $0x60] sm:$0xff]
    %v127 = vld [vmem:[#allocation7 + $0x68] sm:$0xff]
    %v128 = vld [vmem:[#allocation7 + $0x70] sm:$0xff]
    %v129 = vld [vmem:[#allocation7 + $0x78] sm:$0xff]
    %v130 = vld [vmem:[#allocation7 + $0x80] sm:$0xff]
    %v131 = vld [vmem:[#allocation7 + $0x88] sm:$0xff]
    %v132 = vld [vmem:[#allocation7 + $0x90] sm:$0xff]
    %v133 = vld [vmem:[#allocation7 + $0x98] sm:$0xff]
    %v134 = vld [vmem:[#allocation7 + $0xa0] sm:$0xff]
    %v135 = vld [vmem:[#allocation7 + $0xa8] sm:$0xff]
    %v136 = vld [vmem:[#allocation7 + $0xb0] sm:$0xff]
    %v137 = vld [vmem:[#allocation7 + $0xb8] sm:$0xff]
    %v138 = vld [vmem:[#allocation7 + $0xc0] sm:$0xff]
    %v139 = vld [vmem:[#allocation7 + $0xc8] sm:$0xff]
    %v140 = vld [vmem:[#allocation7 + $0xd0] sm:$0xff]
    %v141 = vld [vmem:[#allocation7 + $0xd8] sm:$0xff]
    %v142 = vld [vmem:[#allocation7 + $0xe0] sm:$0xff]
    %v143 = vld [vmem:[#allocation7 + $0xe8] sm:$0xff]
    %v144 = vld [vmem:[#allocation7 + $0xf0] sm:$0xff]
    %v145 = vld [vmem:[#allocation7 + $0xf8] sm:$0xff]
    %v146 = vld [vmem:[#allocation7 + $0x100] sm:$0xff]
    %v147 = vld [vmem:[#allocation7 + $0x108] sm:$0xff]
    %v148 = vld [vmem:[#allocation7 + $0x110] sm:$0xff]
    %v149 = vld [vmem:[#allocation7 + $0x118] sm:$0xff]
    %v150 = vld [vmem:[#allocation7 + $0x120] sm:$0xff]
    %v151 = vld [vmem:[#allocation7 + $0x128] sm:$0xff]
    %v152 = vld [vmem:[#allocation7 + $0x130] sm:$0xff]
    %v153 = vld [vmem:[#allocation7 + $0x138] sm:$0xff]
    %v154 = vld [vmem:[#allocation7 + $0x140] sm:$0xff]
    %v155 = vld [vmem:[#allocation7 + $0x148] sm:$0xff]
    %v156 = vld [vmem:[#allocation7 + $0x150] sm:$0xff]
    %v157 = vld [vmem:[#allocation7 + $0x158] sm:$0xff]
    %v158 = vld [vmem:[#allocation7 + $0x160] sm:$0xff]
    %v159 = vld [vmem:[#allocation7 + $0x168] sm:$0xff]
    %v160 = vld [vmem:[#allocation7 + $0x170] sm:$0xff]
    %v161 = vld [vmem:[#allocation7 + $0x178] sm:$0xff]
    %v162 = vld [vmem:[#allocation7 + $0x180] sm:$0xff]
    %v163 = vld [vmem:[#allocation7 + $0x188] sm:$0xff]
    %v164 = vld [vmem:[#allocation7 + $0x190] sm:$0xff]
    %v165 = vld [vmem:[#allocation7 + $0x198] sm:$0xff]
    %v166 = vld [vmem:[#allocation7 + $0x1a0] sm:$0xff]
    %v167 = vld [vmem:[#allocation7 + $0x1a8] sm:$0xff]
    %v168 = vld [vmem:[#allocation7 + $0x1b0] sm:$0xff]
    %v169 = vld [vmem:[#allocation7 + $0x1b8] sm:$0xff]
    %v170 = vld [vmem:[#allocation7 + $0x1c0] sm:$0xff]
    %v171 = vld [vmem:[#allocation7 + $0x1c8] sm:$0xff]
    %v172 = vld [vmem:[#allocation7 + $0x1d0] sm:$0xff]
    %v173 = vld [vmem:[#allocation7 + $0x1d8] sm:$0xff]
    %v174 = vld [vmem:[#allocation7 + $0x1e0] sm:$0xff]
    %v175 = vld [vmem:[#allocation7 + $0x1e8] sm:$0xff]
    %v176 = vld [vmem:[#allocation7 + $0x1f0] sm:$0xff]
    %v177 = vld [vmem:[#allocation7 + $0x1f8] sm:$0xff]
    %v178 = vld [vmem:[#allocation7 + $0x200] sm:$0xff]
    %v179 = vld [vmem:[#allocation7 + $0x208] sm:$0xff]
    %v180 = vld [vmem:[#allocation7 + $0x210] sm:$0xff]
    %v181 = vld [vmem:[#allocation7 + $0x218] sm:$0xff]
    %v182 = vld [vmem:[#allocation7 + $0x220] sm:$0xff]
    %v183 = vld [vmem:[#allocation7 + $0x228] sm:$0xff]
    %v184 = vld [vmem:[#allocation7 + $0x230] sm:$0xff]
    %v185 = vld [vmem:[#allocation7 + $0x238] sm:$0xff]
    %v186 = vld [vmem:[#allocation7 + $0x240] sm:$0xff]
    %v187 = vld [vmem:[#allocation7 + $0x248] sm:$0xff]
    %v188 = vld [vmem:[#allocation7 + $0x250] sm:$0xff]
    %v189 = vld [vmem:[#allocation7 + $0x258] sm:$0xff]
    %v190 = vld [vmem:[#allocation7 + $0x260] sm:$0xff]
    %v191 = vld [vmem:[#allocation7 + $0x268] sm:$0xff]
    %v192 = vld [vmem:[#allocation7 + $0x270] sm:$0xff]
    %v193 = vld [vmem:[#allocation7 + $0x278] sm:$0xff]
    %v194 = vld [vmem:[#allocation7 + $0x280] sm:$0xff]
    %v195 = vld [vmem:[#allocation7 + $0x288] sm:$0xff]
    %v196 = vld [vmem:[#allocation7 + $0x290] sm:$0xff]
    %v197 = vld [vmem:[#allocation7 + $0x298] sm:$0xff]
    %v198 = vld [vmem:[#allocation7 + $0x2a0] sm:$0xff]
    %v199 = vld [vmem:[#allocation7 + $0x2a8] sm:$0xff]
    %v200 = vld [vmem:[#allocation7 + $0x2b0] sm:$0xff]
    %v201 = vld [vmem:[#allocation7 + $0x2b8] sm:$0xff]
    %v202 = vld [vmem:[#allocation7 + $0x2c0] sm:$0xff]
    %v203 = vld [vmem:[#allocation7 + $0x2c8] sm:$0xff]
    %v204 = vld [vmem:[#allocation7 + $0x2d0] sm:$0xff]
    %v205 = vld [vmem:[#allocation7 + $0x2d8] sm:$0xff]
    %v206 = vld [vmem:[#allocation7 + $0x2e0] sm:$0xff]
    %v207 = vld [vmem:[#allocation7 + $0x2e8] sm:$0xff]
    %v208 = vld [vmem:[#allocation7 + $0x2f0] sm:$0xff]
    %v209 = vld [vmem:[#allocation7 + $0x2f8] sm:$0xff]
    %v210 = vld [vmem:[#allocation7 + $0x300] sm:$0xff]
    %v211 = vld [vmem:[#allocation7 + $0x308] sm:$0xff]
    %v212 = vld [vmem:[#allocation7 + $0x310] sm:$0xff]
    %v213 = vld [vmem:[#allocation7 + $0x318] sm:$0xff]
    %v214 = vld [vmem:[#allocation7 + $0x320] sm:$0xff]
    %v215 = vld [vmem:[#allocation7 + $0x328] sm:$0xff]
    %v216 = vld [vmem:[#allocation7 + $0x330] sm:$0xff]
    %v217 = vld [vmem:[#allocation7 + $0x338] sm:$0xff]
    %v218 = vld [vmem:[#allocation7 + $0x340] sm:$0xff]
    %v219 = vld [vmem:[#allocation7 + $0x348] sm:$0xff]
    %v220 = vld [vmem:[#allocation7 + $0x350] sm:$0xff]
    %v221 = vld [vmem:[#allocation7 + $0x358] sm:$0xff]
    %v222 = vld [vmem:[#allocation7 + $0x360] sm:$0xff]
    %v223 = vld [vmem:[#allocation7 + $0x368] sm:$0xff]
    %v224 = vld [vmem:[#allocation7 + $0x370] sm:$0xff]
    %v225 = vld [vmem:[#allocation7 + $0x378] sm:$0xff]
    %v226 = vld [vmem:[#allocation7 + $0x380] sm:$0xff]
    %v227 = vld [vmem:[#allocation7 + $0x388] sm:$0xff]
    %v228 = vld [vmem:[#allocation7 + $0x390] sm:$0xff]
    %v229 = vld [vmem:[#allocation7 + $0x398] sm:$0xff]
    %v230 = vld [vmem:[#allocation7 + $0x3a0] sm:$0xff]
    %v231 = vld [vmem:[#allocation7 + $0x3a8] sm:$0xff]
    %v232 = vld [vmem:[#allocation7 + $0x3b0] sm:$0xff]
    %v233 = vld [vmem:[#allocation7 + $0x3b8] sm:$0xff]
    %v234 = vld [vmem:[#allocation7 + $0x3c0] sm:$0xff]
    %v235 = vld [vmem:[#allocation7 + $0x3c8] sm:$0xff]
    %v236 = vld [vmem:[#allocation7 + $0x3d0] sm:$0xff]
    %v237 = vld [vmem:[#allocation7 + $0x3d8] sm:$0xff]
    %v238 = vld [vmem:[#allocation7 + $0x3e0] sm:$0xff]
    %v239 = vld [vmem:[#allocation7 + $0x3e8] sm:$0xff]
    %v240 = vld [vmem:[#allocation7 + $0x3f0] sm:$0xff]
    %v241 = vld [vmem:[#allocation7 + $0x3f8] sm:$0xff]
    %v242 = vld [vmem:[#allocation9] sm:$0xff]
    %v244 = vperm.slane %v242, 0
    %v245 = vperm.slane %v242, 1
    %v246 = vperm.slane %v242, 2
    %v247 = vperm.slane %v242, 3
    %v248 = vperm.slane %v242, 4
    %v249 = vperm.slane %v242, 5
    %v250 = vperm.slane %v242, 6
    %v251 = vperm.slane %v242, 7
    %v276 = vunpack.c.l.b16 %v98
    %v277 = vunpack.c.h.b16 %v98
    %v278 = vunpack.c.l.b16 %v99
    %v279 = vunpack.c.h.b16 %v99
    %v280 = vunpack.c.l.b16 %v100
    %v281 = vunpack.c.h.b16 %v100
    %v282 = vunpack.c.l.b16 %v101
    %v283 = vunpack.c.h.b16 %v101
    %v284 = vunpack.c.l.b16 %v102
    %v285 = vunpack.c.h.b16 %v102
    %v286 = vunpack.c.l.b16 %v103
    %v287 = vunpack.c.h.b16 %v103
    %v288 = vunpack.c.l.b16 %v104
    %v289 = vunpack.c.h.b16 %v104
    %v290 = vunpack.c.l.b16 %v105
    %v291 = vunpack.c.h.b16 %v105
    %v292 = vunpack.c.l.b16 %v106
    %v293 = vunpack.c.h.b16 %v106
    %v294 = vunpack.c.l.b16 %v107
    %v295 = vunpack.c.h.b16 %v107
    %v296 = vunpack.c.l.b16 %v108
    %v297 = vunpack.c.h.b16 %v108
    %v298 = vunpack.c.l.b16 %v109
    %v299 = vunpack.c.h.b16 %v109
    %v300 = vunpack.c.l.b16 %v110
    %v301 = vunpack.c.h.b16 %v110
    %v302 = vunpack.c.l.b16 %v111
    %v303 = vunpack.c.h.b16 %v111
    %v304 = vunpack.c.l.b16 %v112
    %v305 = vunpack.c.h.b16 %v112
    %v306 = vunpack.c.l.b16 %v113
    %v307 = vunpack.c.h.b16 %v113
    %v308 = vpack.c.b16 %v278, %v276
    %v309 = vpack.c.b16 %v279, %v277
    %v310 = vpack.c.b16 %v282, %v280
    %v311 = vpack.c.b16 %v283, %v281
    %v312 = vpack.c.b16 %v286, %v284
    %v313 = vpack.c.b16 %v287, %v285
    %v314 = vpack.c.b16 %v290, %v288
    %v315 = vpack.c.b16 %v291, %v289
    %v316 = vpack.c.b16 %v294, %v292
    %v317 = vpack.c.b16 %v295, %v293
    %v318 = vpack.c.b16 %v298, %v296
    %v319 = vpack.c.b16 %v299, %v297
    %v320 = vpack.c.b16 %v302, %v300
    %v321 = vpack.c.b16 %v303, %v301
    %v322 = vpack.c.b16 %v306, %v304
    %v323 = vpack.c.b16 %v307, %v305
    %v468 = vunpack.c.l.b16 %v114
    %v469 = vunpack.c.h.b16 %v114
    %v470 = vunpack.c.l.b16 %v115
    %v471 = vunpack.c.h.b16 %v115
    %v472 = vunpack.c.l.b16 %v116
    %v473 = vunpack.c.h.b16 %v116
    %v474 = vunpack.c.l.b16 %v117
    %v475 = vunpack.c.h.b16 %v117
    %v476 = vunpack.c.l.b16 %v118
    %v477 = vunpack.c.h.b16 %v118
    %v478 = vunpack.c.l.b16 %v119
    %v479 = vunpack.c.h.b16 %v119
    %v480 = vunpack.c.l.b16 %v120
    %v481 = vunpack.c.h.b16 %v120
    %v482 = vunpack.c.l.b16 %v121
    %v483 = vunpack.c.h.b16 %v121
    %v484 = vunpack.c.l.b16 %v122
    %v485 = vunpack.c.h.b16 %v122
    %v486 = vunpack.c.l.b16 %v123
    %v487 = vunpack.c.h.b16 %v123
    %v488 = vunpack.c.l.b16 %v124
    %v489 = vunpack.c.h.b16 %v124
    %v490 = vunpack.c.l.b16 %v125
    %v491 = vunpack.c.h.b16 %v125
    %v492 = vunpack.c.l.b16 %v126
    %v493 = vunpack.c.h.b16 %v126
    %v494 = vunpack.c.l.b16 %v127
    %v495 = vunpack.c.h.b16 %v127
    %v496 = vunpack.c.l.b16 %v128
    %v497 = vunpack.c.h.b16 %v128
    %v498 = vunpack.c.l.b16 %v129
    %v499 = vunpack.c.h.b16 %v129
    %v500 = vunpack.c.l.b16 %v130
    %v501 = vunpack.c.h.b16 %v130
    %v502 = vunpack.c.l.b16 %v131
    %v503 = vunpack.c.h.b16 %v131
    %v504 = vunpack.c.l.b16 %v132
    %v505 = vunpack.c.h.b16 %v132
    %v506 = vunpack.c.l.b16 %v133
    %v507 = vunpack.c.h.b16 %v133
    %v508 = vunpack.c.l.b16 %v134
    %v509 = vunpack.c.h.b16 %v134
    %v510 = vunpack.c.l.b16 %v135
    %v511 = vunpack.c.h.b16 %v135
    %v512 = vunpack.c.l.b16 %v136
    %v513 = vunpack.c.h.b16 %v136
    %v514 = vunpack.c.l.b16 %v137
    %v515 = vunpack.c.h.b16 %v137
    %v516 = vunpack.c.l.b16 %v138
    %v517 = vunpack.c.h.b16 %v138
    %v518 = vunpack.c.l.b16 %v139
    %v519 = vunpack.c.h.b16 %v139
    %v520 = vunpack.c.l.b16 %v140
    %v521 = vunpack.c.h.b16 %v140
    %v522 = vunpack.c.l.b16 %v141
    %v523 = vunpack.c.h.b16 %v141
    %v524 = vunpack.c.l.b16 %v142
    %v525 = vunpack.c.h.b16 %v142
    %v526 = vunpack.c.l.b16 %v143
    %v527 = vunpack.c.h.b16 %v143
    %v528 = vunpack.c.l.b16 %v144
    %v529 = vunpack.c.h.b16 %v144
    %v530 = vunpack.c.l.b16 %v145
    %v531 = vunpack.c.h.b16 %v145
    %v532 = vunpack.c.l.b16 %v146
    %v533 = vunpack.c.h.b16 %v146
    %v534 = vunpack.c.l.b16 %v147
    %v535 = vunpack.c.h.b16 %v147
    %v536 = vunpack.c.l.b16 %v148
    %v537 = vunpack.c.h.b16 %v148
    %v538 = vunpack.c.l.b16 %v149
    %v539 = vunpack.c.h.b16 %v149
    %v540 = vunpack.c.l.b16 %v150
    %v541 = vunpack.c.h.b16 %v150
    %v542 = vunpack.c.l.b16 %v151
    %v543 = vunpack.c.h.b16 %v151
    %v544 = vunpack.c.l.b16 %v152
    %v545 = vunpack.c.h.b16 %v152
    %v546 = vunpack.c.l.b16 %v153
    %v547 = vunpack.c.h.b16 %v153
    %v548 = vunpack.c.l.b16 %v154
    %v549 = vunpack.c.h.b16 %v154
    %v550 = vunpack.c.l.b16 %v155
    %v551 = vunpack.c.h.b16 %v155
    %v552 = vunpack.c.l.b16 %v156
    %v553 = vunpack.c.h.b16 %v156
    %v554 = vunpack.c.l.b16 %v157
    %v555 = vunpack.c.h.b16 %v157
    %v556 = vunpack.c.l.b16 %v158
    %v557 = vunpack.c.h.b16 %v158
    %v558 = vunpack.c.l.b16 %v159
    %v559 = vunpack.c.h.b16 %v159
    %v560 = vunpack.c.l.b16 %v160
    %v561 = vunpack.c.h.b16 %v160
    %v562 = vunpack.c.l.b16 %v161
    %v563 = vunpack.c.h.b16 %v161
    %v564 = vunpack.c.l.b16 %v162
    %v565 = vunpack.c.h.b16 %v162
    %v566 = vunpack.c.l.b16 %v163
    %v567 = vunpack.c.h.b16 %v163
    %v568 = vunpack.c.l.b16 %v164
    %v569 = vunpack.c.h.b16 %v164
    %v570 = vunpack.c.l.b16 %v165
    %v571 = vunpack.c.h.b16 %v165
    %v572 = vunpack.c.l.b16 %v166
    %v573 = vunpack.c.h.b16 %v166
    %v574 = vunpack.c.l.b16 %v167
    %v575 = vunpack.c.h.b16 %v167
    %v576 = vunpack.c.l.b16 %v168
    %v577 = vunpack.c.h.b16 %v168
    %v578 = vunpack.c.l.b16 %v169
    %v579 = vunpack.c.h.b16 %v169
    %v580 = vunpack.c.l.b16 %v170
    %v581 = vunpack.c.h.b16 %v170
    %v582 = vunpack.c.l.b16 %v171
    %v583 = vunpack.c.h.b16 %v171
    %v584 = vunpack.c.l.b16 %v172
    %v585 = vunpack.c.h.b16 %v172
    %v586 = vunpack.c.l.b16 %v173
    %v587 = vunpack.c.h.b16 %v173
    %v588 = vunpack.c.l.b16 %v174
    %v589 = vunpack.c.h.b16 %v174
    %v590 = vunpack.c.l.b16 %v175
    %v591 = vunpack.c.h.b16 %v175
    %v592 = vunpack.c.l.b16 %v176
    %v593 = vunpack.c.h.b16 %v176
    %v594 = vunpack.c.l.b16 %v177
    %v595 = vunpack.c.h.b16 %v177
    %v596 = vunpack.c.l.b16 %v178
    %v597 = vunpack.c.h.b16 %v178
    %v598 = vunpack.c.l.b16 %v179
    %v599 = vunpack.c.h.b16 %v179
    %v600 = vunpack.c.l.b16 %v180
    %v601 = vunpack.c.h.b16 %v180
    %v602 = vunpack.c.l.b16 %v181
    %v603 = vunpack.c.h.b16 %v181
    %v604 = vunpack.c.l.b16 %v182
    %v605 = vunpack.c.h.b16 %v182
    %v606 = vunpack.c.l.b16 %v183
    %v607 = vunpack.c.h.b16 %v183
    %v608 = vunpack.c.l.b16 %v184
    %v609 = vunpack.c.h.b16 %v184
    %v610 = vunpack.c.l.b16 %v185
    %v611 = vunpack.c.h.b16 %v185
    %v612 = vunpack.c.l.b16 %v186
    %v613 = vunpack.c.h.b16 %v186
    %v614 = vunpack.c.l.b16 %v187
    %v615 = vunpack.c.h.b16 %v187
    %v616 = vunpack.c.l.b16 %v188
    %v617 = vunpack.c.h.b16 %v188
    %v618 = vunpack.c.l.b16 %v189
    %v619 = vunpack.c.h.b16 %v189
    %v620 = vunpack.c.l.b16 %v190
    %v621 = vunpack.c.h.b16 %v190
    %v622 = vunpack.c.l.b16 %v191
    %v623 = vunpack.c.h.b16 %v191
    %v624 = vunpack.c.l.b16 %v192
    %v625 = vunpack.c.h.b16 %v192
    %v626 = vunpack.c.l.b16 %v193
    %v627 = vunpack.c.h.b16 %v193
    %v628 = vunpack.c.l.b16 %v194
    %v629 = vunpack.c.h.b16 %v194
    %v630 = vunpack.c.l.b16 %v195
    %v631 = vunpack.c.h.b16 %v195
    %v632 = vunpack.c.l.b16 %v196
    %v633 = vunpack.c.h.b16 %v196
    %v634 = vunpack.c.l.b16 %v197
    %v635 = vunpack.c.h.b16 %v197
    %v636 = vunpack.c.l.b16 %v198
    %v637 = vunpack.c.h.b16 %v198
    %v638 = vunpack.c.l.b16 %v199
    %v639 = vunpack.c.h.b16 %v199
    %v640 = vunpack.c.l.b16 %v200
    %v641 = vunpack.c.h.b16 %v200
    %v642 = vunpack.c.l.b16 %v201
    %v643 = vunpack.c.h.b16 %v201
    %v644 = vunpack.c.l.b16 %v202
    %v645 = vunpack.c.h.b16 %v202
    %v646 = vunpack.c.l.b16 %v203
    %v647 = vunpack.c.h.b16 %v203
    %v648 = vunpack.c.l.b16 %v204
    %v649 = vunpack.c.h.b16 %v204
    %v650 = vunpack.c.l.b16 %v205
    %v651 = vunpack.c.h.b16 %v205
    %v652 = vunpack.c.l.b16 %v206
    %v653 = vunpack.c.h.b16 %v206
    %v654 = vunpack.c.l.b16 %v207
    %v655 = vunpack.c.h.b16 %v207
    %v656 = vunpack.c.l.b16 %v208
    %v657 = vunpack.c.h.b16 %v208
    %v658 = vunpack.c.l.b16 %v209
    %v659 = vunpack.c.h.b16 %v209
    %v660 = vunpack.c.l.b16 %v210
    %v661 = vunpack.c.h.b16 %v210
    %v662 = vunpack.c.l.b16 %v211
    %v663 = vunpack.c.h.b16 %v211
    %v664 = vunpack.c.l.b16 %v212
    %v665 = vunpack.c.h.b16 %v212
    %v666 = vunpack.c.l.b16 %v213
    %v667 = vunpack.c.h.b16 %v213
    %v668 = vunpack.c.l.b16 %v214
    %v669 = vunpack.c.h.b16 %v214
    %v670 = vunpack.c.l.b16 %v215
    %v671 = vunpack.c.h.b16 %v215
    %v672 = vunpack.c.l.b16 %v216
    %v673 = vunpack.c.h.b16 %v216
    %v674 = vunpack.c.l.b16 %v217
    %v675 = vunpack.c.h.b16 %v217
    %v676 = vunpack.c.l.b16 %v218
    %v677 = vunpack.c.h.b16 %v218
    %v678 = vunpack.c.l.b16 %v219
    %v679 = vunpack.c.h.b16 %v219
    %v680 = vunpack.c.l.b16 %v220
    %v681 = vunpack.c.h.b16 %v220
    %v682 = vunpack.c.l.b16 %v221
    %v683 = vunpack.c.h.b16 %v221
    %v684 = vunpack.c.l.b16 %v222
    %v685 = vunpack.c.h.b16 %v222
    %v686 = vunpack.c.l.b16 %v223
    %v687 = vunpack.c.h.b16 %v223
    %v688 = vunpack.c.l.b16 %v224
    %v689 = vunpack.c.h.b16 %v224
    %v690 = vunpack.c.l.b16 %v225
    %v691 = vunpack.c.h.b16 %v225
    %v692 = vunpack.c.l.b16 %v226
    %v693 = vunpack.c.h.b16 %v226
    %v694 = vunpack.c.l.b16 %v227
    %v695 = vunpack.c.h.b16 %v227
    %v696 = vunpack.c.l.b16 %v228
    %v697 = vunpack.c.h.b16 %v228
    %v698 = vunpack.c.l.b16 %v229
    %v699 = vunpack.c.h.b16 %v229
    %v700 = vunpack.c.l.b16 %v230
    %v701 = vunpack.c.h.b16 %v230
    %v702 = vunpack.c.l.b16 %v231
    %v703 = vunpack.c.h.b16 %v231
    %v704 = vunpack.c.l.b16 %v232
    %v705 = vunpack.c.h.b16 %v232
    %v706 = vunpack.c.l.b16 %v233
    %v707 = vunpack.c.h.b16 %v233
    %v708 = vunpack.c.l.b16 %v234
    %v709 = vunpack.c.h.b16 %v234
    %v710 = vunpack.c.l.b16 %v235
    %v711 = vunpack.c.h.b16 %v235
    %v712 = vunpack.c.l.b16 %v236
    %v713 = vunpack.c.h.b16 %v236
    %v714 = vunpack.c.l.b16 %v237
    %v715 = vunpack.c.h.b16 %v237
    %v716 = vunpack.c.l.b16 %v238
    %v717 = vunpack.c.h.b16 %v238
    %v718 = vunpack.c.l.b16 %v239
    %v719 = vunpack.c.h.b16 %v239
    %v720 = vunpack.c.l.b16 %v240
    %v721 = vunpack.c.h.b16 %v240
    %v722 = vunpack.c.l.b16 %v241
    %v723 = vunpack.c.h.b16 %v241
    %v724 = vpack.c.b16 %v476, %v468
    %v725 = vpack.c.b16 %v477, %v469
    %v726 = vpack.c.b16 %v478, %v470
    %v727 = vpack.c.b16 %v479, %v471
    %v728 = vpack.c.b16 %v480, %v472
    %v729 = vpack.c.b16 %v481, %v473
    %v730 = vpack.c.b16 %v482, %v474
    %v731 = vpack.c.b16 %v483, %v475
    %v732 = vpack.c.b16 %v492, %v484
    %v733 = vpack.c.b16 %v493, %v485
    %v734 = vpack.c.b16 %v494, %v486
    %v735 = vpack.c.b16 %v495, %v487
    %v736 = vpack.c.b16 %v496, %v488
    %v737 = vpack.c.b16 %v497, %v489
    %v738 = vpack.c.b16 %v498, %v490
    %v739 = vpack.c.b16 %v499, %v491
    %v740 = vpack.c.b16 %v508, %v500
    %v741 = vpack.c.b16 %v509, %v501
    %v742 = vpack.c.b16 %v510, %v502
    %v743 = vpack.c.b16 %v511, %v503
    %v744 = vpack.c.b16 %v512, %v504
    %v745 = vpack.c.b16 %v513, %v505
    %v746 = vpack.c.b16 %v514, %v506
    %v747 = vpack.c.b16 %v515, %v507
    %v748 = vpack.c.b16 %v524, %v516
    %v749 = vpack.c.b16 %v525, %v517
    %v750 = vpack.c.b16 %v526, %v518
    %v751 = vpack.c.b16 %v527, %v519
    %v752 = vpack.c.b16 %v528, %v520
    %v753 = vpack.c.b16 %v529, %v521
    %v754 = vpack.c.b16 %v530, %v522
    %v755 = vpack.c.b16 %v531, %v523
    %v756 = vpack.c.b16 %v540, %v532
    %v757 = vpack.c.b16 %v541, %v533
    %v758 = vpack.c.b16 %v542, %v534
    %v759 = vpack.c.b16 %v543, %v535
    %v760 = vpack.c.b16 %v544, %v536
    %v761 = vpack.c.b16 %v545, %v537
    %v762 = vpack.c.b16 %v546, %v538
    %v763 = vpack.c.b16 %v547, %v539
    %v764 = vpack.c.b16 %v556, %v548
    %v765 = vpack.c.b16 %v557, %v549
    %v766 = vpack.c.b16 %v558, %v550
    %v767 = vpack.c.b16 %v559, %v551
    %v768 = vpack.c.b16 %v560, %v552
    %v769 = vpack.c.b16 %v561, %v553
    %v770 = vpack.c.b16 %v562, %v554
    %v771 = vpack.c.b16 %v563, %v555
    %v772 = vpack.c.b16 %v572, %v564
    %v773 = vpack.c.b16 %v573, %v565
    %v774 = vpack.c.b16 %v574, %v566
    %v775 = vpack.c.b16 %v575, %v567
    %v776 = vpack.c.b16 %v576, %v568
    %v777 = vpack.c.b16 %v577, %v569
    %v778 = vpack.c.b16 %v578, %v570
    %v779 = vpack.c.b16 %v579, %v571
    %v780 = vpack.c.b16 %v588, %v580
    %v781 = vpack.c.b16 %v589, %v581
    %v782 = vpack.c.b16 %v590, %v582
    %v783 = vpack.c.b16 %v591, %v583
    %v784 = vpack.c.b16 %v592, %v584
    %v785 = vpack.c.b16 %v593, %v585
    %v786 = vpack.c.b16 %v594, %v586
    %v787 = vpack.c.b16 %v595, %v587
    %v788 = vpack.c.b16 %v604, %v596
    %v789 = vpack.c.b16 %v605, %v597
    %v790 = vpack.c.b16 %v606, %v598
    %v791 = vpack.c.b16 %v607, %v599
    %v792 = vpack.c.b16 %v608, %v600
    %v793 = vpack.c.b16 %v609, %v601
    %v794 = vpack.c.b16 %v610, %v602
    %v795 = vpack.c.b16 %v611, %v603
    %v796 = vpack.c.b16 %v620, %v612
    %v797 = vpack.c.b16 %v621, %v613
    %v798 = vpack.c.b16 %v622, %v614
    %v799 = vpack.c.b16 %v623, %v615
    %v800 = vpack.c.b16 %v624, %v616
    %v801 = vpack.c.b16 %v625, %v617
    %v802 = vpack.c.b16 %v626, %v618
    %v803 = vpack.c.b16 %v627, %v619
    %v804 = vpack.c.b16 %v636, %v628
    %v805 = vpack.c.b16 %v637, %v629
    %v806 = vpack.c.b16 %v638, %v630
    %v807 = vpack.c.b16 %v639, %v631
    %v808 = vpack.c.b16 %v640, %v632
    %v809 = vpack.c.b16 %v641, %v633
    %v810 = vpack.c.b16 %v642, %v634
    %v811 = vpack.c.b16 %v643, %v635
    %v812 = vpack.c.b16 %v652, %v644
    %v813 = vpack.c.b16 %v653, %v645
    %v814 = vpack.c.b16 %v654, %v646
    %v815 = vpack.c.b16 %v655, %v647
    %v816 = vpack.c.b16 %v656, %v648
    %v817 = vpack.c.b16 %v657, %v649
    %v818 = vpack.c.b16 %v658, %v650
    %v819 = vpack.c.b16 %v659, %v651
    %v820 = vpack.c.b16 %v668, %v660
    %v821 = vpack.c.b16 %v669, %v661
    %v822 = vpack.c.b16 %v670, %v662
    %v823 = vpack.c.b16 %v671, %v663
    %v824 = vpack.c.b16 %v672, %v664
    %v825 = vpack.c.b16 %v673, %v665
    %v826 = vpack.c.b16 %v674, %v666
    %v827 = vpack.c.b16 %v675, %v667
    %v828 = vpack.c.b16 %v684, %v676
    %v829 = vpack.c.b16 %v685, %v677
    %v830 = vpack.c.b16 %v686, %v678
    %v831 = vpack.c.b16 %v687, %v679
    %v832 = vpack.c.b16 %v688, %v680
    %v833 = vpack.c.b16 %v689, %v681
    %v834 = vpack.c.b16 %v690, %v682
    %v835 = vpack.c.b16 %v691, %v683
    %v836 = vpack.c.b16 %v700, %v692
    %v837 = vpack.c.b16 %v701, %v693
    %v838 = vpack.c.b16 %v702, %v694
    %v839 = vpack.c.b16 %v703, %v695
    %v840 = vpack.c.b16 %v704, %v696
    %v841 = vpack.c.b16 %v705, %v697
    %v842 = vpack.c.b16 %v706, %v698
    %v843 = vpack.c.b16 %v707, %v699
    %v844 = vpack.c.b16 %v716, %v708
    %v845 = vpack.c.b16 %v717, %v709
    %v846 = vpack.c.b16 %v718, %v710
    %v847 = vpack.c.b16 %v719, %v711
    %v848 = vpack.c.b16 %v720, %v712
    %v849 = vpack.c.b16 %v721, %v713
    %v850 = vpack.c.b16 %v722, %v714
    %v851 = vpack.c.b16 %v723, %v715
    %980 = vmatpush.bf16.msra.mxu0 %v780
    %981 = vmatpush.bf16.msra.mxu0 %v772
    %982 = vmatpush.bf16.msra.mxu0 %v764
    %983 = vmatpush.bf16.msra.mxu0 %v756
    %984 = vmatpush.bf16.msra.mxu0 %v748
    %985 = vmatpush.bf16.msra.mxu0 %v740
    %986 = vmatpush.bf16.msra.mxu0 %v732
    %987 = vmatpush.bf16.msra.mxu0 %v724
    %988 = vmatmul.bf16.gmra.mxu0 %v308
    %v989 = vpop.f32.mrf.mxu0
    %v990 = vadd.f32 %v244, %v989
    %v991 = vpop.f32.mrf.mxu0
    %v992 = vadd.f32 %v244, %v991
    %993 = vmatmul.bf16.gmra.mxu0 %v310
    %v994 = vpop.f32.mrf.mxu0
    %v995 = vadd.f32 %v244, %v994
    %v996 = vpop.f32.mrf.mxu0
    %v997 = vadd.f32 %v244, %v996
    %998 = vmatmul.bf16.gmra.mxu0 %v312
    %v999 = vpop.f32.mrf.mxu0
    %v1000 = vadd.f32 %v244, %v999
    %v1001 = vpop.f32.mrf.mxu0
    %v1002 = vadd.f32 %v244, %v1001
    %1003 = vmatmul.bf16.gmra.mxu0 %v314
    %v1004 = vpop.f32.mrf.mxu0
    %v1005 = vadd.f32 %v244, %v1004
    %v1006 = vpop.f32.mrf.mxu0
    %v1007 = vadd.f32 %v244, %v1006
    %1008 = vmatmul.bf16.gmra.mxu0 %v316
    %v1009 = vpop.f32.mrf.mxu0
    %v1010 = vadd.f32 %v244, %v1009
    %v1011 = vpop.f32.mrf.mxu0
    %v1012 = vadd.f32 %v244, %v1011
    %1013 = vmatmul.bf16.gmra.mxu0 %v318
    %v1014 = vpop.f32.mrf.mxu0
    %v1015 = vadd.f32 %v244, %v1014
    %v1016 = vpop.f32.mrf.mxu0
    %v1017 = vadd.f32 %v244, %v1016
    %1018 = vmatmul.bf16.gmra.mxu0 %v320
    %v1019 = vpop.f32.mrf.mxu0
    %v1020 = vadd.f32 %v244, %v1019
    %v1021 = vpop.f32.mrf.mxu0
    %v1022 = vadd.f32 %v244, %v1021
    %1023 = vmatmul.bf16.gmra.mxu0 %v322
    %v1024 = vpop.f32.mrf.mxu0
    %v1025 = vadd.f32 %v244, %v1024
    %v1026 = vpop.f32.mrf.mxu0
    %v1027 = vadd.f32 %v244, %v1026
    %1028 = vdwg.mxu0
    %1029 = vmatpush.bf16.msra.mxu0 %v844
    %1030 = vmatpush.bf16.msra.mxu0 %v836
    %1031 = vmatpush.bf16.msra.mxu0 %v828
    %1032 = vmatpush.bf16.msra.mxu0 %v820
    %1033 = vmatpush.bf16.msra.mxu0 %v812
    %1034 = vmatpush.bf16.msra.mxu0 %v804
    %1035 = vmatpush.bf16.msra.mxu0 %v796
    %1036 = vmatpush.bf16.msra.mxu0 %v788
    %1037 = vmatmul.bf16.gmra.mxu0 %v309
    %v1038 = vpop.f32.mrf.mxu0
    %v1039 = vadd.f32 %v990, %v1038
    %v1040 = vpop.f32.mrf.mxu0
    %v1041 = vadd.f32 %v992, %v1040
    %1042 = vmatmul.bf16.gmra.mxu0 %v311
    %v1043 = vpop.f32.mrf.mxu0
    %v1044 = vadd.f32 %v995, %v1043
    %v1045 = vpop.f32.mrf.mxu0
    %v1046 = vadd.f32 %v997, %v1045
    %1047 = vmatmul.bf16.gmra.mxu0 %v313
    %v1048 = vpop.f32.mrf.mxu0
    %v1049 = vadd.f32 %v1000, %v1048
    %v1050 = vpop.f32.mrf.mxu0
    %v1051 = vadd.f32 %v1002, %v1050
    %1052 = vmatmul.bf16.gmra.mxu0 %v315
    %v1053 = vpop.f32.mrf.mxu0
    %v1054 = vadd.f32 %v1005, %v1053
    %v1055 = vpop.f32.mrf.mxu0
    %v1056 = vadd.f32 %v1007, %v1055
    %1057 = vmatmul.bf16.gmra.mxu0 %v317
    %v1058 = vpop.f32.mrf.mxu0
    %v1059 = vadd.f32 %v1010, %v1058
    %v1060 = vpop.f32.mrf.mxu0
    %v1061 = vadd.f32 %v1012, %v1060
    %1062 = vmatmul.bf16.gmra.mxu0 %v319
    %v1063 = vpop.f32.mrf.mxu0
    %v1064 = vadd.f32 %v1015, %v1063
    %v1065 = vpop.f32.mrf.mxu0
    %v1066 = vadd.f32 %v1017, %v1065
    %1067 = vmatmul.bf16.gmra.mxu0 %v321
    %v1068 = vpop.f32.mrf.mxu0
    %v1069 = vadd.f32 %v1020, %v1068
    %v1070 = vpop.f32.mrf.mxu0
    %v1071 = vadd.f32 %v1022, %v1070
    %1072 = vmatmul.bf16.gmra.mxu0 %v323
    %v1073 = vpop.f32.mrf.mxu0
    %v1074 = vadd.f32 %v1025, %v1073
    %v1075 = vpop.f32.mrf.mxu0
    %v1076 = vadd.f32 %v1027, %v1075
    %1077 = vdwg.mxu0
    %1078 = vmatpush.bf16.msra.mxu0 %v781
    %1079 = vmatpush.bf16.msra.mxu0 %v773
    %1080 = vmatpush.bf16.msra.mxu0 %v765
    %1081 = vmatpush.bf16.msra.mxu0 %v757
    %1082 = vmatpush.bf16.msra.mxu0 %v749
    %1083 = vmatpush.bf16.msra.mxu0 %v741
    %1084 = vmatpush.bf16.msra.mxu0 %v733
    %1085 = vmatpush.bf16.msra.mxu0 %v725
    %1086 = vmatmul.bf16.gmra.mxu0 %v308
    %v1087 = vpop.f32.mrf.mxu0
    %v1088 = vadd.f32 %v245, %v1087
    %v1089 = vpop.f32.mrf.mxu0
    %v1090 = vadd.f32 %v245, %v1089
    %1091 = vmatmul.bf16.gmra.mxu0 %v310
    %v1092 = vpop.f32.mrf.mxu0
    %v1093 = vadd.f32 %v245, %v1092
    %v1094 = vpop.f32.mrf.mxu0
    %v1095 = vadd.f32 %v245, %v1094
    %1096 = vmatmul.bf16.gmra.mxu0 %v312
    %v1097 = vpop.f32.mrf.mxu0
    %v1098 = vadd.f32 %v245, %v1097
    %v1099 = vpop.f32.mrf.mxu0
    %v1100 = vadd.f32 %v245, %v1099
    %1101 = vmatmul.bf16.gmra.mxu0 %v314
    %v1102 = vpop.f32.mrf.mxu0
    %v1103 = vadd.f32 %v245, %v1102
    %v1104 = vpop.f32.mrf.mxu0
    %v1105 = vadd.f32 %v245, %v1104
    %1106 = vmatmul.bf16.gmra.mxu0 %v316
    %v1107 = vpop.f32.mrf.mxu0
    %v1108 = vadd.f32 %v245, %v1107
    %v1109 = vpop.f32.mrf.mxu0
    %v1110 = vadd.f32 %v245, %v1109
    %1111 = vmatmul.bf16.gmra.mxu0 %v318
    %v1112 = vpop.f32.mrf.mxu0
    %v1113 = vadd.f32 %v245, %v1112
    %v1114 = vpop.f32.mrf.mxu0
    %v1115 = vadd.f32 %v245, %v1114
    %1116 = vmatmul.bf16.gmra.mxu0 %v320
    %v1117 = vpop.f32.mrf.mxu0
    %v1118 = vadd.f32 %v245, %v1117
    %v1119 = vpop.f32.mrf.mxu0
    %v1120 = vadd.f32 %v245, %v1119
    %1121 = vmatmul.bf16.gmra.mxu0 %v322
    %v1122 = vpop.f32.mrf.mxu0
    %v1123 = vadd.f32 %v245, %v1122
    %v1124 = vpop.f32.mrf.mxu0
    %v1125 = vadd.f32 %v245, %v1124
    %1126 = vdwg.mxu0
    %1127 = vmatpush.bf16.msra.mxu0 %v845
    %1128 = vmatpush.bf16.msra.mxu0 %v837
    %1129 = vmatpush.bf16.msra.mxu0 %v829
    %1130 = vmatpush.bf16.msra.mxu0 %v821
    %1131 = vmatpush.bf16.msra.mxu0 %v813
    %1132 = vmatpush.bf16.msra.mxu0 %v805
    %1133 = vmatpush.bf16.msra.mxu0 %v797
    %1134 = vmatpush.bf16.msra.mxu0 %v789
    %1135 = vmatmul.bf16.gmra.mxu0 %v309
    %v1136 = vpop.f32.mrf.mxu0
    %v1137 = vadd.f32 %v1088, %v1136
    %v1138 = vpop.f32.mrf.mxu0
    %v1139 = vadd.f32 %v1090, %v1138
    %1140 = vmatmul.bf16.gmra.mxu0 %v311
    %v1141 = vpop.f32.mrf.mxu0
    %v1142 = vadd.f32 %v1093, %v1141
    %v1143 = vpop.f32.mrf.mxu0
    %v1144 = vadd.f32 %v1095, %v1143
    %1145 = vmatmul.bf16.gmra.mxu0 %v313
    %v1146 = vpop.f32.mrf.mxu0
    %v1147 = vadd.f32 %v1098, %v1146
    %v1148 = vpop.f32.mrf.mxu0
    %v1149 = vadd.f32 %v1100, %v1148
    %1150 = vmatmul.bf16.gmra.mxu0 %v315
    %v1151 = vpop.f32.mrf.mxu0
    %v1152 = vadd.f32 %v1103, %v1151
    %v1153 = vpop.f32.mrf.mxu0
    %v1154 = vadd.f32 %v1105, %v1153
    %1155 = vmatmul.bf16.gmra.mxu0 %v317
    %v1156 = vpop.f32.mrf.mxu0
    %v1157 = vadd.f32 %v1108, %v1156
    %v1158 = vpop.f32.mrf.mxu0
    %v1159 = vadd.f32 %v1110, %v1158
    %1160 = vmatmul.bf16.gmra.mxu0 %v319
    %v1161 = vpop.f32.mrf.mxu0
    %v1162 = vadd.f32 %v1113, %v1161
    %v1163 = vpop.f32.mrf.mxu0
    %v1164 = vadd.f32 %v1115, %v1163
    %1165 = vmatmul.bf16.gmra.mxu0 %v321
    %v1166 = vpop.f32.mrf.mxu0
    %v1167 = vadd.f32 %v1118, %v1166
    %v1168 = vpop.f32.mrf.mxu0
    %v1169 = vadd.f32 %v1120, %v1168
    %1170 = vmatmul.bf16.gmra.mxu0 %v323
    %v1171 = vpop.f32.mrf.mxu0
    %v1172 = vadd.f32 %v1123, %v1171
    %v1173 = vpop.f32.mrf.mxu0
    %v1174 = vadd.f32 %v1125, %v1173
    %1175 = vdwg.mxu0
    %1176 = vmatpush.bf16.msra.mxu0 %v782
    %1177 = vmatpush.bf16.msra.mxu0 %v774
    %1178 = vmatpush.bf16.msra.mxu0 %v766
    %1179 = vmatpush.bf16.msra.mxu0 %v758
    %1180 = vmatpush.bf16.msra.mxu0 %v750
    %1181 = vmatpush.bf16.msra.mxu0 %v742
    %1182 = vmatpush.bf16.msra.mxu0 %v734
    %1183 = vmatpush.bf16.msra.mxu0 %v726
    %1184 = vmatmul.bf16.gmra.mxu0 %v308
    %v1185 = vpop.f32.mrf.mxu0
    %v1186 = vadd.f32 %v246, %v1185
    %v1187 = vpop.f32.mrf.mxu0
    %v1188 = vadd.f32 %v246, %v1187
    %1189 = vmatmul.bf16.gmra.mxu0 %v310
    %v1190 = vpop.f32.mrf.mxu0
    %v1191 = vadd.f32 %v246, %v1190
    %v1192 = vpop.f32.mrf.mxu0
    %v1193 = vadd.f32 %v246, %v1192
    %1194 = vmatmul.bf16.gmra.mxu0 %v312
    %v1195 = vpop.f32.mrf.mxu0
    %v1196 = vadd.f32 %v246, %v1195
    %v1197 = vpop.f32.mrf.mxu0
    %v1198 = vadd.f32 %v246, %v1197
    %1199 = vmatmul.bf16.gmra.mxu0 %v314
    %v1200 = vpop.f32.mrf.mxu0
    %v1201 = vadd.f32 %v246, %v1200
    %v1202 = vpop.f32.mrf.mxu0
    %v1203 = vadd.f32 %v246, %v1202
    %1204 = vmatmul.bf16.gmra.mxu0 %v316
    %v1205 = vpop.f32.mrf.mxu0
    %v1206 = vadd.f32 %v246, %v1205
    %v1207 = vpop.f32.mrf.mxu0
    %v1208 = vadd.f32 %v246, %v1207
    %1209 = vmatmul.bf16.gmra.mxu0 %v318
    %v1210 = vpop.f32.mrf.mxu0
    %v1211 = vadd.f32 %v246, %v1210
    %v1212 = vpop.f32.mrf.mxu0
    %v1213 = vadd.f32 %v246, %v1212
    %1214 = vmatmul.bf16.gmra.mxu0 %v320
    %v1215 = vpop.f32.mrf.mxu0
    %v1216 = vadd.f32 %v246, %v1215
    %v1217 = vpop.f32.mrf.mxu0
    %v1218 = vadd.f32 %v246, %v1217
    %1219 = vmatmul.bf16.gmra.mxu0 %v322
    %v1220 = vpop.f32.mrf.mxu0
    %v1221 = vadd.f32 %v246, %v1220
    %v1222 = vpop.f32.mrf.mxu0
    %v1223 = vadd.f32 %v246, %v1222
    %1224 = vdwg.mxu0
    %1225 = vmatpush.bf16.msra.mxu0 %v846
    %1226 = vmatpush.bf16.msra.mxu0 %v838
    %1227 = vmatpush.bf16.msra.mxu0 %v830
    %1228 = vmatpush.bf16.msra.mxu0 %v822
    %1229 = vmatpush.bf16.msra.mxu0 %v814
    %1230 = vmatpush.bf16.msra.mxu0 %v806
    %1231 = vmatpush.bf16.msra.mxu0 %v798
    %1232 = vmatpush.bf16.msra.mxu0 %v790
    %1233 = vmatmul.bf16.gmra.mxu0 %v309
    %v1234 = vpop.f32.mrf.mxu0
    %v1235 = vadd.f32 %v1186, %v1234
    %v1236 = vpop.f32.mrf.mxu0
    %v1237 = vadd.f32 %v1188, %v1236
    %1238 = vmatmul.bf16.gmra.mxu0 %v311
    %v1239 = vpop.f32.mrf.mxu0
    %v1240 = vadd.f32 %v1191, %v1239
    %v1241 = vpop.f32.mrf.mxu0
    %v1242 = vadd.f32 %v1193, %v1241
    %1243 = vmatmul.bf16.gmra.mxu0 %v313
    %v1244 = vpop.f32.mrf.mxu0
    %v1245 = vadd.f32 %v1196, %v1244
    %v1246 = vpop.f32.mrf.mxu0
    %v1247 = vadd.f32 %v1198, %v1246
    %1248 = vmatmul.bf16.gmra.mxu0 %v315
    %v1249 = vpop.f32.mrf.mxu0
    %v1250 = vadd.f32 %v1201, %v1249
    %v1251 = vpop.f32.mrf.mxu0
    %v1252 = vadd.f32 %v1203, %v1251
    %1253 = vmatmul.bf16.gmra.mxu0 %v317
    %v1254 = vpop.f32.mrf.mxu0
    %v1255 = vadd.f32 %v1206, %v1254
    %v1256 = vpop.f32.mrf.mxu0
    %v1257 = vadd.f32 %v1208, %v1256
    %1258 = vmatmul.bf16.gmra.mxu0 %v319
    %v1259 = vpop.f32.mrf.mxu0
    %v1260 = vadd.f32 %v1211, %v1259
    %v1261 = vpop.f32.mrf.mxu0
    %v1262 = vadd.f32 %v1213, %v1261
    %1263 = vmatmul.bf16.gmra.mxu0 %v321
    %v1264 = vpop.f32.mrf.mxu0
    %v1265 = vadd.f32 %v1216, %v1264
    %v1266 = vpop.f32.mrf.mxu0
    %v1267 = vadd.f32 %v1218, %v1266
    %1268 = vmatmul.bf16.gmra.mxu0 %v323
    %v1269 = vpop.f32.mrf.mxu0
    %v1270 = vadd.f32 %v1221, %v1269
    %v1271 = vpop.f32.mrf.mxu0
    %v1272 = vadd.f32 %v1223, %v1271
    %1273 = vdwg.mxu0
    %1274 = vmatpush.bf16.msra.mxu0 %v783
    %1275 = vmatpush.bf16.msra.mxu0 %v775
    %1276 = vmatpush.bf16.msra.mxu0 %v767
    %1277 = vmatpush.bf16.msra.mxu0 %v759
    %1278 = vmatpush.bf16.msra.mxu0 %v751
    %1279 = vmatpush.bf16.msra.mxu0 %v743
    %1280 = vmatpush.bf16.msra.mxu0 %v735
    %1281 = vmatpush.bf16.msra.mxu0 %v727
    %1282 = vmatmul.bf16.gmra.mxu0 %v308
    %v1283 = vpop.f32.mrf.mxu0
    %v1284 = vadd.f32 %v247, %v1283
    %v1285 = vpop.f32.mrf.mxu0
    %v1286 = vadd.f32 %v247, %v1285
    %1287 = vmatmul.bf16.gmra.mxu0 %v310
    %v1288 = vpop.f32.mrf.mxu0
    %v1289 = vadd.f32 %v247, %v1288
    %v1290 = vpop.f32.mrf.mxu0
    %v1291 = vadd.f32 %v247, %v1290
    %1292 = vmatmul.bf16.gmra.mxu0 %v312
    %v1293 = vpop.f32.mrf.mxu0
    %v1294 = vadd.f32 %v247, %v1293
    %v1295 = vpop.f32.mrf.mxu0
    %v1296 = vadd.f32 %v247, %v1295
    %1297 = vmatmul.bf16.gmra.mxu0 %v314
    %v1298 = vpop.f32.mrf.mxu0
    %v1299 = vadd.f32 %v247, %v1298
    %v1300 = vpop.f32.mrf.mxu0
    %v1301 = vadd.f32 %v247, %v1300
    %1302 = vmatmul.bf16.gmra.mxu0 %v316
    %v1303 = vpop.f32.mrf.mxu0
    %v1304 = vadd.f32 %v247, %v1303
    %v1305 = vpop.f32.mrf.mxu0
    %v1306 = vadd.f32 %v247, %v1305
    %1307 = vmatmul.bf16.gmra.mxu0 %v318
    %v1308 = vpop.f32.mrf.mxu0
    %v1309 = vadd.f32 %v247, %v1308
    %v1310 = vpop.f32.mrf.mxu0
    %v1311 = vadd.f32 %v247, %v1310
    %1312 = vmatmul.bf16.gmra.mxu0 %v320
    %v1313 = vpop.f32.mrf.mxu0
    %v1314 = vadd.f32 %v247, %v1313
    %v1315 = vpop.f32.mrf.mxu0
    %v1316 = vadd.f32 %v247, %v1315
    %1317 = vmatmul.bf16.gmra.mxu0 %v322
    %v1318 = vpop.f32.mrf.mxu0
    %v1319 = vadd.f32 %v247, %v1318
    %v1320 = vpop.f32.mrf.mxu0
    %v1321 = vadd.f32 %v247, %v1320
    %1322 = vdwg.mxu0
    %1323 = vmatpush.bf16.msra.mxu0 %v847
    %1324 = vmatpush.bf16.msra.mxu0 %v839
    %1325 = vmatpush.bf16.msra.mxu0 %v831
    %1326 = vmatpush.bf16.msra.mxu0 %v823
    %1327 = vmatpush.bf16.msra.mxu0 %v815
    %1328 = vmatpush.bf16.msra.mxu0 %v807
    %1329 = vmatpush.bf16.msra.mxu0 %v799
    %1330 = vmatpush.bf16.msra.mxu0 %v791
    %1331 = vmatmul.bf16.gmra.mxu0 %v309
    %v1332 = vpop.f32.mrf.mxu0
    %v1333 = vadd.f32 %v1284, %v1332
    %v1334 = vpop.f32.mrf.mxu0
    %v1335 = vadd.f32 %v1286, %v1334
    %1336 = vmatmul.bf16.gmra.mxu0 %v311
    %v1337 = vpop.f32.mrf.mxu0
    %v1338 = vadd.f32 %v1289, %v1337
    %v1339 = vpop.f32.mrf.mxu0
    %v1340 = vadd.f32 %v1291, %v1339
    %1341 = vmatmul.bf16.gmra.mxu0 %v313
    %v1342 = vpop.f32.mrf.mxu0
    %v1343 = vadd.f32 %v1294, %v1342
    %v1344 = vpop.f32.mrf.mxu0
    %v1345 = vadd.f32 %v1296, %v1344
    %1346 = vmatmul.bf16.gmra.mxu0 %v315
    %v1347 = vpop.f32.mrf.mxu0
    %v1348 = vadd.f32 %v1299, %v1347
    %v1349 = vpop.f32.mrf.mxu0
    %v1350 = vadd.f32 %v1301, %v1349
    %1351 = vmatmul.bf16.gmra.mxu0 %v317
    %v1352 = vpop.f32.mrf.mxu0
    %v1353 = vadd.f32 %v1304, %v1352
    %v1354 = vpop.f32.mrf.mxu0
    %v1355 = vadd.f32 %v1306, %v1354
    %1356 = vmatmul.bf16.gmra.mxu0 %v319
    %v1357 = vpop.f32.mrf.mxu0
    %v1358 = vadd.f32 %v1309, %v1357
    %v1359 = vpop.f32.mrf.mxu0
    %v1360 = vadd.f32 %v1311, %v1359
    %1361 = vmatmul.bf16.gmra.mxu0 %v321
    %v1362 = vpop.f32.mrf.mxu0
    %v1363 = vadd.f32 %v1314, %v1362
    %v1364 = vpop.f32.mrf.mxu0
    %v1365 = vadd.f32 %v1316, %v1364
    %1366 = vmatmul.bf16.gmra.mxu0 %v323
    %v1367 = vpop.f32.mrf.mxu0
    %v1368 = vadd.f32 %v1319, %v1367
    %v1369 = vpop.f32.mrf.mxu0
    %v1370 = vadd.f32 %v1321, %v1369
    %1371 = vdwg.mxu0
    %1372 = vmatpush.bf16.msra.mxu0 %v784
    %1373 = vmatpush.bf16.msra.mxu0 %v776
    %1374 = vmatpush.bf16.msra.mxu0 %v768
    %1375 = vmatpush.bf16.msra.mxu0 %v760
    %1376 = vmatpush.bf16.msra.mxu0 %v752
    %1377 = vmatpush.bf16.msra.mxu0 %v744
    %1378 = vmatpush.bf16.msra.mxu0 %v736
    %1379 = vmatpush.bf16.msra.mxu0 %v728
    %1380 = vmatmul.bf16.gmra.mxu0 %v308
    %v1381 = vpop.f32.mrf.mxu0
    %v1382 = vadd.f32 %v248, %v1381
    %v1383 = vpop.f32.mrf.mxu0
    %v1384 = vadd.f32 %v248, %v1383
    %1385 = vmatmul.bf16.gmra.mxu0 %v310
    %v1386 = vpop.f32.mrf.mxu0
    %v1387 = vadd.f32 %v248, %v1386
    %v1388 = vpop.f32.mrf.mxu0
    %v1389 = vadd.f32 %v248, %v1388
    %1390 = vmatmul.bf16.gmra.mxu0 %v312
    %v1391 = vpop.f32.mrf.mxu0
    %v1392 = vadd.f32 %v248, %v1391
    %v1393 = vpop.f32.mrf.mxu0
    %v1394 = vadd.f32 %v248, %v1393
    %1395 = vmatmul.bf16.gmra.mxu0 %v314
    %v1396 = vpop.f32.mrf.mxu0
    %v1397 = vadd.f32 %v248, %v1396
    %v1398 = vpop.f32.mrf.mxu0
    %v1399 = vadd.f32 %v248, %v1398
    %1400 = vmatmul.bf16.gmra.mxu0 %v316
    %v1401 = vpop.f32.mrf.mxu0
    %v1402 = vadd.f32 %v248, %v1401
    %v1403 = vpop.f32.mrf.mxu0
    %v1404 = vadd.f32 %v248, %v1403
    %1405 = vmatmul.bf16.gmra.mxu0 %v318
    %v1406 = vpop.f32.mrf.mxu0
    %v1407 = vadd.f32 %v248, %v1406
    %v1408 = vpop.f32.mrf.mxu0
    %v1409 = vadd.f32 %v248, %v1408
    %1410 = vmatmul.bf16.gmra.mxu0 %v320
    %v1411 = vpop.f32.mrf.mxu0
    %v1412 = vadd.f32 %v248, %v1411
    %v1413 = vpop.f32.mrf.mxu0
    %v1414 = vadd.f32 %v248, %v1413
    %1415 = vmatmul.bf16.gmra.mxu0 %v322
    %v1416 = vpop.f32.mrf.mxu0
    %v1417 = vadd.f32 %v248, %v1416
    %v1418 = vpop.f32.mrf.mxu0
    %v1419 = vadd.f32 %v248, %v1418
    %1420 = vdwg.mxu0
    %1421 = vmatpush.bf16.msra.mxu0 %v848
    %1422 = vmatpush.bf16.msra.mxu0 %v840
    %1423 = vmatpush.bf16.msra.mxu0 %v832
    %1424 = vmatpush.bf16.msra.mxu0 %v824
    %1425 = vmatpush.bf16.msra.mxu0 %v816
    %1426 = vmatpush.bf16.msra.mxu0 %v808
    %1427 = vmatpush.bf16.msra.mxu0 %v800
    %1428 = vmatpush.bf16.msra.mxu0 %v792
    %1429 = vmatmul.bf16.gmra.mxu0 %v309
    %v1430 = vpop.f32.mrf.mxu0
    %v1431 = vadd.f32 %v1382, %v1430
    %v1432 = vpop.f32.mrf.mxu0
    %v1433 = vadd.f32 %v1384, %v1432
    %1434 = vmatmul.bf16.gmra.mxu0 %v311
    %v1435 = vpop.f32.mrf.mxu0
    %v1436 = vadd.f32 %v1387, %v1435
    %v1437 = vpop.f32.mrf.mxu0
    %v1438 = vadd.f32 %v1389, %v1437
    %1439 = vmatmul.bf16.gmra.mxu0 %v313
    %v1440 = vpop.f32.mrf.mxu0
    %v1441 = vadd.f32 %v1392, %v1440
    %v1442 = vpop.f32.mrf.mxu0
    %v1443 = vadd.f32 %v1394, %v1442
    %1444 = vmatmul.bf16.gmra.mxu0 %v315
    %v1445 = vpop.f32.mrf.mxu0
    %v1446 = vadd.f32 %v1397, %v1445
    %v1447 = vpop.f32.mrf.mxu0
    %v1448 = vadd.f32 %v1399, %v1447
    %1449 = vmatmul.bf16.gmra.mxu0 %v317
    %v1450 = vpop.f32.mrf.mxu0
    %v1451 = vadd.f32 %v1402, %v1450
    %v1452 = vpop.f32.mrf.mxu0
    %v1453 = vadd.f32 %v1404, %v1452
    %1454 = vmatmul.bf16.gmra.mxu0 %v319
    %v1455 = vpop.f32.mrf.mxu0
    %v1456 = vadd.f32 %v1407, %v1455
    %v1457 = vpop.f32.mrf.mxu0
    %v1458 = vadd.f32 %v1409, %v1457
    %1459 = vmatmul.bf16.gmra.mxu0 %v321
    %v1460 = vpop.f32.mrf.mxu0
    %v1461 = vadd.f32 %v1412, %v1460
    %v1462 = vpop.f32.mrf.mxu0
    %v1463 = vadd.f32 %v1414, %v1462
    %1464 = vmatmul.bf16.gmra.mxu0 %v323
    %v1465 = vpop.f32.mrf.mxu0
    %v1466 = vadd.f32 %v1417, %v1465
    %v1467 = vpop.f32.mrf.mxu0
    %v1468 = vadd.f32 %v1419, %v1467
    %1469 = vdwg.mxu0
    %1470 = vmatpush.bf16.msra.mxu0 %v785
    %1471 = vmatpush.bf16.msra.mxu0 %v777
    %1472 = vmatpush.bf16.msra.mxu0 %v769
    %1473 = vmatpush.bf16.msra.mxu0 %v761
    %1474 = vmatpush.bf16.msra.mxu0 %v753
    %1475 = vmatpush.bf16.msra.mxu0 %v745
    %1476 = vmatpush.bf16.msra.mxu0 %v737
    %1477 = vmatpush.bf16.msra.mxu0 %v729
    %1478 = vmatmul.bf16.gmra.mxu0 %v308
    %v1479 = vpop.f32.mrf.mxu0
    %v1480 = vadd.f32 %v249, %v1479
    %v1481 = vpop.f32.mrf.mxu0
    %v1482 = vadd.f32 %v249, %v1481
    %1483 = vmatmul.bf16.gmra.mxu0 %v310
    %v1484 = vpop.f32.mrf.mxu0
    %v1485 = vadd.f32 %v249, %v1484
    %v1486 = vpop.f32.mrf.mxu0
    %v1487 = vadd.f32 %v249, %v1486
    %1488 = vmatmul.bf16.gmra.mxu0 %v312
    %v1489 = vpop.f32.mrf.mxu0
    %v1490 = vadd.f32 %v249, %v1489
    %v1491 = vpop.f32.mrf.mxu0
    %v1492 = vadd.f32 %v249, %v1491
    %1493 = vmatmul.bf16.gmra.mxu0 %v314
    %v1494 = vpop.f32.mrf.mxu0
    %v1495 = vadd.f32 %v249, %v1494
    %v1496 = vpop.f32.mrf.mxu0
    %v1497 = vadd.f32 %v249, %v1496
    %1498 = vmatmul.bf16.gmra.mxu0 %v316
    %v1499 = vpop.f32.mrf.mxu0
    %v1500 = vadd.f32 %v249, %v1499
    %v1501 = vpop.f32.mrf.mxu0
    %v1502 = vadd.f32 %v249, %v1501
    %1503 = vmatmul.bf16.gmra.mxu0 %v318
    %v1504 = vpop.f32.mrf.mxu0
    %v1505 = vadd.f32 %v249, %v1504
    %v1506 = vpop.f32.mrf.mxu0
    %v1507 = vadd.f32 %v249, %v1506
    %1508 = vmatmul.bf16.gmra.mxu0 %v320
    %v1509 = vpop.f32.mrf.mxu0
    %v1510 = vadd.f32 %v249, %v1509
    %v1511 = vpop.f32.mrf.mxu0
    %v1512 = vadd.f32 %v249, %v1511
    %1513 = vmatmul.bf16.gmra.mxu0 %v322
    %v1514 = vpop.f32.mrf.mxu0
    %v1515 = vadd.f32 %v249, %v1514
    %v1516 = vpop.f32.mrf.mxu0
    %v1517 = vadd.f32 %v249, %v1516
    %1518 = vdwg.mxu0
    %1519 = vmatpush.bf16.msra.mxu0 %v849
    %1520 = vmatpush.bf16.msra.mxu0 %v841
    %1521 = vmatpush.bf16.msra.mxu0 %v833
    %1522 = vmatpush.bf16.msra.mxu0 %v825
    %1523 = vmatpush.bf16.msra.mxu0 %v817
    %1524 = vmatpush.bf16.msra.mxu0 %v809
    %1525 = vmatpush.bf16.msra.mxu0 %v801
    %1526 = vmatpush.bf16.msra.mxu0 %v793
    %1527 = vmatmul.bf16.gmra.mxu0 %v309
    %v1528 = vpop.f32.mrf.mxu0
    %v1529 = vadd.f32 %v1480, %v1528
    %v1530 = vpop.f32.mrf.mxu0
    %v1531 = vadd.f32 %v1482, %v1530
    %1532 = vmatmul.bf16.gmra.mxu0 %v311
    %v1533 = vpop.f32.mrf.mxu0
    %v1534 = vadd.f32 %v1485, %v1533
    %v1535 = vpop.f32.mrf.mxu0
    %v1536 = vadd.f32 %v1487, %v1535
    %1537 = vmatmul.bf16.gmra.mxu0 %v313
    %v1538 = vpop.f32.mrf.mxu0
    %v1539 = vadd.f32 %v1490, %v1538
    %v1540 = vpop.f32.mrf.mxu0
    %v1541 = vadd.f32 %v1492, %v1540
    %1542 = vmatmul.bf16.gmra.mxu0 %v315
    %v1543 = vpop.f32.mrf.mxu0
    %v1544 = vadd.f32 %v1495, %v1543
    %v1545 = vpop.f32.mrf.mxu0
    %v1546 = vadd.f32 %v1497, %v1545
    %1547 = vmatmul.bf16.gmra.mxu0 %v317
    %v1548 = vpop.f32.mrf.mxu0
    %v1549 = vadd.f32 %v1500, %v1548
    %v1550 = vpop.f32.mrf.mxu0
    %v1551 = vadd.f32 %v1502, %v1550
    %1552 = vmatmul.bf16.gmra.mxu0 %v319
    %v1553 = vpop.f32.mrf.mxu0
    %v1554 = vadd.f32 %v1505, %v1553
    %v1555 = vpop.f32.mrf.mxu0
    %v1556 = vadd.f32 %v1507, %v1555
    %1557 = vmatmul.bf16.gmra.mxu0 %v321
    %v1558 = vpop.f32.mrf.mxu0
    %v1559 = vadd.f32 %v1510, %v1558
    %v1560 = vpop.f32.mrf.mxu0
    %v1561 = vadd.f32 %v1512, %v1560
    %1562 = vmatmul.bf16.gmra.mxu0 %v323
    %v1563 = vpop.f32.mrf.mxu0
    %v1564 = vadd.f32 %v1515, %v1563
    %v1565 = vpop.f32.mrf.mxu0
    %v1566 = vadd.f32 %v1517, %v1565
    %1567 = vdwg.mxu0
    %1568 = vmatpush.bf16.msra.mxu0 %v786
    %1569 = vmatpush.bf16.msra.mxu0 %v778
    %1570 = vmatpush.bf16.msra.mxu0 %v770
    %1571 = vmatpush.bf16.msra.mxu0 %v762
    %1572 = vmatpush.bf16.msra.mxu0 %v754
    %1573 = vmatpush.bf16.msra.mxu0 %v746
    %1574 = vmatpush.bf16.msra.mxu0 %v738
    %1575 = vmatpush.bf16.msra.mxu0 %v730
    %1576 = vmatmul.bf16.gmra.mxu0 %v308
    %v1577 = vpop.f32.mrf.mxu0
    %v1578 = vadd.f32 %v250, %v1577
    %v1579 = vpop.f32.mrf.mxu0
    %v1580 = vadd.f32 %v250, %v1579
    %1581 = vmatmul.bf16.gmra.mxu0 %v310
    %v1582 = vpop.f32.mrf.mxu0
    %v1583 = vadd.f32 %v250, %v1582
    %v1584 = vpop.f32.mrf.mxu0
    %v1585 = vadd.f32 %v250, %v1584
    %1586 = vmatmul.bf16.gmra.mxu0 %v312
    %v1587 = vpop.f32.mrf.mxu0
    %v1588 = vadd.f32 %v250, %v1587
    %v1589 = vpop.f32.mrf.mxu0
    %v1590 = vadd.f32 %v250, %v1589
    %1591 = vmatmul.bf16.gmra.mxu0 %v314
    %v1592 = vpop.f32.mrf.mxu0
    %v1593 = vadd.f32 %v250, %v1592
    %v1594 = vpop.f32.mrf.mxu0
    %v1595 = vadd.f32 %v250, %v1594
    %1596 = vmatmul.bf16.gmra.mxu0 %v316
    %v1597 = vpop.f32.mrf.mxu0
    %v1598 = vadd.f32 %v250, %v1597
    %v1599 = vpop.f32.mrf.mxu0
    %v1600 = vadd.f32 %v250, %v1599
    %1601 = vmatmul.bf16.gmra.mxu0 %v318
    %v1602 = vpop.f32.mrf.mxu0
    %v1603 = vadd.f32 %v250, %v1602
    %v1604 = vpop.f32.mrf.mxu0
    %v1605 = vadd.f32 %v250, %v1604
    %1606 = vmatmul.bf16.gmra.mxu0 %v320
    %v1607 = vpop.f32.mrf.mxu0
    %v1608 = vadd.f32 %v250, %v1607
    %v1609 = vpop.f32.mrf.mxu0
    %v1610 = vadd.f32 %v250, %v1609
    %1611 = vmatmul.bf16.gmra.mxu0 %v322
    %v1612 = vpop.f32.mrf.mxu0
    %v1613 = vadd.f32 %v250, %v1612
    %v1614 = vpop.f32.mrf.mxu0
    %v1615 = vadd.f32 %v250, %v1614
    %1616 = vdwg.mxu0
    %1617 = vmatpush.bf16.msra.mxu0 %v850
    %1618 = vmatpush.bf16.msra.mxu0 %v842
    %1619 = vmatpush.bf16.msra.mxu0 %v834
    %1620 = vmatpush.bf16.msra.mxu0 %v826
    %1621 = vmatpush.bf16.msra.mxu0 %v818
    %1622 = vmatpush.bf16.msra.mxu0 %v810
    %1623 = vmatpush.bf16.msra.mxu0 %v802
    %1624 = vmatpush.bf16.msra.mxu0 %v794
    %1625 = vmatmul.bf16.gmra.mxu0 %v309
    %v1626 = vpop.f32.mrf.mxu0
    %v1627 = vadd.f32 %v1578, %v1626
    %v1628 = vpop.f32.mrf.mxu0
    %v1629 = vadd.f32 %v1580, %v1628
    %1630 = vmatmul.bf16.gmra.mxu0 %v311
    %v1631 = vpop.f32.mrf.mxu0
    %v1632 = vadd.f32 %v1583, %v1631
    %v1633 = vpop.f32.mrf.mxu0
    %v1634 = vadd.f32 %v1585, %v1633
    %1635 = vmatmul.bf16.gmra.mxu0 %v313
    %v1636 = vpop.f32.mrf.mxu0
    %v1637 = vadd.f32 %v1588, %v1636
    %v1638 = vpop.f32.mrf.mxu0
    %v1639 = vadd.f32 %v1590, %v1638
    %1640 = vmatmul.bf16.gmra.mxu0 %v315
    %v1641 = vpop.f32.mrf.mxu0
    %v1642 = vadd.f32 %v1593, %v1641
    %v1643 = vpop.f32.mrf.mxu0
    %v1644 = vadd.f32 %v1595, %v1643
    %1645 = vmatmul.bf16.gmra.mxu0 %v317
    %v1646 = vpop.f32.mrf.mxu0
    %v1647 = vadd.f32 %v1598, %v1646
    %v1648 = vpop.f32.mrf.mxu0
    %v1649 = vadd.f32 %v1600, %v1648
    %1650 = vmatmul.bf16.gmra.mxu0 %v319
    %v1651 = vpop.f32.mrf.mxu0
    %v1652 = vadd.f32 %v1603, %v1651
    %v1653 = vpop.f32.mrf.mxu0
    %v1654 = vadd.f32 %v1605, %v1653
    %1655 = vmatmul.bf16.gmra.mxu0 %v321
    %v1656 = vpop.f32.mrf.mxu0
    %v1657 = vadd.f32 %v1608, %v1656
    %v1658 = vpop.f32.mrf.mxu0
    %v1659 = vadd.f32 %v1610, %v1658
    %1660 = vmatmul.bf16.gmra.mxu0 %v323
    %v1661 = vpop.f32.mrf.mxu0
    %v1662 = vadd.f32 %v1613, %v1661
    %v1663 = vpop.f32.mrf.mxu0
    %v1664 = vadd.f32 %v1615, %v1663
    %1665 = vdwg.mxu0
    %1666 = vmatpush.bf16.msra.mxu0 %v787
    %1667 = vmatpush.bf16.msra.mxu0 %v779
    %1668 = vmatpush.bf16.msra.mxu0 %v771
    %1669 = vmatpush.bf16.msra.mxu0 %v763
    %1670 = vmatpush.bf16.msra.mxu0 %v755
    %1671 = vmatpush.bf16.msra.mxu0 %v747
    %1672 = vmatpush.bf16.msra.mxu0 %v739
    %1673 = vmatpush.bf16.msra.mxu0 %v731
    %1674 = vmatmul.bf16.gmra.mxu0 %v308
    %v1675 = vpop.f32.mrf.mxu0
    %v1676 = vadd.f32 %v251, %v1675
    %v1677 = vpop.f32.mrf.mxu0
    %v1678 = vadd.f32 %v251, %v1677
    %1679 = vmatmul.bf16.gmra.mxu0 %v310
    %v1680 = vpop.f32.mrf.mxu0
    %v1681 = vadd.f32 %v251, %v1680
    %v1682 = vpop.f32.mrf.mxu0
    %v1683 = vadd.f32 %v251, %v1682
    %1684 = vmatmul.bf16.gmra.mxu0 %v312
    %v1685 = vpop.f32.mrf.mxu0
    %v1686 = vadd.f32 %v251, %v1685
    %v1687 = vpop.f32.mrf.mxu0
    %v1688 = vadd.f32 %v251, %v1687
    %1689 = vmatmul.bf16.gmra.mxu0 %v314
    %v1690 = vpop.f32.mrf.mxu0
    %v1691 = vadd.f32 %v251, %v1690
    %v1692 = vpop.f32.mrf.mxu0
    %v1693 = vadd.f32 %v251, %v1692
    %1694 = vmatmul.bf16.gmra.mxu0 %v316
    %v1695 = vpop.f32.mrf.mxu0
    %v1696 = vadd.f32 %v251, %v1695
    %v1697 = vpop.f32.mrf.mxu0
    %v1698 = vadd.f32 %v251, %v1697
    %1699 = vmatmul.bf16.gmra.mxu0 %v318
    %v1700 = vpop.f32.mrf.mxu0
    %v1701 = vadd.f32 %v251, %v1700
    %v1702 = vpop.f32.mrf.mxu0
    %v1703 = vadd.f32 %v251, %v1702
    %1704 = vmatmul.bf16.gmra.mxu0 %v320
    %v1705 = vpop.f32.mrf.mxu0
    %v1706 = vadd.f32 %v251, %v1705
    %v1707 = vpop.f32.mrf.mxu0
    %v1708 = vadd.f32 %v251, %v1707
    %1709 = vmatmul.bf16.gmra.mxu0 %v322
    %v1710 = vpop.f32.mrf.mxu0
    %v1711 = vadd.f32 %v251, %v1710
    %v1712 = vpop.f32.mrf.mxu0
    %v1713 = vadd.f32 %v251, %v1712
    %1714 = vdwg.mxu0
    %1715 = vmatpush.bf16.msra.mxu0 %v851
    %1716 = vmatpush.bf16.msra.mxu0 %v843
    %1717 = vmatpush.bf16.msra.mxu0 %v835
    %1718 = vmatpush.bf16.msra.mxu0 %v827
    %1719 = vmatpush.bf16.msra.mxu0 %v819
    %1720 = vmatpush.bf16.msra.mxu0 %v811
    %1721 = vmatpush.bf16.msra.mxu0 %v803
    %1722 = vmatpush.bf16.msra.mxu0 %v795
    %1723 = vmatmul.bf16.gmra.mxu0 %v309
    %v1724 = vpop.f32.mrf.mxu0
    %v1725 = vadd.f32 %v1676, %v1724
    %v1726 = vpop.f32.mrf.mxu0
    %v1727 = vadd.f32 %v1678, %v1726
    %1728 = vmatmul.bf16.gmra.mxu0 %v311
    %v1729 = vpop.f32.mrf.mxu0
    %v1730 = vadd.f32 %v1681, %v1729
    %v1731 = vpop.f32.mrf.mxu0
    %v1732 = vadd.f32 %v1683, %v1731
    %1733 = vmatmul.bf16.gmra.mxu0 %v313
    %v1734 = vpop.f32.mrf.mxu0
    %v1735 = vadd.f32 %v1686, %v1734
    %v1736 = vpop.f32.mrf.mxu0
    %v1737 = vadd.f32 %v1688, %v1736
    %1738 = vmatmul.bf16.gmra.mxu0 %v315
    %v1739 = vpop.f32.mrf.mxu0
    %v1740 = vadd.f32 %v1691, %v1739
    %v1741 = vpop.f32.mrf.mxu0
    %v1742 = vadd.f32 %v1693, %v1741
    %1743 = vmatmul.bf16.gmra.mxu0 %v317
    %v1744 = vpop.f32.mrf.mxu0
    %v1745 = vadd.f32 %v1696, %v1744
    %v1746 = vpop.f32.mrf.mxu0
    %v1747 = vadd.f32 %v1698, %v1746
    %1748 = vmatmul.bf16.gmra.mxu0 %v319
    %v1749 = vpop.f32.mrf.mxu0
    %v1750 = vadd.f32 %v1701, %v1749
    %v1751 = vpop.f32.mrf.mxu0
    %v1752 = vadd.f32 %v1703, %v1751
    %1753 = vmatmul.bf16.gmra.mxu0 %v321
    %v1754 = vpop.f32.mrf.mxu0
    %v1755 = vadd.f32 %v1706, %v1754
    %v1756 = vpop.f32.mrf.mxu0
    %v1757 = vadd.f32 %v1708, %v1756
    %1758 = vmatmul.bf16.gmra.mxu0 %v323
    %v1759 = vpop.f32.mrf.mxu0
    %v1760 = vadd.f32 %v1711, %v1759
    %v1761 = vpop.f32.mrf.mxu0
    %v1762 = vadd.f32 %v1713, %v1761
    %1763 = vdwg.mxu0
    %1764 = vst [vmem:[#allocation2] sm:$0xff] %v1039
    %1765 = vst [vmem:[#allocation2 + $0x8] sm:$0xff] %v1137
    %1766 = vst [vmem:[#allocation2 + $0x10] sm:$0xff] %v1235
    %1767 = vst [vmem:[#allocation2 + $0x18] sm:$0xff] %v1333
    %1768 = vst [vmem:[#allocation2 + $0x20] sm:$0xff] %v1041
    %1769 = vst [vmem:[#allocation2 + $0x28] sm:$0xff] %v1139
    %1770 = vst [vmem:[#allocation2 + $0x30] sm:$0xff] %v1237
    %1771 = vst [vmem:[#allocation2 + $0x38] sm:$0xff] %v1335
    %1772 = vst [vmem:[#allocation2 + $0x40] sm:$0xff] %v1044
    %1773 = vst [vmem:[#allocation2 + $0x48] sm:$0xff] %v1142
    %1774 = vst [vmem:[#allocation2 + $0x50] sm:$0xff] %v1240
    %1775 = vst [vmem:[#allocation2 + $0x58] sm:$0xff] %v1338
    %1776 = vst [vmem:[#allocation2 + $0x60] sm:$0xff] %v1046
    %1777 = vst [vmem:[#allocation2 + $0x68] sm:$0xff] %v1144
    %1778 = vst [vmem:[#allocation2 + $0x70] sm:$0xff] %v1242
    %1779 = vst [vmem:[#allocation2 + $0x78] sm:$0xff] %v1340
    %1780 = vst [vmem:[#allocation2 + $0x80] sm:$0xff] %v1049
    %1781 = vst [vmem:[#allocation2 + $0x88] sm:$0xff] %v1147
    %1782 = vst [vmem:[#allocation2 + $0x90] sm:$0xff] %v1245
    %1783 = vst [vmem:[#allocation2 + $0x98] sm:$0xff] %v1343
    %1784 = vst [vmem:[#allocation2 + $0xa0] sm:$0xff] %v1051
    %1785 = vst [vmem:[#allocation2 + $0xa8] sm:$0xff] %v1149
    %1786 = vst [vmem:[#allocation2 + $0xb0] sm:$0xff] %v1247
    %1787 = vst [vmem:[#allocation2 + $0xb8] sm:$0xff] %v1345
    %1788 = vst [vmem:[#allocation2 + $0xc0] sm:$0xff] %v1054
    %1789 = vst [vmem:[#allocation2 + $0xc8] sm:$0xff] %v1152
    %1790 = vst [vmem:[#allocation2 + $0xd0] sm:$0xff] %v1250
    %1791 = vst [vmem:[#allocation2 + $0xd8] sm:$0xff] %v1348
    %1792 = vst [vmem:[#allocation2 + $0xe0] sm:$0xff] %v1056
    %1793 = vst [vmem:[#allocation2 + $0xe8] sm:$0xff] %v1154
    %1794 = vst [vmem:[#allocation2 + $0xf0] sm:$0xff] %v1252
    %1795 = vst [vmem:[#allocation2 + $0xf8] sm:$0xff] %v1350
    %1796 = vst [vmem:[#allocation2 + $0x100] sm:$0xff] %v1059
    %1797 = vst [vmem:[#allocation2 + $0x108] sm:$0xff] %v1157
    %1798 = vst [vmem:[#allocation2 + $0x110] sm:$0xff] %v1255
    %1799 = vst [vmem:[#allocation2 + $0x118] sm:$0xff] %v1353
    %1800 = vst [vmem:[#allocation2 + $0x120] sm:$0xff] %v1061
    %1801 = vst [vmem:[#allocation2 + $0x128] sm:$0xff] %v1159
    %1802 = vst [vmem:[#allocation2 + $0x130] sm:$0xff] %v1257
    %1803 = vst [vmem:[#allocation2 + $0x138] sm:$0xff] %v1355
    %1804 = vst [vmem:[#allocation2 + $0x140] sm:$0xff] %v1064
    %1805 = vst [vmem:[#allocation2 + $0x148] sm:$0xff] %v1162
    %1806 = vst [vmem:[#allocation2 + $0x150] sm:$0xff] %v1260
    %1807 = vst [vmem:[#allocation2 + $0x158] sm:$0xff] %v1358
    %1808 = vst [vmem:[#allocation2 + $0x160] sm:$0xff] %v1066
    %1809 = vst [vmem:[#allocation2 + $0x168] sm:$0xff] %v1164
    %1810 = vst [vmem:[#allocation2 + $0x170] sm:$0xff] %v1262
    %1811 = vst [vmem:[#allocation2 + $0x178] sm:$0xff] %v1360
    %1812 = vst [vmem:[#allocation2 + $0x180] sm:$0xff] %v1069
    %1813 = vst [vmem:[#allocation2 + $0x188] sm:$0xff] %v1167
    %1814 = vst [vmem:[#allocation2 + $0x190] sm:$0xff] %v1265
    %1815 = vst [vmem:[#allocation2 + $0x198] sm:$0xff] %v1363
    %1816 = vst [vmem:[#allocation2 + $0x1a0] sm:$0xff] %v1071
    %1817 = vst [vmem:[#allocation2 + $0x1a8] sm:$0xff] %v1169
    %1818 = vst [vmem:[#allocation2 + $0x1b0] sm:$0xff] %v1267
    %1819 = vst [vmem:[#allocation2 + $0x1b8] sm:$0xff] %v1365
    %1820 = vst [vmem:[#allocation2 + $0x1c0] sm:$0xff] %v1074
    %1821 = vst [vmem:[#allocation2 + $0x1c8] sm:$0xff] %v1172
    %1822 = vst [vmem:[#allocation2 + $0x1d0] sm:$0xff] %v1270
    %1823 = vst [vmem:[#allocation2 + $0x1d8] sm:$0xff] %v1368
    %1824 = vst [vmem:[#allocation2 + $0x1e0] sm:$0xff] %v1076
    %1825 = vst [vmem:[#allocation2 + $0x1e8] sm:$0xff] %v1174
    %1826 = vst [vmem:[#allocation2 + $0x1f0] sm:$0xff] %v1272
    %1827 = vst [vmem:[#allocation2 + $0x1f8] sm:$0xff] %v1370
    %1828 = vst [vmem:[#allocation3] sm:$0xff] %v1431
    %1829 = vst [vmem:[#allocation3 + $0x8] sm:$0xff] %v1529
    %1830 = vst [vmem:[#allocation3 + $0x10] sm:$0xff] %v1627
    %1831 = vst [vmem:[#allocation3 + $0x18] sm:$0xff] %v1725
    %1832 = vst [vmem:[#allocation3 + $0x20] sm:$0xff] %v1433
    %1833 = vst [vmem:[#allocation3 + $0x28] sm:$0xff] %v1531
    %1834 = vst [vmem:[#allocation3 + $0x30] sm:$0xff] %v1629
    %1835 = vst [vmem:[#allocation3 + $0x38] sm:$0xff] %v1727
    %1836 = vst [vmem:[#allocation3 + $0x40] sm:$0xff] %v1436
    %1837 = vst [vmem:[#allocation3 + $0x48] sm:$0xff] %v1534
    %1838 = vst [vmem:[#allocation3 + $0x50] sm:$0xff] %v1632
    %1839 = vst [vmem:[#allocation3 + $0x58] sm:$0xff] %v1730
    %1840 = vst [vmem:[#allocation3 + $0x60] sm:$0xff] %v1438
    %1841 = vst [vmem:[#allocation3 + $0x68] sm:$0xff] %v1536
    %1842 = vst [vmem:[#allocation3 + $0x70] sm:$0xff] %v1634
    %1843 = vst [vmem:[#allocation3 + $0x78] sm:$0xff] %v1732
    %1844 = vst [vmem:[#allocation3 + $0x80] sm:$0xff] %v1441
    %1845 = vst [vmem:[#allocation3 + $0x88] sm:$0xff] %v1539
    %1846 = vst [vmem:[#allocation3 + $0x90] sm:$0xff] %v1637
    %1847 = vst [vmem:[#allocation3 + $0x98] sm:$0xff] %v1735
    %1848 = vst [vmem:[#allocation3 + $0xa0] sm:$0xff] %v1443
    %1849 = vst [vmem:[#allocation3 + $0xa8] sm:$0xff] %v1541
    %1850 = vst [vmem:[#allocation3 + $0xb0] sm:$0xff] %v1639
    %1851 = vst [vmem:[#allocation3 + $0xb8] sm:$0xff] %v1737
    %1852 = vst [vmem:[#allocation3 + $0xc0] sm:$0xff] %v1446
    %1853 = vst [vmem:[#allocation3 + $0xc8] sm:$0xff] %v1544
    %1854 = vst [vmem:[#allocation3 + $0xd0] sm:$0xff] %v1642
    %1855 = vst [vmem:[#allocation3 + $0xd8] sm:$0xff] %v1740
    %1856 = vst [vmem:[#allocation3 + $0xe0] sm:$0xff] %v1448
    %1857 = vst [vmem:[#allocation3 + $0xe8] sm:$0xff] %v1546
    %1858 = vst [vmem:[#allocation3 + $0xf0] sm:$0xff] %v1644
    %1859 = vst [vmem:[#allocation3 + $0xf8] sm:$0xff] %v1742
    %1860 = vst [vmem:[#allocation3 + $0x100] sm:$0xff] %v1451
    %1861 = vst [vmem:[#allocation3 + $0x108] sm:$0xff] %v1549
    %1862 = vst [vmem:[#allocation3 + $0x110] sm:$0xff] %v1647
    %1863 = vst [vmem:[#allocation3 + $0x118] sm:$0xff] %v1745
    %1864 = vst [vmem:[#allocation3 + $0x120] sm:$0xff] %v1453
    %1865 = vst [vmem:[#allocation3 + $0x128] sm:$0xff] %v1551
    %1866 = vst [vmem:[#allocation3 + $0x130] sm:$0xff] %v1649
    %1867 = vst [vmem:[#allocation3 + $0x138] sm:$0xff] %v1747
    %1868 = vst [vmem:[#allocation3 + $0x140] sm:$0xff] %v1456
    %1869 = vst [vmem:[#allocation3 + $0x148] sm:$0xff] %v1554
    %1870 = vst [vmem:[#allocation3 + $0x150] sm:$0xff] %v1652
    %1871 = vst [vmem:[#allocation3 + $0x158] sm:$0xff] %v1750
    %1872 = vst [vmem:[#allocation3 + $0x160] sm:$0xff] %v1458
    %1873 = vst [vmem:[#allocation3 + $0x168] sm:$0xff] %v1556
    %1874 = vst [vmem:[#allocation3 + $0x170] sm:$0xff] %v1654
    %1875 = vst [vmem:[#allocation3 + $0x178] sm:$0xff] %v1752
    %1876 = vst [vmem:[#allocation3 + $0x180] sm:$0xff] %v1461
    %1877 = vst [vmem:[#allocation3 + $0x188] sm:$0xff] %v1559
    %1878 = vst [vmem:[#allocation3 + $0x190] sm:$0xff] %v1657
    %1879 = vst [vmem:[#allocation3 + $0x198] sm:$0xff] %v1755
    %1880 = vst [vmem:[#allocation3 + $0x1a0] sm:$0xff] %v1463
    %1881 = vst [vmem:[#allocation3 + $0x1a8] sm:$0xff] %v1561
    %1882 = vst [vmem:[#allocation3 + $0x1b0] sm:$0xff] %v1659
    %1883 = vst [vmem:[#allocation3 + $0x1b8] sm:$0xff] %v1757
    %1884 = vst [vmem:[#allocation3 + $0x1c0] sm:$0xff] %v1466
    %1885 = vst [vmem:[#allocation3 + $0x1c8] sm:$0xff] %v1564
    %1886 = vst [vmem:[#allocation3 + $0x1d0] sm:$0xff] %v1662
    %1887 = vst [vmem:[#allocation3 + $0x1d8] sm:$0xff] %v1760
    %1888 = vst [vmem:[#allocation3 + $0x1e0] sm:$0xff] %v1468
    %1889 = vst [vmem:[#allocation3 + $0x1e8] sm:$0xff] %v1566
    %1890 = vst [vmem:[#allocation3 + $0x1f0] sm:$0xff] %v1664
    %1891 = vst [vmem:[#allocation3 + $0x1f8] sm:$0xff] %v1762
    %v1892 = vld [vmem:[#allocation10] sm:$0xff]
    %v1893 = vld [vmem:[#allocation10 + $0x8] sm:$0xff]
    %v1894 = vld [vmem:[#allocation10 + $0x10] sm:$0xff]
    %v1895 = vld [vmem:[#allocation10 + $0x18] sm:$0xff]
    %v1896 = vld [vmem:[#allocation10 + $0x20] sm:$0xff]
    %v1897 = vld [vmem:[#allocation10 + $0x28] sm:$0xff]
    %v1898 = vld [vmem:[#allocation10 + $0x30] sm:$0xff]
    %v1899 = vld [vmem:[#allocation10 + $0x38] sm:$0xff]
    %v1900 = vld [vmem:[#allocation10 + $0x40] sm:$0xff]
    %v1901 = vld [vmem:[#allocation10 + $0x48] sm:$0xff]
    %v1902 = vld [vmem:[#allocation10 + $0x50] sm:$0xff]
    %v1903 = vld [vmem:[#allocation10 + $0x58] sm:$0xff]
    %v1904 = vld [vmem:[#allocation10 + $0x60] sm:$0xff]
    %v1905 = vld [vmem:[#allocation10 + $0x68] sm:$0xff]
    %v1906 = vld [vmem:[#allocation10 + $0x70] sm:$0xff]
    %v1907 = vld [vmem:[#allocation10 + $0x78] sm:$0xff]
    %v1908 = vld [vmem:[#allocation10 + $0x80] sm:$0xff]
    %v1909 = vld [vmem:[#allocation10 + $0x88] sm:$0xff]
    %v1910 = vld [vmem:[#allocation10 + $0x90] sm:$0xff]
    %v1911 = vld [vmem:[#allocation10 + $0x98] sm:$0xff]
    %v1912 = vld [vmem:[#allocation10 + $0xa0] sm:$0xff]
    %v1913 = vld [vmem:[#allocation10 + $0xa8] sm:$0xff]
    %v1914 = vld [vmem:[#allocation10 + $0xb0] sm:$0xff]
    %v1915 = vld [vmem:[#allocation10 + $0xb8] sm:$0xff]
    %v1916 = vld [vmem:[#allocation10 + $0xc0] sm:$0xff]
    %v1917 = vld [vmem:[#allocation10 + $0xc8] sm:$0xff]
    %v1918 = vld [vmem:[#allocation10 + $0xd0] sm:$0xff]
    %v1919 = vld [vmem:[#allocation10 + $0xd8] sm:$0xff]
    %v1920 = vld [vmem:[#allocation10 + $0xe0] sm:$0xff]
    %v1921 = vld [vmem:[#allocation10 + $0xe8] sm:$0xff]
    %v1922 = vld [vmem:[#allocation10 + $0xf0] sm:$0xff]
    %v1923 = vld [vmem:[#allocation10 + $0xf8] sm:$0xff]
    %v1924 = vld [vmem:[#allocation12] sm:$0xff]
    %v1925 = vld [vmem:[#allocation12 + $0x8] sm:$0xff]
    %v1926 = vld [vmem:[#allocation12 + $0x10] sm:$0xff]
    %v1927 = vld [vmem:[#allocation12 + $0x18] sm:$0xff]
    %v1928 = vld [vmem:[#allocation12 + $0x20] sm:$0xff]
    %v1929 = vld [vmem:[#allocation12 + $0x28] sm:$0xff]
    %v1930 = vld [vmem:[#allocation12 + $0x30] sm:$0xff]
    %v1931 = vld [vmem:[#allocation12 + $0x38] sm:$0xff]
    %v1932 = vld [vmem:[#allocation12 + $0x40] sm:$0xff]
    %v1933 = vld [vmem:[#allocation12 + $0x48] sm:$0xff]
    %v1934 = vld [vmem:[#allocation12 + $0x50] sm:$0xff]
    %v1935 = vld [vmem:[#allocation12 + $0x58] sm:$0xff]
    %v1936 = vld [vmem:[#allocation12 + $0x60] sm:$0xff]
    %v1937 = vld [vmem:[#allocation12 + $0x68] sm:$0xff]
    %v1938 = vld [vmem:[#allocation12 + $0x70] sm:$0xff]
    %v1939 = vld [vmem:[#allocation12 + $0x78] sm:$0xff]
    %v1940 = vld [vmem:[#allocation12 + $0x80] sm:$0xff]
    %v1941 = vld [vmem:[#allocation12 + $0x88] sm:$0xff]
    %v1942 = vld [vmem:[#allocation12 + $0x90] sm:$0xff]
    %v1943 = vld [vmem:[#allocation12 + $0x98] sm:$0xff]
    %v1944 = vld [vmem:[#allocation12 + $0xa0] sm:$0xff]
    %v1945 = vld [vmem:[#allocation12 + $0xa8] sm:$0xff]
    %v1946 = vld [vmem:[#allocation12 + $0xb0] sm:$0xff]
    %v1947 = vld [vmem:[#allocation12 + $0xb8] sm:$0xff]
    %v1948 = vld [vmem:[#allocation12 + $0xc0] sm:$0xff]
    %v1949 = vld [vmem:[#allocation12 + $0xc8] sm:$0xff]
    %v1950 = vld [vmem:[#allocation12 + $0xd0] sm:$0xff]
    %v1951 = vld [vmem:[#allocation12 + $0xd8] sm:$0xff]
    %v1952 = vld [vmem:[#allocation12 + $0xe0] sm:$0xff]
    %v1953 = vld [vmem:[#allocation12 + $0xe8] sm:$0xff]
    %v1954 = vld [vmem:[#allocation12 + $0xf0] sm:$0xff]
    %v1955 = vld [vmem:[#allocation12 + $0xf8] sm:$0xff]
    %v1956 = vld [vmem:[#allocation2] sm:$0xff]
    %v1957 = vld [vmem:[#allocation2 + $0x8] sm:$0xff]
    %v1958 = vld [vmem:[#allocation2 + $0x10] sm:$0xff]
    %v1959 = vld [vmem:[#allocation2 + $0x18] sm:$0xff]
    %v1960 = vld [vmem:[#allocation2 + $0x20] sm:$0xff]
    %v1961 = vld [vmem:[#allocation2 + $0x28] sm:$0xff]
    %v1962 = vld [vmem:[#allocation2 + $0x30] sm:$0xff]
    %v1963 = vld [vmem:[#allocation2 + $0x38] sm:$0xff]
    %v1996 = vunpack.c.l.b16 %v1892
    %v1997 = vunpack.c.h.b16 %v1892
    %v1998 = vunpack.c.l.b16 %v1893
    %v1999 = vunpack.c.h.b16 %v1893
    %v2000 = vunpack.c.l.b16 %v1894
    %v2001 = vunpack.c.h.b16 %v1894
    %v2002 = vunpack.c.l.b16 %v1895
    %v2003 = vunpack.c.h.b16 %v1895
    %v2004 = vunpack.c.l.b16 %v1896
    %v2005 = vunpack.c.h.b16 %v1896
    %v2006 = vunpack.c.l.b16 %v1897
    %v2007 = vunpack.c.h.b16 %v1897
    %v2008 = vunpack.c.l.b16 %v1898
    %v2009 = vunpack.c.h.b16 %v1898
    %v2010 = vunpack.c.l.b16 %v1899
    %v2011 = vunpack.c.h.b16 %v1899
    %v2012 = vunpack.c.l.b16 %v1900
    %v2013 = vunpack.c.h.b16 %v1900
    %v2014 = vunpack.c.l.b16 %v1901
    %v2015 = vunpack.c.h.b16 %v1901
    %v2016 = vunpack.c.l.b16 %v1902
    %v2017 = vunpack.c.h.b16 %v1902
    %v2018 = vunpack.c.l.b16 %v1903
    %v2019 = vunpack.c.h.b16 %v1903
    %v2020 = vunpack.c.l.b16 %v1904
    %v2021 = vunpack.c.h.b16 %v1904
    %v2022 = vunpack.c.l.b16 %v1905
    %v2023 = vunpack.c.h.b16 %v1905
    %v2024 = vunpack.c.l.b16 %v1906
    %v2025 = vunpack.c.h.b16 %v1906
    %v2026 = vunpack.c.l.b16 %v1907
    %v2027 = vunpack.c.h.b16 %v1907
    %v2028 = vunpack.c.l.b16 %v1908
    %v2029 = vunpack.c.h.b16 %v1908
    %v2030 = vunpack.c.l.b16 %v1909
    %v2031 = vunpack.c.h.b16 %v1909
    %v2032 = vunpack.c.l.b16 %v1910
    %v2033 = vunpack.c.h.b16 %v1910
    %v2034 = vunpack.c.l.b16 %v1911
    %v2035 = vunpack.c.h.b16 %v1911
    %v2036 = vunpack.c.l.b16 %v1912
    %v2037 = vunpack.c.h.b16 %v1912
    %v2038 = vunpack.c.l.b16 %v1913
    %v2039 = vunpack.c.h.b16 %v1913
    %v2040 = vunpack.c.l.b16 %v1914
    %v2041 = vunpack.c.h.b16 %v1914
    %v2042 = vunpack.c.l.b16 %v1915
    %v2043 = vunpack.c.h.b16 %v1915
    %v2044 = vunpack.c.l.b16 %v1916
    %v2045 = vunpack.c.h.b16 %v1916
    %v2046 = vunpack.c.l.b16 %v1917
    %v2047 = vunpack.c.h.b16 %v1917
    %v2048 = vunpack.c.l.b16 %v1918
    %v2049 = vunpack.c.h.b16 %v1918
    %v2050 = vunpack.c.l.b16 %v1919
    %v2051 = vunpack.c.h.b16 %v1919
    %v2052 = vunpack.c.l.b16 %v1920
    %v2053 = vunpack.c.h.b16 %v1920
    %v2054 = vunpack.c.l.b16 %v1921
    %v2055 = vunpack.c.h.b16 %v1921
    %v2056 = vunpack.c.l.b16 %v1922
    %v2057 = vunpack.c.h.b16 %v1922
    %v2058 = vunpack.c.l.b16 %v1923
    %v2059 = vunpack.c.h.b16 %v1923
    %v2060 = vpack.c.b16 %v2000, %v1996
    %v2061 = vpack.c.b16 %v2001, %v1997
    %v2062 = vpack.c.b16 %v2002, %v1998
    %v2063 = vpack.c.b16 %v2003, %v1999
    %v2064 = vpack.c.b16 %v2008, %v2004
    %v2065 = vpack.c.b16 %v2009, %v2005
    %v2066 = vpack.c.b16 %v2010, %v2006
    %v2067 = vpack.c.b16 %v2011, %v2007
    %v2068 = vpack.c.b16 %v2016, %v2012
    %v2069 = vpack.c.b16 %v2017, %v2013
    %v2070 = vpack.c.b16 %v2018, %v2014
    %v2071 = vpack.c.b16 %v2019, %v2015
    %v2072 = vpack.c.b16 %v2024, %v2020
    %v2073 = vpack.c.b16 %v2025, %v2021
    %v2074 = vpack.c.b16 %v2026, %v2022
    %v2075 = vpack.c.b16 %v2027, %v2023
    %v2076 = vpack.c.b16 %v2032, %v2028
    %v2077 = vpack.c.b16 %v2033, %v2029
    %v2078 = vpack.c.b16 %v2034, %v2030
    %v2079 = vpack.c.b16 %v2035, %v2031
    %v2080 = vpack.c.b16 %v2040, %v2036
    %v2081 = vpack.c.b16 %v2041, %v2037
    %v2082 = vpack.c.b16 %v2042, %v2038
    %v2083 = vpack.c.b16 %v2043, %v2039
    %v2084 = vpack.c.b16 %v2048, %v2044
    %v2085 = vpack.c.b16 %v2049, %v2045
    %v2086 = vpack.c.b16 %v2050, %v2046
    %v2087 = vpack.c.b16 %v2051, %v2047
    %v2088 = vpack.c.b16 %v2056, %v2052
    %v2089 = vpack.c.b16 %v2057, %v2053
    %v2090 = vpack.c.b16 %v2058, %v2054
    %v2091 = vpack.c.b16 %v2059, %v2055
    %2124 = vmatpush.bf16.msra.mxu0 %v2088
    %2125 = vmatpush.bf16.msra.mxu0 %v2084
    %2126 = vmatpush.bf16.msra.mxu0 %v2080
    %2127 = vmatpush.bf16.msra.mxu0 %v2076
    %2128 = vmatpush.bf16.msra.mxu0 %v2072
    %2129 = vmatpush.bf16.msra.mxu0 %v2068
    %2130 = vmatpush.bf16.msra.mxu0 %v2064
    %2131 = vmatpush.bf16.msra.mxu0 %v2060
    %2132 = vmatmul.bf16.gmra.mxu0 0
    %v2133 = vpop.f32.mrf.mxu0
    %v2134 = vadd.f32 0.0, %v2133
    %v2135 = vpop.f32.mrf.mxu0
    %v2136 = vadd.f32 0.0, %v2135
    %2137 = vdwg.mxu0
    %2138 = vmatpush.bf16.msra.mxu0 %v2089
    %2139 = vmatpush.bf16.msra.mxu0 %v2085
    %2140 = vmatpush.bf16.msra.mxu0 %v2081
    %2141 = vmatpush.bf16.msra.mxu0 %v2077
    %2142 = vmatpush.bf16.msra.mxu0 %v2073
    %2143 = vmatpush.bf16.msra.mxu0 %v2069
    %2144 = vmatpush.bf16.msra.mxu0 %v2065
    %2145 = vmatpush.bf16.msra.mxu0 %v2061
    %2146 = vmatmul.bf16.gmra.mxu0 0
    %v2147 = vpop.f32.mrf.mxu0
    %v2148 = vadd.f32 0.0, %v2147
    %v2149 = vpop.f32.mrf.mxu0
    %v2150 = vadd.f32 0.0, %v2149
    %2151 = vdwg.mxu0
    %2152 = vmatpush.bf16.msra.mxu0 %v2090
    %2153 = vmatpush.bf16.msra.mxu0 %v2086
    %2154 = vmatpush.bf16.msra.mxu0 %v2082
    %2155 = vmatpush.bf16.msra.mxu0 %v2078
    %2156 = vmatpush.bf16.msra.mxu0 %v2074
    %2157 = vmatpush.bf16.msra.mxu0 %v2070
    %2158 = vmatpush.bf16.msra.mxu0 %v2066
    %2159 = vmatpush.bf16.msra.mxu0 %v2062
    %2160 = vmatmul.bf16.gmra.mxu0 0
    %v2161 = vpop.f32.mrf.mxu0
    %v2162 = vadd.f32 0.0, %v2161
    %v2163 = vpop.f32.mrf.mxu0
    %v2164 = vadd.f32 0.0, %v2163
    %2165 = vdwg.mxu0
    %2166 = vmatpush.bf16.msra.mxu0 %v2091
    %2167 = vmatpush.bf16.msra.mxu0 %v2087
    %2168 = vmatpush.bf16.msra.mxu0 %v2083
    %2169 = vmatpush.bf16.msra.mxu0 %v2079
    %2170 = vmatpush.bf16.msra.mxu0 %v2075
    %2171 = vmatpush.bf16.msra.mxu0 %v2071
    %2172 = vmatpush.bf16.msra.mxu0 %v2067
    %2173 = vmatpush.bf16.msra.mxu0 %v2063
    %2174 = vmatmul.bf16.gmra.mxu0 0
    %v2175 = vpop.f32.mrf.mxu0
    %v2176 = vadd.f32 0.0, %v2175
    %v2177 = vpop.f32.mrf.mxu0
    %v2178 = vadd.f32 0.0, %v2177
    %2179 = vdwg.mxu0
    %v2180 = vadd.f32 %v1956, %v2134
    %v2181 = vadd.f32 %v1957, %v2148
    %v2182 = vadd.f32 %v1958, %v2162
    %v2183 = vadd.f32 %v1959, %v2176
    %v2184 = vadd.f32 %v1960, %v2136
    %v2185 = vadd.f32 %v1961, %v2150
    %v2186 = vadd.f32 %v1962, %v2164
    %v2187 = vadd.f32 %v1963, %v2178
    %v2188 = vld [vmem:[#allocation3 + $0x1c0] sm:$0xff]
    %v2189 = vld [vmem:[#allocation3 + $0x1c8] sm:$0xff]
    %v2190 = vld [vmem:[#allocation3 + $0x1d0] sm:$0xff]
    %v2191 = vld [vmem:[#allocation3 + $0x1d8] sm:$0xff]
    %v2192 = vld [vmem:[#allocation3 + $0x1e0] sm:$0xff]
    %v2193 = vld [vmem:[#allocation3 + $0x1e8] sm:$0xff]
    %v2194 = vld [vmem:[#allocation3 + $0x1f0] sm:$0xff]
    %v2195 = vld [vmem:[#allocation3 + $0x1f8] sm:$0xff]
    %v2228 = vunpack.c.l.b16 %v1924
    %v2229 = vunpack.c.h.b16 %v1924
    %v2230 = vunpack.c.l.b16 %v1925
    %v2231 = vunpack.c.h.b16 %v1925
    %v2232 = vunpack.c.l.b16 %v1926
    %v2233 = vunpack.c.h.b16 %v1926
    %v2234 = vunpack.c.l.b16 %v1927
    %v2235 = vunpack.c.h.b16 %v1927
    %v2236 = vunpack.c.l.b16 %v1928
    %v2237 = vunpack.c.h.b16 %v1928
    %v2238 = vunpack.c.l.b16 %v1929
    %v2239 = vunpack.c.h.b16 %v1929
    %v2240 = vunpack.c.l.b16 %v1930
    %v2241 = vunpack.c.h.b16 %v1930
    %v2242 = vunpack.c.l.b16 %v1931
    %v2243 = vunpack.c.h.b16 %v1931
    %v2244 = vunpack.c.l.b16 %v1932
    %v2245 = vunpack.c.h.b16 %v1932
    %v2246 = vunpack.c.l.b16 %v1933
    %v2247 = vunpack.c.h.b16 %v1933
    %v2248 = vunpack.c.l.b16 %v1934
    %v2249 = vunpack.c.h.b16 %v1934
    %v2250 = vunpack.c.l.b16 %v1935
    %v2251 = vunpack.c.h.b16 %v1935
    %v2252 = vunpack.c.l.b16 %v1936
    %v2253 = vunpack.c.h.b16 %v1936
    %v2254 = vunpack.c.l.b16 %v1937
    %v2255 = vunpack.c.h.b16 %v1937
    %v2256 = vunpack.c.l.b16 %v1938
    %v2257 = vunpack.c.h.b16 %v1938
    %v2258 = vunpack.c.l.b16 %v1939
    %v2259 = vunpack.c.h.b16 %v1939
    %v2260 = vunpack.c.l.b16 %v1940
    %v2261 = vunpack.c.h.b16 %v1940
    %v2262 = vunpack.c.l.b16 %v1941
    %v2263 = vunpack.c.h.b16 %v1941
    %v2264 = vunpack.c.l.b16 %v1942
    %v2265 = vunpack.c.h.b16 %v1942
    %v2266 = vunpack.c.l.b16 %v1943
    %v2267 = vunpack.c.h.b16 %v1943
    %v2268 = vunpack.c.l.b16 %v1944
    %v2269 = vunpack.c.h.b16 %v1944
    %v2270 = vunpack.c.l.b16 %v1945
    %v2271 = vunpack.c.h.b16 %v1945
    %v2272 = vunpack.c.l.b16 %v1946
    %v2273 = vunpack.c.h.b16 %v1946
    %v2274 = vunpack.c.l.b16 %v1947
    %v2275 = vunpack.c.h.b16 %v1947
    %v2276 = vunpack.c.l.b16 %v1948
    %v2277 = vunpack.c.h.b16 %v1948
    %v2278 = vunpack.c.l.b16 %v1949
    %v2279 = vunpack.c.h.b16 %v1949
    %v2280 = vunpack.c.l.b16 %v1950
    %v2281 = vunpack.c.h.b16 %v1950
    %v2282 = vunpack.c.l.b16 %v1951
    %v2283 = vunpack.c.h.b16 %v1951
    %v2284 = vunpack.c.l.b16 %v1952
    %v2285 = vunpack.c.h.b16 %v1952
    %v2286 = vunpack.c.l.b16 %v1953
    %v2287 = vunpack.c.h.b16 %v1953
    %v2288 = vunpack.c.l.b16 %v1954
    %v2289 = vunpack.c.h.b16 %v1954
    %v2290 = vunpack.c.l.b16 %v1955
    %v2291 = vunpack.c.h.b16 %v1955
    %v2292 = vpack.c.b16 %v2232, %v2228
    %v2293 = vpack.c.b16 %v2233, %v2229
    %v2294 = vpack.c.b16 %v2234, %v2230
    %v2295 = vpack.c.b16 %v2235, %v2231
    %v2296 = vpack.c.b16 %v2240, %v2236
    %v2297 = vpack.c.b16 %v2241, %v2237
    %v2298 = vpack.c.b16 %v2242, %v2238
    %v2299 = vpack.c.b16 %v2243, %v2239
    %v2300 = vpack.c.b16 %v2248, %v2244
    %v2301 = vpack.c.b16 %v2249, %v2245
    %v2302 = vpack.c.b16 %v2250, %v2246
    %v2303 = vpack.c.b16 %v2251, %v2247
    %v2304 = vpack.c.b16 %v2256, %v2252
    %v2305 = vpack.c.b16 %v2257, %v2253
    %v2306 = vpack.c.b16 %v2258, %v2254
    %v2307 = vpack.c.b16 %v2259, %v2255
    %v2308 = vpack.c.b16 %v2264, %v2260
    %v2309 = vpack.c.b16 %v2265, %v2261
    %v2310 = vpack.c.b16 %v2266, %v2262
    %v2311 = vpack.c.b16 %v2267, %v2263
    %v2312 = vpack.c.b16 %v2272, %v2268
    %v2313 = vpack.c.b16 %v2273, %v2269
    %v2314 = vpack.c.b16 %v2274, %v2270
    %v2315 = vpack.c.b16 %v2275, %v2271
    %v2316 = vpack.c.b16 %v2280, %v2276
    %v2317 = vpack.c.b16 %v2281, %v2277
    %v2318 = vpack.c.b16 %v2282, %v2278
    %v2319 = vpack.c.b16 %v2283, %v2279
    %v2320 = vpack.c.b16 %v2288, %v2284
    %v2321 = vpack.c.b16 %v2289, %v2285
    %v2322 = vpack.c.b16 %v2290, %v2286
    %v2323 = vpack.c.b16 %v2291, %v2287
    %2356 = vmatpush.bf16.msra.mxu0 %v2320
    %2357 = vmatpush.bf16.msra.mxu0 %v2316
    %2358 = vmatpush.bf16.msra.mxu0 %v2312
    %2359 = vmatpush.bf16.msra.mxu0 %v2308
    %2360 = vmatpush.bf16.msra.mxu0 %v2304
    %2361 = vmatpush.bf16.msra.mxu0 %v2300
    %2362 = vmatpush.bf16.msra.mxu0 %v2296
    %2363 = vmatpush.bf16.msra.mxu0 %v2292
    %2364 = vmatmul.bf16.gmra.mxu0 0
    %v2365 = vpop.f32.mrf.mxu0
    %v2366 = vadd.f32 0.0, %v2365
    %v2367 = vpop.f32.mrf.mxu0
    %v2368 = vadd.f32 0.0, %v2367
    %2369 = vdwg.mxu0
    %2370 = vmatpush.bf16.msra.mxu0 %v2321
    %2371 = vmatpush.bf16.msra.mxu0 %v2317
    %2372 = vmatpush.bf16.msra.mxu0 %v2313
    %2373 = vmatpush.bf16.msra.mxu0 %v2309
    %2374 = vmatpush.bf16.msra.mxu0 %v2305
    %2375 = vmatpush.bf16.msra.mxu0 %v2301
    %2376 = vmatpush.bf16.msra.mxu0 %v2297
    %2377 = vmatpush.bf16.msra.mxu0 %v2293
    %2378 = vmatmul.bf16.gmra.mxu0 0
    %v2379 = vpop.f32.mrf.mxu0
    %v2380 = vadd.f32 0.0, %v2379
    %v2381 = vpop.f32.mrf.mxu0
    %v2382 = vadd.f32 0.0, %v2381
    %2383 = vdwg.mxu0
    %2384 = vmatpush.bf16.msra.mxu0 %v2322
    %2385 = vmatpush.bf16.msra.mxu0 %v2318
    %2386 = vmatpush.bf16.msra.mxu0 %v2314
    %2387 = vmatpush.bf16.msra.mxu0 %v2310
    %2388 = vmatpush.bf16.msra.mxu0 %v2306
    %2389 = vmatpush.bf16.msra.mxu0 %v2302
    %2390 = vmatpush.bf16.msra.mxu0 %v2298
    %2391 = vmatpush.bf16.msra.mxu0 %v2294
    %2392 = vmatmul.bf16.gmra.mxu0 0
    %v2393 = vpop.f32.mrf.mxu0
    %v2394 = vadd.f32 0.0, %v2393
    %v2395 = vpop.f32.mrf.mxu0
    %v2396 = vadd.f32 0.0, %v2395
    %2397 = vdwg.mxu0
    %2398 = vmatpush.bf16.msra.mxu0 %v2323
    %2399 = vmatpush.bf16.msra.mxu0 %v2319
    %2400 = vmatpush.bf16.msra.mxu0 %v2315
    %2401 = vmatpush.bf16.msra.mxu0 %v2311
    %2402 = vmatpush.bf16.msra.mxu0 %v2307
    %2403 = vmatpush.bf16.msra.mxu0 %v2303
    %2404 = vmatpush.bf16.msra.mxu0 %v2299
    %2405 = vmatpush.bf16.msra.mxu0 %v2295
    %2406 = vmatmul.bf16.gmra.mxu0 0
    %v2407 = vpop.f32.mrf.mxu0
    %v2408 = vadd.f32 0.0, %v2407
    %v2409 = vpop.f32.mrf.mxu0
    %v2410 = vadd.f32 0.0, %v2409
    %2411 = vdwg.mxu0
    %v2412 = vadd.f32 %v2188, %v2366
    %v2413 = vadd.f32 %v2189, %v2380
    %v2414 = vadd.f32 %v2190, %v2394
    %v2415 = vadd.f32 %v2191, %v2408
    %v2416 = vadd.f32 %v2192, %v2368
    %v2417 = vadd.f32 %v2193, %v2382
    %v2418 = vadd.f32 %v2194, %v2396
    %v2419 = vadd.f32 %v2195, %v2410
    %v2420 = vxor.u32 %v2180, 2147483648
    %v2421 = vxor.u32 %v2181, 2147483648
    %v2422 = vxor.u32 %v2182, 2147483648
    %v2423 = vxor.u32 %v2184, 2147483648
    %v2424 = vxor.u32 %v2185, 2147483648
    %v2425 = vxor.u32 %v2186, 2147483648
    %v2426 = vmul.f32 %v2420, 1.442695
    %v2427 = vpow.pop %v2426
    %v2428 = vmul.f32 %v2421, 1.442695
    %v2429 = vpow.pop %v2428
    %v2430 = vmul.f32 %v2422, 1.442695
    %v2431 = vpow.pop %v2430
    %v2432 = vmul.f32 %v2423, 1.442695
    %v2433 = vpow.pop %v2432
    %v2434 = vmul.f32 %v2424, 1.442695
    %v2435 = vpow.pop %v2434
    %v2436 = vmul.f32 %v2425, 1.442695
    %v2437 = vpow.pop %v2436
    %v2438 = vadd.f32 %v2427, 1.0
    %v2439 = vadd.f32 %v2429, 1.0
    %v2440 = vadd.f32 %v2431, 1.0
    %v2441 = vadd.f32 %v2433, 1.0
    %v2442 = vadd.f32 %v2435, 1.0
    %v2443 = vadd.f32 %v2437, 1.0
    %v2444 = vrcp.pop %v2438
    %v2445 = vmul.f32 %v2438, %v2444
    %v2446 = vsub.f32 1.0, %v2445
    %v2447 = vmul.f32 %v2444, %v2446
    %v2448 = vadd.f32 %v2444, %v2447
    %vm2449 = vweird.f32 %v2438
    %vm2450 = vweird.f32 %v2444
    %vm2451 = vmor %vm2449, %vm2450
    %v2452 = vsel %vm2451, %v2444, %v2448
    %v2453 = vand.u32 2147483647, %v2438
    %vm2454 = vcmp.eq.f32.partialorder %v2453, 8.507059e+37
    %v2455 = vand.u32 %v2438, 2147483648
    %v2456 = vor.u32 1.1754944e-38, %v2455
    %v2457 = vsel %vm2454, %v2456, %v2452
    %v2458 = vmul.f32 1.0, %v2457
    %v2459 = vrcp.pop %v2439
    %v2460 = vmul.f32 %v2439, %v2459
    %v2461 = vsub.f32 1.0, %v2460
    %v2462 = vmul.f32 %v2459, %v2461
    %v2463 = vadd.f32 %v2459, %v2462
    %vm2464 = vweird.f32 %v2439
    %vm2465 = vweird.f32 %v2459
    %vm2466 = vmor %vm2464, %vm2465
    %v2467 = vsel %vm2466, %v2459, %v2463
    %v2468 = vand.u32 2147483647, %v2439
    %vm2469 = vcmp.eq.f32.partialorder %v2468, 8.507059e+37
    %v2470 = vand.u32 %v2439, 2147483648
    %v2471 = vor.u32 1.1754944e-38, %v2470
    %v2472 = vsel %vm2469, %v2471, %v2467
    %v2473 = vmul.f32 1.0, %v2472
    %v2474 = vrcp.pop %v2440
    %v2475 = vmul.f32 %v2440, %v2474
    %v2476 = vsub.f32 1.0, %v2475
    %v2477 = vmul.f32 %v2474, %v2476
    %v2478 = vadd.f32 %v2474, %v2477
    %vm2479 = vweird.f32 %v2440
    %vm2480 = vweird.f32 %v2474
    %vm2481 = vmor %vm2479, %vm2480
    %v2482 = vsel %vm2481, %v2474, %v2478
    %v2483 = vand.u32 2147483647, %v2440
    %vm2484 = vcmp.eq.f32.partialorder %v2483, 8.507059e+37
    %v2485 = vand.u32 %v2440, 2147483648
    %v2486 = vor.u32 1.1754944e-38, %v2485
    %v2487 = vsel %vm2484, %v2486, %v2482
    %v2488 = vmul.f32 1.0, %v2487
    %v2489 = vrcp.pop %v2441
    %v2490 = vmul.f32 %v2441, %v2489
    %v2491 = vsub.f32 1.0, %v2490
    %v2492 = vmul.f32 %v2489, %v2491
    %v2493 = vadd.f32 %v2489, %v2492
    %vm2494 = vweird.f32 %v2441
    %vm2495 = vweird.f32 %v2489
    %vm2496 = vmor %vm2494, %vm2495
    %v2497 = vsel %vm2496, %v2489, %v2493
    %v2498 = vand.u32 2147483647, %v2441
    %vm2499 = vcmp.eq.f32.partialorder %v2498, 8.507059e+37
    %v2500 = vand.u32 %v2441, 2147483648
    %v2501 = vor.u32 1.1754944e-38, %v2500
    %v2502 = vsel %vm2499, %v2501, %v2497
    %v2503 = vmul.f32 1.0, %v2502
    %v2504 = vrcp.pop %v2442
    %v2505 = vmul.f32 %v2442, %v2504
    %v2506 = vsub.f32 1.0, %v2505
    %v2507 = vmul.f32 %v2504, %v2506
    %v2508 = vadd.f32 %v2504, %v2507
    %vm2509 = vweird.f32 %v2442
    %vm2510 = vweird.f32 %v2504
    %vm2511 = vmor %vm2509, %vm2510
    %v2512 = vsel %vm2511, %v2504, %v2508
    %v2513 = vand.u32 2147483647, %v2442
    %vm2514 = vcmp.eq.f32.partialorder %v2513, 8.507059e+37
    %v2515 = vand.u32 %v2442, 2147483648
    %v2516 = vor.u32 1.1754944e-38, %v2515
    %v2517 = vsel %vm2514, %v2516, %v2512
    %v2518 = vmul.f32 1.0, %v2517
    %v2519 = vrcp.pop %v2443
    %v2520 = vmul.f32 %v2443, %v2519
    %v2521 = vsub.f32 1.0, %v2520
    %v2522 = vmul.f32 %v2519, %v2521
    %v2523 = vadd.f32 %v2519, %v2522
    %vm2524 = vweird.f32 %v2443
    %vm2525 = vweird.f32 %v2519
    %vm2526 = vmor %vm2524, %vm2525
    %v2527 = vsel %vm2526, %v2519, %v2523
    %v2528 = vand.u32 2147483647, %v2443
    %vm2529 = vcmp.eq.f32.partialorder %v2528, 8.507059e+37
    %v2530 = vand.u32 %v2443, 2147483648
    %v2531 = vor.u32 1.1754944e-38, %v2530
    %v2532 = vsel %vm2529, %v2531, %v2527
    %v2533 = vmul.f32 1.0, %v2532
    %v2534 = vtanh.pop %v2183
    %v2535 = vtanh.pop %v2187
    %v2536 = vmul.f32 %v2473, 0.0
    %v2537 = vmul.f32 %v2518, 0.0
    %v2538 = vmul.f32 %v2458, %v2534
    %v2539 = vmul.f32 %v2503, %v2535
    %v2540 = vadd.f32 %v2536, %v2538
    %v2541 = vadd.f32 %v2537, %v2539
    %v2542 = vtanh.pop %v2540
    %v2543 = vtanh.pop %v2541
    %v2544 = vmul.f32 %v2488, %v2542
    %v2545 = vmul.f32 %v2533, %v2543
    %v2546 = vxor.u32 %v2412, 2147483648
    %v2547 = vxor.u32 %v2413, 2147483648
    %v2548 = vxor.u32 %v2414, 2147483648
    %v2549 = vxor.u32 %v2416, 2147483648
    %v2550 = vxor.u32 %v2417, 2147483648
    %v2551 = vxor.u32 %v2418, 2147483648
    %v2552 = vmul.f32 %v2546, 1.442695
    %v2553 = vpow.pop %v2552
    %v2554 = vmul.f32 %v2547, 1.442695
    %v2555 = vpow.pop %v2554
    %v2556 = vmul.f32 %v2548, 1.442695
    %v2557 = vpow.pop %v2556
    %v2558 = vmul.f32 %v2549, 1.442695
    %v2559 = vpow.pop %v2558
    %v2560 = vmul.f32 %v2550, 1.442695
    %v2561 = vpow.pop %v2560
    %v2562 = vmul.f32 %v2551, 1.442695
    %v2563 = vpow.pop %v2562
    %v2564 = vadd.f32 %v2553, 1.0
    %v2565 = vadd.f32 %v2555, 1.0
    %v2566 = vadd.f32 %v2557, 1.0
    %v2567 = vadd.f32 %v2559, 1.0
    %v2568 = vadd.f32 %v2561, 1.0
    %v2569 = vadd.f32 %v2563, 1.0
    %v2570 = vrcp.pop %v2564
    %v2571 = vmul.f32 %v2564, %v2570
    %v2572 = vsub.f32 1.0, %v2571
    %v2573 = vmul.f32 %v2570, %v2572
    %v2574 = vadd.f32 %v2570, %v2573
    %vm2575 = vweird.f32 %v2564
    %vm2576 = vweird.f32 %v2570
    %vm2577 = vmor %vm2575, %vm2576
    %v2578 = vsel %vm2577, %v2570, %v2574
    %v2579 = vand.u32 2147483647, %v2564
    %vm2580 = vcmp.eq.f32.partialorder %v2579, 8.507059e+37
    %v2581 = vand.u32 %v2564, 2147483648
    %v2582 = vor.u32 1.1754944e-38, %v2581
    %v2583 = vsel %vm2580, %v2582, %v2578
    %v2584 = vmul.f32 1.0, %v2583
    %v2585 = vrcp.pop %v2565
    %v2586 = vmul.f32 %v2565, %v2585
    %v2587 = vsub.f32 1.0, %v2586
    %v2588 = vmul.f32 %v2585, %v2587
    %v2589 = vadd.f32 %v2585, %v2588
    %vm2590 = vweird.f32 %v2565
    %vm2591 = vweird.f32 %v2585
    %vm2592 = vmor %vm2590, %vm2591
    %v2593 = vsel %vm2592, %v2585, %v2589
    %v2594 = vand.u32 2147483647, %v2565
    %vm2595 = vcmp.eq.f32.partialorder %v2594, 8.507059e+37
    %v2596 = vand.u32 %v2565, 2147483648
    %v2597 = vor.u32 1.1754944e-38, %v2596
    %v2598 = vsel %vm2595, %v2597, %v2593
    %v2599 = vmul.f32 1.0, %v2598
    %v2600 = vrcp.pop %v2566
    %v2601 = vmul.f32 %v2566, %v2600
    %v2602 = vsub.f32 1.0, %v2601
    %v2603 = vmul.f32 %v2600, %v2602
    %v2604 = vadd.f32 %v2600, %v2603
    %vm2605 = vweird.f32 %v2566
    %vm2606 = vweird.f32 %v2600
    %vm2607 = vmor %vm2605, %vm2606
    %v2608 = vsel %vm2607, %v2600, %v2604
    %v2609 = vand.u32 2147483647, %v2566
    %vm2610 = vcmp.eq.f32.partialorder %v2609, 8.507059e+37
    %v2611 = vand.u32 %v2566, 2147483648
    %v2612 = vor.u32 1.1754944e-38, %v2611
    %v2613 = vsel %vm2610, %v2612, %v2608
    %v2614 = vmul.f32 1.0, %v2613
    %v2615 = vrcp.pop %v2567
    %v2616 = vmul.f32 %v2567, %v2615
    %v2617 = vsub.f32 1.0, %v2616
    %v2618 = vmul.f32 %v2615, %v2617
    %v2619 = vadd.f32 %v2615, %v2618
    %vm2620 = vweird.f32 %v2567
    %vm2621 = vweird.f32 %v2615
    %vm2622 = vmor %vm2620, %vm2621
    %v2623 = vsel %vm2622, %v2615, %v2619
    %v2624 = vand.u32 2147483647, %v2567
    %vm2625 = vcmp.eq.f32.partialorder %v2624, 8.507059e+37
    %v2626 = vand.u32 %v2567, 2147483648
    %v2627 = vor.u32 1.1754944e-38, %v2626
    %v2628 = vsel %vm2625, %v2627, %v2623
    %v2629 = vmul.f32 1.0, %v2628
    %v2630 = vrcp.pop %v2568
    %v2631 = vmul.f32 %v2568, %v2630
    %v2632 = vsub.f32 1.0, %v2631
    %v2633 = vmul.f32 %v2630, %v2632
    %v2634 = vadd.f32 %v2630, %v2633
    %vm2635 = vweird.f32 %v2568
    %vm2636 = vweird.f32 %v2630
    %vm2637 = vmor %vm2635, %vm2636
    %v2638 = vsel %vm2637, %v2630, %v2634
    %v2639 = vand.u32 2147483647, %v2568
    %vm2640 = vcmp.eq.f32.partialorder %v2639, 8.507059e+37
    %v2641 = vand.u32 %v2568, 2147483648
    %v2642 = vor.u32 1.1754944e-38, %v2641
    %v2643 = vsel %vm2640, %v2642, %v2638
    %v2644 = vmul.f32 1.0, %v2643
    %v2645 = vrcp.pop %v2569
    %v2646 = vmul.f32 %v2569, %v2645
    %v2647 = vsub.f32 1.0, %v2646
    %v2648 = vmul.f32 %v2645, %v2647
    %v2649 = vadd.f32 %v2645, %v2648
    %vm2650 = vweird.f32 %v2569
    %vm2651 = vweird.f32 %v2645
    %vm2652 = vmor %vm2650, %vm2651
    %v2653 = vsel %vm2652, %v2645, %v2649
    %v2654 = vand.u32 2147483647, %v2569
    %vm2655 = vcmp.eq.f32.partialorder %v2654, 8.507059e+37
    %v2656 = vand.u32 %v2569, 2147483648
    %v2657 = vor.u32 1.1754944e-38, %v2656
    %v2658 = vsel %vm2655, %v2657, %v2653
    %v2659 = vmul.f32 1.0, %v2658
    %v2660 = vtanh.pop %v2415
    %v2661 = vtanh.pop %v2419
    %v2662 = vmul.f32 %v2599, 0.0
    %v2663 = vmul.f32 %v2644, 0.0
    %v2664 = vmul.f32 %v2584, %v2660
    %v2665 = vmul.f32 %v2629, %v2661
    %v2666 = vadd.f32 %v2662, %v2664
    %v2667 = vadd.f32 %v2663, %v2665
    %v2668 = vtanh.pop %v2666
    %v2669 = vtanh.pop %v2667
    %v2670 = vmul.f32 %v2614, %v2668
    %v2671 = vmul.f32 %v2659, %v2669
    %v2672 = vadd.f32 %v2544, 0.0
    %v2673 = vadd.f32 %v2545, 0.0
    %v2674 = vadd.f32 %v2670, 0.0
    %v2675 = vadd.f32 %v2671, 0.0
    %v2676 = vld [vmem:[#allocation2 + $0x40] sm:$0xff]
    %v2677 = vld [vmem:[#allocation2 + $0x48] sm:$0xff]
    %v2678 = vld [vmem:[#allocation2 + $0x50] sm:$0xff]
    %v2679 = vld [vmem:[#allocation2 + $0x58] sm:$0xff]
    %v2680 = vld [vmem:[#allocation2 + $0x60] sm:$0xff]
    %v2681 = vld [vmem:[#allocation2 + $0x68] sm:$0xff]
    %v2682 = vld [vmem:[#allocation2 + $0x70] sm:$0xff]
    %v2683 = vld [vmem:[#allocation2 + $0x78] sm:$0xff]
    %v2684 = vpack.c.bf16 %v2545, %v2544
    %2685 = vmatpush.bf16.msra.mxu0 %v2088
    %2686 = vmatpush.bf16.msra.mxu0 %v2084
    %2687 = vmatpush.bf16.msra.mxu0 %v2080
    %2688 = vmatpush.bf16.msra.mxu0 %v2076
    %2689 = vmatpush.bf16.msra.mxu0 %v2072
    %2690 = vmatpush.bf16.msra.mxu0 %v2068
    %2691 = vmatpush.bf16.msra.mxu0 %v2064
    %2692 = vmatpush.bf16.msra.mxu0 %v2060
    %2693 = vmatmul.bf16.gmra.mxu0 %v2684
    %v2694 = vpop.f32.mrf.mxu0
    %v2695 = vadd.f32 0.0, %v2694
    %v2696 = vpop.f32.mrf.mxu0
    %v2697 = vadd.f32 0.0, %v2696
    %2698 = vdwg.mxu0
    %2699 = vmatpush.bf16.msra.mxu0 %v2089
    %2700 = vmatpush.bf16.msra.mxu0 %v2085
    %2701 = vmatpush.bf16.msra.mxu0 %v2081
    %2702 = vmatpush.bf16.msra.mxu0 %v2077
    %2703 = vmatpush.bf16.msra.mxu0 %v2073
    %2704 = vmatpush.bf16.msra.mxu0 %v2069
    %2705 = vmatpush.bf16.msra.mxu0 %v2065
    %2706 = vmatpush.bf16.msra.mxu0 %v2061
    %2707 = vmatmul.bf16.gmra.mxu0 %v2684
    %v2708 = vpop.f32.mrf.mxu0
    %v2709 = vadd.f32 0.0, %v2708
    %v2710 = vpop.f32.mrf.mxu0
    %v2711 = vadd.f32 0.0, %v2710
    %2712 = vdwg.mxu0
    %2713 = vmatpush.bf16.msra.mxu0 %v2090
    %2714 = vmatpush.bf16.msra.mxu0 %v2086
    %2715 = vmatpush.bf16.msra.mxu0 %v2082
    %2716 = vmatpush.bf16.msra.mxu0 %v2078
    %2717 = vmatpush.bf16.msra.mxu0 %v2074
    %2718 = vmatpush.bf16.msra.mxu0 %v2070
    %2719 = vmatpush.bf16.msra.mxu0 %v2066
    %2720 = vmatpush.bf16.msra.mxu0 %v2062
    %2721 = vmatmul.bf16.gmra.mxu0 %v2684
    %v2722 = vpop.f32.mrf.mxu0
    %v2723 = vadd.f32 0.0, %v2722
    %v2724 = vpop.f32.mrf.mxu0
    %v2725 = vadd.f32 0.0, %v2724
    %2726 = vdwg.mxu0
    %2727 = vmatpush.bf16.msra.mxu0 %v2091
    %2728 = vmatpush.bf16.msra.mxu0 %v2087
    %2729 = vmatpush.bf16.msra.mxu0 %v2083
    %2730 = vmatpush.bf16.msra.mxu0 %v2079
    %2731 = vmatpush.bf16.msra.mxu0 %v2075
    %2732 = vmatpush.bf16.msra.mxu0 %v2071
    %2733 = vmatpush.bf16.msra.mxu0 %v2067
    %2734 = vmatpush.bf16.msra.mxu0 %v2063
    %2735 = vmatmul.bf16.gmra.mxu0 %v2684
    %v2736 = vpop.f32.mrf.mxu0
    %v2737 = vadd.f32 0.0, %v2736
    %v2738 = vpop.f32.mrf.mxu0
    %v2739 = vadd.f32 0.0, %v2738
    %2740 = vdwg.mxu0
    %v2741 = vadd.f32 %v2676, %v2695
    %v2742 = vadd.f32 %v2677, %v2709
    %v2743 = vadd.f32 %v2678, %v2723
    %v2744 = vadd.f32 %v2679, %v2737
    %v2745 = vadd.f32 %v2680, %v2697
    %v2746 = vadd.f32 %v2681, %v2711
    %v2747 = vadd.f32 %v2682, %v2725
    %v2748 = vadd.f32 %v2683, %v2739
    %v2749 = vld [vmem:[#allocation3 + $0x180] sm:$0xff]
    %v2750 = vld [vmem:[#allocation3 + $0x188] sm:$0xff]
    %v2751 = vld [vmem:[#allocation3 + $0x190] sm:$0xff]
    %v2752 = vld [vmem:[#allocation3 + $0x198] sm:$0xff]
    %v2753 = vld [vmem:[#allocation3 + $0x1a0] sm:$0xff]
    %v2754 = vld [vmem:[#allocation3 + $0x1a8] sm:$0xff]
    %v2755 = vld [vmem:[#allocation3 + $0x1b0] sm:$0xff]
    %v2756 = vld [vmem:[#allocation3 + $0x1b8] sm:$0xff]
    %v2757 = vpack.c.bf16 %v2671, %v2670
    %2758 = vmatpush.bf16.msra.mxu0 %v2320
    %2759 = vmatpush.bf16.msra.mxu0 %v2316
    %2760 = vmatpush.bf16.msra.mxu0 %v2312
    %2761 = vmatpush.bf16.msra.mxu0 %v2308
    %2762 = vmatpush.bf16.msra.mxu0 %v2304
    %2763 = vmatpush.bf16.msra.mxu0 %v2300
    %2764 = vmatpush.bf16.msra.mxu0 %v2296
    %2765 = vmatpush.bf16.msra.mxu0 %v2292
    %2766 = vmatmul.bf16.gmra.mxu0 %v2757
    %v2767 = vpop.f32.mrf.mxu0
    %v2768 = vadd.f32 0.0, %v2767
    %v2769 = vpop.f32.mrf.mxu0
    %v2770 = vadd.f32 0.0, %v2769
    %2771 = vdwg.mxu0
    %2772 = vmatpush.bf16.msra.mxu0 %v2321
    %2773 = vmatpush.bf16.msra.mxu0 %v2317
    %2774 = vmatpush.bf16.msra.mxu0 %v2313
    %2775 = vmatpush.bf16.msra.mxu0 %v2309
    %2776 = vmatpush.bf16.msra.mxu0 %v2305
    %2777 = vmatpush.bf16.msra.mxu0 %v2301
    %2778 = vmatpush.bf16.msra.mxu0 %v2297
    %2779 = vmatpush.bf16.msra.mxu0 %v2293
    %2780 = vmatmul.bf16.gmra.mxu0 %v2757
    %v2781 = vpop.f32.mrf.mxu0
    %v2782 = vadd.f32 0.0, %v2781
    %v2783 = vpop.f32.mrf.mxu0
    %v2784 = vadd.f32 0.0, %v2783
    %2785 = vdwg.mxu0
    %2786 = vmatpush.bf16.msra.mxu0 %v2322
    %2787 = vmatpush.bf16.msra.mxu0 %v2318
    %2788 = vmatpush.bf16.msra.mxu0 %v2314
    %2789 = vmatpush.bf16.msra.mxu0 %v2310
    %2790 = vmatpush.bf16.msra.mxu0 %v2306
    %2791 = vmatpush.bf16.msra.mxu0 %v2302
    %2792 = vmatpush.bf16.msra.mxu0 %v2298
    %2793 = vmatpush.bf16.msra.mxu0 %v2294
    %2794 = vmatmul.bf16.gmra.mxu0 %v2757
    %v2795 = vpop.f32.mrf.mxu0
    %v2796 = vadd.f32 0.0, %v2795
    %v2797 = vpop.f32.mrf.mxu0
    %v2798 = vadd.f32 0.0, %v2797
    %2799 = vdwg.mxu0
    %2800 = vmatpush.bf16.msra.mxu0 %v2323
    %2801 = vmatpush.bf16.msra.mxu0 %v2319
    %2802 = vmatpush.bf16.msra.mxu0 %v2315
    %2803 = vmatpush.bf16.msra.mxu0 %v2311
    %2804 = vmatpush.bf16.msra.mxu0 %v2307
    %2805 = vmatpush.bf16.msra.mxu0 %v2303
    %2806 = vmatpush.bf16.msra.mxu0 %v2299
    %2807 = vmatpush.bf16.msra.mxu0 %v2295
    %2808 = vmatmul.bf16.gmra.mxu0 %v2757
    %v2809 = vpop.f32.mrf.mxu0
    %v2810 = vadd.f32 0.0, %v2809
    %v2811 = vpop.f32.mrf.mxu0
    %v2812 = vadd.f32 0.0, %v2811
    %2813 = vdwg.mxu0
    %v2814 = vadd.f32 %v2749, %v2768
    %v2815 = vadd.f32 %v2750, %v2782
    %v2816 = vadd.f32 %v2751, %v2796
    %v2817 = vadd.f32 %v2752, %v2810
    %v2818 = vadd.f32 %v2753, %v2770
    %v2819 = vadd.f32 %v2754, %v2784
    %v2820 = vadd.f32 %v2755, %v2798
    %v2821 = vadd.f32 %v2756, %v2812
    %v2822 = vxor.u32 %v2741, 2147483648
    %v2823 = vxor.u32 %v2742, 2147483648
    %v2824 = vxor.u32 %v2743, 2147483648
    %v2825 = vxor.u32 %v2745, 2147483648
    %v2826 = vxor.u32 %v2746, 2147483648
    %v2827 = vxor.u32 %v2747, 2147483648
    %v2828 = vmul.f32 %v2822, 1.442695
    %v2829 = vpow.pop %v2828
    %v2830 = vmul.f32 %v2823, 1.442695
    %v2831 = vpow.pop %v2830
    %v2832 = vmul.f32 %v2824, 1.442695
    %v2833 = vpow.pop %v2832
    %v2834 = vmul.f32 %v2825, 1.442695
    %v2835 = vpow.pop %v2834
    %v2836 = vmul.f32 %v2826, 1.442695
    %v2837 = vpow.pop %v2836
    %v2838 = vmul.f32 %v2827, 1.442695
    %v2839 = vpow.pop %v2838
    %v2840 = vadd.f32 %v2829, 1.0
    %v2841 = vadd.f32 %v2831, 1.0
    %v2842 = vadd.f32 %v2833, 1.0
    %v2843 = vadd.f32 %v2835, 1.0
    %v2844 = vadd.f32 %v2837, 1.0
    %v2845 = vadd.f32 %v2839, 1.0
    %v2846 = vrcp.pop %v2840
    %v2847 = vmul.f32 %v2840, %v2846
    %v2848 = vsub.f32 1.0, %v2847
    %v2849 = vmul.f32 %v2846, %v2848
    %v2850 = vadd.f32 %v2846, %v2849
    %vm2851 = vweird.f32 %v2840
    %vm2852 = vweird.f32 %v2846
    %vm2853 = vmor %vm2851, %vm2852
    %v2854 = vsel %vm2853, %v2846, %v2850
    %v2855 = vand.u32 2147483647, %v2840
    %vm2856 = vcmp.eq.f32.partialorder %v2855, 8.507059e+37
    %v2857 = vand.u32 %v2840, 2147483648
    %v2858 = vor.u32 1.1754944e-38, %v2857
    %v2859 = vsel %vm2856, %v2858, %v2854
    %v2860 = vmul.f32 1.0, %v2859
    %v2861 = vrcp.pop %v2841
    %v2862 = vmul.f32 %v2841, %v2861
    %v2863 = vsub.f32 1.0, %v2862
    %v2864 = vmul.f32 %v2861, %v2863
    %v2865 = vadd.f32 %v2861, %v2864
    %vm2866 = vweird.f32 %v2841
    %vm2867 = vweird.f32 %v2861
    %vm2868 = vmor %vm2866, %vm2867
    %v2869 = vsel %vm2868, %v2861, %v2865
    %v2870 = vand.u32 2147483647, %v2841
    %vm2871 = vcmp.eq.f32.partialorder %v2870, 8.507059e+37
    %v2872 = vand.u32 %v2841, 2147483648
    %v2873 = vor.u32 1.1754944e-38, %v2872
    %v2874 = vsel %vm2871, %v2873, %v2869
    %v2875 = vmul.f32 1.0, %v2874
    %v2876 = vrcp.pop %v2842
    %v2877 = vmul.f32 %v2842, %v2876
    %v2878 = vsub.f32 1.0, %v2877
    %v2879 = vmul.f32 %v2876, %v2878
    %v2880 = vadd.f32 %v2876, %v2879
    %vm2881 = vweird.f32 %v2842
    %vm2882 = vweird.f32 %v2876
    %vm2883 = vmor %vm2881, %vm2882
    %v2884 = vsel %vm2883, %v2876, %v2880
    %v2885 = vand.u32 2147483647, %v2842
    %vm2886 = vcmp.eq.f32.partialorder %v2885, 8.507059e+37
    %v2887 = vand.u32 %v2842, 2147483648
    %v2888 = vor.u32 1.1754944e-38, %v2887
    %v2889 = vsel %vm2886, %v2888, %v2884
    %v2890 = vmul.f32 1.0, %v2889
    %v2891 = vrcp.pop %v2843
    %v2892 = vmul.f32 %v2843, %v2891
    %v2893 = vsub.f32 1.0, %v2892
    %v2894 = vmul.f32 %v2891, %v2893
    %v2895 = vadd.f32 %v2891, %v2894
    %vm2896 = vweird.f32 %v2843
    %vm2897 = vweird.f32 %v2891
    %vm2898 = vmor %vm2896, %vm2897
    %v2899 = vsel %vm2898, %v2891, %v2895
    %v2900 = vand.u32 2147483647, %v2843
    %vm2901 = vcmp.eq.f32.partialorder %v2900, 8.507059e+37
    %v2902 = vand.u32 %v2843, 2147483648
    %v2903 = vor.u32 1.1754944e-38, %v2902
    %v2904 = vsel %vm2901, %v2903, %v2899
    %v2905 = vmul.f32 1.0, %v2904
    %v2906 = vrcp.pop %v2844
    %v2907 = vmul.f32 %v2844, %v2906
    %v2908 = vsub.f32 1.0, %v2907
    %v2909 = vmul.f32 %v2906, %v2908
    %v2910 = vadd.f32 %v2906, %v2909
    %vm2911 = vweird.f32 %v2844
    %vm2912 = vweird.f32 %v2906
    %vm2913 = vmor %vm2911, %vm2912
    %v2914 = vsel %vm2913, %v2906, %v2910
    %v2915 = vand.u32 2147483647, %v2844
    %vm2916 = vcmp.eq.f32.partialorder %v2915, 8.507059e+37
    %v2917 = vand.u32 %v2844, 2147483648
    %v2918 = vor.u32 1.1754944e-38, %v2917
    %v2919 = vsel %vm2916, %v2918, %v2914
    %v2920 = vmul.f32 1.0, %v2919
    %v2921 = vrcp.pop %v2845
    %v2922 = vmul.f32 %v2845, %v2921
    %v2923 = vsub.f32 1.0, %v2922
    %v2924 = vmul.f32 %v2921, %v2923
    %v2925 = vadd.f32 %v2921, %v2924
    %vm2926 = vweird.f32 %v2845
    %vm2927 = vweird.f32 %v2921
    %vm2928 = vmor %vm2926, %vm2927
    %v2929 = vsel %vm2928, %v2921, %v2925
    %v2930 = vand.u32 2147483647, %v2845
    %vm2931 = vcmp.eq.f32.partialorder %v2930, 8.507059e+37
    %v2932 = vand.u32 %v2845, 2147483648
    %v2933 = vor.u32 1.1754944e-38, %v2932
    %v2934 = vsel %vm2931, %v2933, %v2929
    %v2935 = vmul.f32 1.0, %v2934
    %v2936 = vtanh.pop %v2744
    %v2937 = vtanh.pop %v2748
    %v2938 = vmul.f32 %v2875, %v2540
    %v2939 = vmul.f32 %v2920, %v2541
    %v2940 = vmul.f32 %v2860, %v2936
    %v2941 = vmul.f32 %v2905, %v2937
    %v2942 = vadd.f32 %v2938, %v2940
    %v2943 = vadd.f32 %v2939, %v2941
    %v2944 = vtanh.pop %v2942
    %v2945 = vtanh.pop %v2943
    %v2946 = vmul.f32 %v2890, %v2944
    %v2947 = vmul.f32 %v2935, %v2945
    %v2948 = vxor.u32 %v2814, 2147483648
    %v2949 = vxor.u32 %v2815, 2147483648
    %v2950 = vxor.u32 %v2816, 2147483648
    %v2951 = vxor.u32 %v2818, 2147483648
    %v2952 = vxor.u32 %v2819, 2147483648
    %v2953 = vxor.u32 %v2820, 2147483648
    %v2954 = vmul.f32 %v2948, 1.442695
    %v2955 = vpow.pop %v2954
    %v2956 = vmul.f32 %v2949, 1.442695
    %v2957 = vpow.pop %v2956
    %v2958 = vmul.f32 %v2950, 1.442695
    %v2959 = vpow.pop %v2958
    %v2960 = vmul.f32 %v2951, 1.442695
    %v2961 = vpow.pop %v2960
    %v2962 = vmul.f32 %v2952, 1.442695
    %v2963 = vpow.pop %v2962
    %v2964 = vmul.f32 %v2953, 1.442695
    %v2965 = vpow.pop %v2964
    %v2966 = vadd.f32 %v2955, 1.0
    %v2967 = vadd.f32 %v2957, 1.0
    %v2968 = vadd.f32 %v2959, 1.0
    %v2969 = vadd.f32 %v2961, 1.0
    %v2970 = vadd.f32 %v2963, 1.0
    %v2971 = vadd.f32 %v2965, 1.0
    %v2972 = vrcp.pop %v2966
    %v2973 = vmul.f32 %v2966, %v2972
    %v2974 = vsub.f32 1.0, %v2973
    %v2975 = vmul.f32 %v2972, %v2974
    %v2976 = vadd.f32 %v2972, %v2975
    %vm2977 = vweird.f32 %v2966
    %vm2978 = vweird.f32 %v2972
    %vm2979 = vmor %vm2977, %vm2978
    %v2980 = vsel %vm2979, %v2972, %v2976
    %v2981 = vand.u32 2147483647, %v2966
    %vm2982 = vcmp.eq.f32.partialorder %v2981, 8.507059e+37
    %v2983 = vand.u32 %v2966, 2147483648
    %v2984 = vor.u32 1.1754944e-38, %v2983
    %v2985 = vsel %vm2982, %v2984, %v2980
    %v2986 = vmul.f32 1.0, %v2985
    %v2987 = vrcp.pop %v2967
    %v2988 = vmul.f32 %v2967, %v2987
    %v2989 = vsub.f32 1.0, %v2988
    %v2990 = vmul.f32 %v2987, %v2989
    %v2991 = vadd.f32 %v2987, %v2990
    %vm2992 = vweird.f32 %v2967
    %vm2993 = vweird.f32 %v2987
    %vm2994 = vmor %vm2992, %vm2993
    %v2995 = vsel %vm2994, %v2987, %v2991
    %v2996 = vand.u32 2147483647, %v2967
    %vm2997 = vcmp.eq.f32.partialorder %v2996, 8.507059e+37
    %v2998 = vand.u32 %v2967, 2147483648
    %v2999 = vor.u32 1.1754944e-38, %v2998
    %v3000 = vsel %vm2997, %v2999, %v2995
    %v3001 = vmul.f32 1.0, %v3000
    %v3002 = vrcp.pop %v2968
    %v3003 = vmul.f32 %v2968, %v3002
    %v3004 = vsub.f32 1.0, %v3003
    %v3005 = vmul.f32 %v3002, %v3004
    %v3006 = vadd.f32 %v3002, %v3005
    %vm3007 = vweird.f32 %v2968
    %vm3008 = vweird.f32 %v3002
    %vm3009 = vmor %vm3007, %vm3008
    %v3010 = vsel %vm3009, %v3002, %v3006
    %v3011 = vand.u32 2147483647, %v2968
    %vm3012 = vcmp.eq.f32.partialorder %v3011, 8.507059e+37
    %v3013 = vand.u32 %v2968, 2147483648
    %v3014 = vor.u32 1.1754944e-38, %v3013
    %v3015 = vsel %vm3012, %v3014, %v3010
    %v3016 = vmul.f32 1.0, %v3015
    %v3017 = vrcp.pop %v2969
    %v3018 = vmul.f32 %v2969, %v3017
    %v3019 = vsub.f32 1.0, %v3018
    %v3020 = vmul.f32 %v3017, %v3019
    %v3021 = vadd.f32 %v3017, %v3020
    %vm3022 = vweird.f32 %v2969
    %vm3023 = vweird.f32 %v3017
    %vm3024 = vmor %vm3022, %vm3023
    %v3025 = vsel %vm3024, %v3017, %v3021
    %v3026 = vand.u32 2147483647, %v2969
    %vm3027 = vcmp.eq.f32.partialorder %v3026, 8.507059e+37
    %v3028 = vand.u32 %v2969, 2147483648
    %v3029 = vor.u32 1.1754944e-38, %v3028
    %v3030 = vsel %vm3027, %v3029, %v3025
    %v3031 = vmul.f32 1.0, %v3030
    %v3032 = vrcp.pop %v2970
    %v3033 = vmul.f32 %v2970, %v3032
    %v3034 = vsub.f32 1.0, %v3033
    %v3035 = vmul.f32 %v3032, %v3034
    %v3036 = vadd.f32 %v3032, %v3035
    %vm3037 = vweird.f32 %v2970
    %vm3038 = vweird.f32 %v3032
    %vm3039 = vmor %vm3037, %vm3038
    %v3040 = vsel %vm3039, %v3032, %v3036
    %v3041 = vand.u32 2147483647, %v2970
    %vm3042 = vcmp.eq.f32.partialorder %v3041, 8.507059e+37
    %v3043 = vand.u32 %v2970, 2147483648
    %v3044 = vor.u32 1.1754944e-38, %v3043
    %v3045 = vsel %vm3042, %v3044, %v3040
    %v3046 = vmul.f32 1.0, %v3045
    %v3047 = vrcp.pop %v2971
    %v3048 = vmul.f32 %v2971, %v3047
    %v3049 = vsub.f32 1.0, %v3048
    %v3050 = vmul.f32 %v3047, %v3049
    %v3051 = vadd.f32 %v3047, %v3050
    %vm3052 = vweird.f32 %v2971
    %vm3053 = vweird.f32 %v3047
    %vm3054 = vmor %vm3052, %vm3053
    %v3055 = vsel %vm3054, %v3047, %v3051
    %v3056 = vand.u32 2147483647, %v2971
    %vm3057 = vcmp.eq.f32.partialorder %v3056, 8.507059e+37
    %v3058 = vand.u32 %v2971, 2147483648
    %v3059 = vor.u32 1.1754944e-38, %v3058
    %v3060 = vsel %vm3057, %v3059, %v3055
    %v3061 = vmul.f32 1.0, %v3060
    %v3062 = vtanh.pop %v2817
    %v3063 = vtanh.pop %v2821
    %v3064 = vmul.f32 %v3001, %v2666
    %v3065 = vmul.f32 %v3046, %v2667
    %v3066 = vmul.f32 %v2986, %v3062
    %v3067 = vmul.f32 %v3031, %v3063
    %v3068 = vadd.f32 %v3064, %v3066
    %v3069 = vadd.f32 %v3065, %v3067
    %v3070 = vtanh.pop %v3068
    %v3071 = vtanh.pop %v3069
    %v3072 = vmul.f32 %v3016, %v3070
    %v3073 = vmul.f32 %v3061, %v3071
    %v3074 = vadd.f32 %v2672, %v2946
    %v3075 = vadd.f32 %v2673, %v2947
    %v3076 = vadd.f32 %v2674, %v3072
    %v3077 = vadd.f32 %v2675, %v3073
    %v3078 = vld [vmem:[#allocation2 + $0x80] sm:$0xff]
    %v3079 = vld [vmem:[#allocation2 + $0x88] sm:$0xff]
    %v3080 = vld [vmem:[#allocation2 + $0x90] sm:$0xff]
    %v3081 = vld [vmem:[#allocation2 + $0x98] sm:$0xff]
    %v3082 = vld [vmem:[#allocation2 + $0xa0] sm:$0xff]
    %v3083 = vld [vmem:[#allocation2 + $0xa8] sm:$0xff]
    %v3084 = vld [vmem:[#allocation2 + $0xb0] sm:$0xff]
    %v3085 = vld [vmem:[#allocation2 + $0xb8] sm:$0xff]
    %v3086 = vpack.c.bf16 %v2947, %v2946
    %3087 = vmatpush.bf16.msra.mxu0 %v2088
    %3088 = vmatpush.bf16.msra.mxu0 %v2084
    %3089 = vmatpush.bf16.msra.mxu0 %v2080
    %3090 = vmatpush.bf16.msra.mxu0 %v2076
    %3091 = vmatpush.bf16.msra.mxu0 %v2072
    %3092 = vmatpush.bf16.msra.mxu0 %v2068
    %3093 = vmatpush.bf16.msra.mxu0 %v2064
    %3094 = vmatpush.bf16.msra.mxu0 %v2060
    %3095 = vmatmul.bf16.gmra.mxu0 %v3086
    %v3096 = vpop.f32.mrf.mxu0
    %v3097 = vadd.f32 0.0, %v3096
    %v3098 = vpop.f32.mrf.mxu0
    %v3099 = vadd.f32 0.0, %v3098
    %3100 = vdwg.mxu0
    %3101 = vmatpush.bf16.msra.mxu0 %v2089
    %3102 = vmatpush.bf16.msra.mxu0 %v2085
    %3103 = vmatpush.bf16.msra.mxu0 %v2081
    %3104 = vmatpush.bf16.msra.mxu0 %v2077
    %3105 = vmatpush.bf16.msra.mxu0 %v2073
    %3106 = vmatpush.bf16.msra.mxu0 %v2069
    %3107 = vmatpush.bf16.msra.mxu0 %v2065
    %3108 = vmatpush.bf16.msra.mxu0 %v2061
    %3109 = vmatmul.bf16.gmra.mxu0 %v3086
    %v3110 = vpop.f32.mrf.mxu0
    %v3111 = vadd.f32 0.0, %v3110
    %v3112 = vpop.f32.mrf.mxu0
    %v3113 = vadd.f32 0.0, %v3112
    %3114 = vdwg.mxu0
    %3115 = vmatpush.bf16.msra.mxu0 %v2090
    %3116 = vmatpush.bf16.msra.mxu0 %v2086
    %3117 = vmatpush.bf16.msra.mxu0 %v2082
    %3118 = vmatpush.bf16.msra.mxu0 %v2078
    %3119 = vmatpush.bf16.msra.mxu0 %v2074
    %3120 = vmatpush.bf16.msra.mxu0 %v2070
    %3121 = vmatpush.bf16.msra.mxu0 %v2066
    %3122 = vmatpush.bf16.msra.mxu0 %v2062
    %3123 = vmatmul.bf16.gmra.mxu0 %v3086
    %v3124 = vpop.f32.mrf.mxu0
    %v3125 = vadd.f32 0.0, %v3124
    %v3126 = vpop.f32.mrf.mxu0
    %v3127 = vadd.f32 0.0, %v3126
    %3128 = vdwg.mxu0
    %3129 = vmatpush.bf16.msra.mxu0 %v2091
    %3130 = vmatpush.bf16.msra.mxu0 %v2087
    %3131 = vmatpush.bf16.msra.mxu0 %v2083
    %3132 = vmatpush.bf16.msra.mxu0 %v2079
    %3133 = vmatpush.bf16.msra.mxu0 %v2075
    %3134 = vmatpush.bf16.msra.mxu0 %v2071
    %3135 = vmatpush.bf16.msra.mxu0 %v2067
    %3136 = vmatpush.bf16.msra.mxu0 %v2063
    %3137 = vmatmul.bf16.gmra.mxu0 %v3086
    %v3138 = vpop.f32.mrf.mxu0
    %v3139 = vadd.f32 0.0, %v3138
    %v3140 = vpop.f32.mrf.mxu0
    %v3141 = vadd.f32 0.0, %v3140
    %3142 = vdwg.mxu0
    %v3143 = vadd.f32 %v3078, %v3097
    %v3144 = vadd.f32 %v3079, %v3111
    %v3145 = vadd.f32 %v3080, %v3125
    %v3146 = vadd.f32 %v3081, %v3139
    %v3147 = vadd.f32 %v3082, %v3099
    %v3148 = vadd.f32 %v3083, %v3113
    %v3149 = vadd.f32 %v3084, %v3127
    %v3150 = vadd.f32 %v3085, %v3141
    %v3151 = vld [vmem:[#allocation3 + $0x140] sm:$0xff]
    %v3152 = vld [vmem:[#allocation3 + $0x148] sm:$0xff]
    %v3153 = vld [vmem:[#allocation3 + $0x150] sm:$0xff]
    %v3154 = vld [vmem:[#allocation3 + $0x158] sm:$0xff]
    %v3155 = vld [vmem:[#allocation3 + $0x160] sm:$0xff]
    %v3156 = vld [vmem:[#allocation3 + $0x168] sm:$0xff]
    %v3157 = vld [vmem:[#allocation3 + $0x170] sm:$0xff]
    %v3158 = vld [vmem:[#allocation3 + $0x178] sm:$0xff]
    %v3159 = vpack.c.bf16 %v3073, %v3072
    %3160 = vmatpush.bf16.msra.mxu0 %v2320
    %3161 = vmatpush.bf16.msra.mxu0 %v2316
    %3162 = vmatpush.bf16.msra.mxu0 %v2312
    %3163 = vmatpush.bf16.msra.mxu0 %v2308
    %3164 = vmatpush.bf16.msra.mxu0 %v2304
    %3165 = vmatpush.bf16.msra.mxu0 %v2300
    %3166 = vmatpush.bf16.msra.mxu0 %v2296
    %3167 = vmatpush.bf16.msra.mxu0 %v2292
    %3168 = vmatmul.bf16.gmra.mxu0 %v3159
    %v3169 = vpop.f32.mrf.mxu0
    %v3170 = vadd.f32 0.0, %v3169
    %v3171 = vpop.f32.mrf.mxu0
    %v3172 = vadd.f32 0.0, %v3171
    %3173 = vdwg.mxu0
    %3174 = vmatpush.bf16.msra.mxu0 %v2321
    %3175 = vmatpush.bf16.msra.mxu0 %v2317
    %3176 = vmatpush.bf16.msra.mxu0 %v2313
    %3177 = vmatpush.bf16.msra.mxu0 %v2309
    %3178 = vmatpush.bf16.msra.mxu0 %v2305
    %3179 = vmatpush.bf16.msra.mxu0 %v2301
    %3180 = vmatpush.bf16.msra.mxu0 %v2297
    %3181 = vmatpush.bf16.msra.mxu0 %v2293
    %3182 = vmatmul.bf16.gmra.mxu0 %v3159
    %v3183 = vpop.f32.mrf.mxu0
    %v3184 = vadd.f32 0.0, %v3183
    %v3185 = vpop.f32.mrf.mxu0
    %v3186 = vadd.f32 0.0, %v3185
    %3187 = vdwg.mxu0
    %3188 = vmatpush.bf16.msra.mxu0 %v2322
    %3189 = vmatpush.bf16.msra.mxu0 %v2318
    %3190 = vmatpush.bf16.msra.mxu0 %v2314
    %3191 = vmatpush.bf16.msra.mxu0 %v2310
    %3192 = vmatpush.bf16.msra.mxu0 %v2306
    %3193 = vmatpush.bf16.msra.mxu0 %v2302
    %3194 = vmatpush.bf16.msra.mxu0 %v2298
    %3195 = vmatpush.bf16.msra.mxu0 %v2294
    %3196 = vmatmul.bf16.gmra.mxu0 %v3159
    %v3197 = vpop.f32.mrf.mxu0
    %v3198 = vadd.f32 0.0, %v3197
    %v3199 = vpop.f32.mrf.mxu0
    %v3200 = vadd.f32 0.0, %v3199
    %3201 = vdwg.mxu0
    %3202 = vmatpush.bf16.msra.mxu0 %v2323
    %3203 = vmatpush.bf16.msra.mxu0 %v2319
    %3204 = vmatpush.bf16.msra.mxu0 %v2315
    %3205 = vmatpush.bf16.msra.mxu0 %v2311
    %3206 = vmatpush.bf16.msra.mxu0 %v2307
    %3207 = vmatpush.bf16.msra.mxu0 %v2303
    %3208 = vmatpush.bf16.msra.mxu0 %v2299
    %3209 = vmatpush.bf16.msra.mxu0 %v2295
    %3210 = vmatmul.bf16.gmra.mxu0 %v3159
    %v3211 = vpop.f32.mrf.mxu0
    %v3212 = vadd.f32 0.0, %v3211
    %v3213 = vpop.f32.mrf.mxu0
    %v3214 = vadd.f32 0.0, %v3213
    %3215 = vdwg.mxu0
    %v3216 = vadd.f32 %v3151, %v3170
    %v3217 = vadd.f32 %v3152, %v3184
    %v3218 = vadd.f32 %v3153, %v3198
    %v3219 = vadd.f32 %v3154, %v3212
    %v3220 = vadd.f32 %v3155, %v3172
    %v3221 = vadd.f32 %v3156, %v3186
    %v3222 = vadd.f32 %v3157, %v3200
    %v3223 = vadd.f32 %v3158, %v3214
    %v3224 = vxor.u32 %v3143, 2147483648
    %v3225 = vxor.u32 %v3144, 2147483648
    %v3226 = vxor.u32 %v3145, 2147483648
    %v3227 = vxor.u32 %v3147, 2147483648
    %v3228 = vxor.u32 %v3148, 2147483648
    %v3229 = vxor.u32 %v3149, 2147483648
    %v3230 = vmul.f32 %v3224, 1.442695
    %v3231 = vpow.pop %v3230
    %v3232 = vmul.f32 %v3225, 1.442695
    %v3233 = vpow.pop %v3232
    %v3234 = vmul.f32 %v3226, 1.442695
    %v3235 = vpow.pop %v3234
    %v3236 = vmul.f32 %v3227, 1.442695
    %v3237 = vpow.pop %v3236
    %v3238 = vmul.f32 %v3228, 1.442695
    %v3239 = vpow.pop %v3238
    %v3240 = vmul.f32 %v3229, 1.442695
    %v3241 = vpow.pop %v3240
    %v3242 = vadd.f32 %v3231, 1.0
    %v3243 = vadd.f32 %v3233, 1.0
    %v3244 = vadd.f32 %v3235, 1.0
    %v3245 = vadd.f32 %v3237, 1.0
    %v3246 = vadd.f32 %v3239, 1.0
    %v3247 = vadd.f32 %v3241, 1.0
    %v3248 = vrcp.pop %v3242
    %v3249 = vmul.f32 %v3242, %v3248
    %v3250 = vsub.f32 1.0, %v3249
    %v3251 = vmul.f32 %v3248, %v3250
    %v3252 = vadd.f32 %v3248, %v3251
    %vm3253 = vweird.f32 %v3242
    %vm3254 = vweird.f32 %v3248
    %vm3255 = vmor %vm3253, %vm3254
    %v3256 = vsel %vm3255, %v3248, %v3252
    %v3257 = vand.u32 2147483647, %v3242
    %vm3258 = vcmp.eq.f32.partialorder %v3257, 8.507059e+37
    %v3259 = vand.u32 %v3242, 2147483648
    %v3260 = vor.u32 1.1754944e-38, %v3259
    %v3261 = vsel %vm3258, %v3260, %v3256
    %v3262 = vmul.f32 1.0, %v3261
    %v3263 = vrcp.pop %v3243
    %v3264 = vmul.f32 %v3243, %v3263
    %v3265 = vsub.f32 1.0, %v3264
    %v3266 = vmul.f32 %v3263, %v3265
    %v3267 = vadd.f32 %v3263, %v3266
    %vm3268 = vweird.f32 %v3243
    %vm3269 = vweird.f32 %v3263
    %vm3270 = vmor %vm3268, %vm3269
    %v3271 = vsel %vm3270, %v3263, %v3267
    %v3272 = vand.u32 2147483647, %v3243
    %vm3273 = vcmp.eq.f32.partialorder %v3272, 8.507059e+37
    %v3274 = vand.u32 %v3243, 2147483648
    %v3275 = vor.u32 1.1754944e-38, %v3274
    %v3276 = vsel %vm3273, %v3275, %v3271
    %v3277 = vmul.f32 1.0, %v3276
    %v3278 = vrcp.pop %v3244
    %v3279 = vmul.f32 %v3244, %v3278
    %v3280 = vsub.f32 1.0, %v3279
    %v3281 = vmul.f32 %v3278, %v3280
    %v3282 = vadd.f32 %v3278, %v3281
    %vm3283 = vweird.f32 %v3244
    %vm3284 = vweird.f32 %v3278
    %vm3285 = vmor %vm3283, %vm3284
    %v3286 = vsel %vm3285, %v3278, %v3282
    %v3287 = vand.u32 2147483647, %v3244
    %vm3288 = vcmp.eq.f32.partialorder %v3287, 8.507059e+37
    %v3289 = vand.u32 %v3244, 2147483648
    %v3290 = vor.u32 1.1754944e-38, %v3289
    %v3291 = vsel %vm3288, %v3290, %v3286
    %v3292 = vmul.f32 1.0, %v3291
    %v3293 = vrcp.pop %v3245
    %v3294 = vmul.f32 %v3245, %v3293
    %v3295 = vsub.f32 1.0, %v3294
    %v3296 = vmul.f32 %v3293, %v3295
    %v3297 = vadd.f32 %v3293, %v3296
    %vm3298 = vweird.f32 %v3245
    %vm3299 = vweird.f32 %v3293
    %vm3300 = vmor %vm3298, %vm3299
    %v3301 = vsel %vm3300, %v3293, %v3297
    %v3302 = vand.u32 2147483647, %v3245
    %vm3303 = vcmp.eq.f32.partialorder %v3302, 8.507059e+37
    %v3304 = vand.u32 %v3245, 2147483648
    %v3305 = vor.u32 1.1754944e-38, %v3304
    %v3306 = vsel %vm3303, %v3305, %v3301
    %v3307 = vmul.f32 1.0, %v3306
    %v3308 = vrcp.pop %v3246
    %v3309 = vmul.f32 %v3246, %v3308
    %v3310 = vsub.f32 1.0, %v3309
    %v3311 = vmul.f32 %v3308, %v3310
    %v3312 = vadd.f32 %v3308, %v3311
    %vm3313 = vweird.f32 %v3246
    %vm3314 = vweird.f32 %v3308
    %vm3315 = vmor %vm3313, %vm3314
    %v3316 = vsel %vm3315, %v3308, %v3312
    %v3317 = vand.u32 2147483647, %v3246
    %vm3318 = vcmp.eq.f32.partialorder %v3317, 8.507059e+37
    %v3319 = vand.u32 %v3246, 2147483648
    %v3320 = vor.u32 1.1754944e-38, %v3319
    %v3321 = vsel %vm3318, %v3320, %v3316
    %v3322 = vmul.f32 1.0, %v3321
    %v3323 = vrcp.pop %v3247
    %v3324 = vmul.f32 %v3247, %v3323
    %v3325 = vsub.f32 1.0, %v3324
    %v3326 = vmul.f32 %v3323, %v3325
    %v3327 = vadd.f32 %v3323, %v3326
    %vm3328 = vweird.f32 %v3247
    %vm3329 = vweird.f32 %v3323
    %vm3330 = vmor %vm3328, %vm3329
    %v3331 = vsel %vm3330, %v3323, %v3327
    %v3332 = vand.u32 2147483647, %v3247
    %vm3333 = vcmp.eq.f32.partialorder %v3332, 8.507059e+37
    %v3334 = vand.u32 %v3247, 2147483648
    %v3335 = vor.u32 1.1754944e-38, %v3334
    %v3336 = vsel %vm3333, %v3335, %v3331
    %v3337 = vmul.f32 1.0, %v3336
    %v3338 = vtanh.pop %v3146
    %v3339 = vtanh.pop %v3150
    %v3340 = vmul.f32 %v3277, %v2942
    %v3341 = vmul.f32 %v3322, %v2943
    %v3342 = vmul.f32 %v3262, %v3338
    %v3343 = vmul.f32 %v3307, %v3339
    %v3344 = vadd.f32 %v3340, %v3342
    %v3345 = vadd.f32 %v3341, %v3343
    %v3346 = vtanh.pop %v3344
    %v3347 = vtanh.pop %v3345
    %v3348 = vmul.f32 %v3292, %v3346
    %v3349 = vmul.f32 %v3337, %v3347
    %v3350 = vxor.u32 %v3216, 2147483648
    %v3351 = vxor.u32 %v3217, 2147483648
    %v3352 = vxor.u32 %v3218, 2147483648
    %v3353 = vxor.u32 %v3220, 2147483648
    %v3354 = vxor.u32 %v3221, 2147483648
    %v3355 = vxor.u32 %v3222, 2147483648
    %v3356 = vmul.f32 %v3350, 1.442695
    %v3357 = vpow.pop %v3356
    %v3358 = vmul.f32 %v3351, 1.442695
    %v3359 = vpow.pop %v3358
    %v3360 = vmul.f32 %v3352, 1.442695
    %v3361 = vpow.pop %v3360
    %v3362 = vmul.f32 %v3353, 1.442695
    %v3363 = vpow.pop %v3362
    %v3364 = vmul.f32 %v3354, 1.442695
    %v3365 = vpow.pop %v3364
    %v3366 = vmul.f32 %v3355, 1.442695
    %v3367 = vpow.pop %v3366
    %v3368 = vadd.f32 %v3357, 1.0
    %v3369 = vadd.f32 %v3359, 1.0
    %v3370 = vadd.f32 %v3361, 1.0
    %v3371 = vadd.f32 %v3363, 1.0
    %v3372 = vadd.f32 %v3365, 1.0
    %v3373 = vadd.f32 %v3367, 1.0
    %v3374 = vrcp.pop %v3368
    %v3375 = vmul.f32 %v3368, %v3374
    %v3376 = vsub.f32 1.0, %v3375
    %v3377 = vmul.f32 %v3374, %v3376
    %v3378 = vadd.f32 %v3374, %v3377
    %vm3379 = vweird.f32 %v3368
    %vm3380 = vweird.f32 %v3374
    %vm3381 = vmor %vm3379, %vm3380
    %v3382 = vsel %vm3381, %v3374, %v3378
    %v3383 = vand.u32 2147483647, %v3368
    %vm3384 = vcmp.eq.f32.partialorder %v3383, 8.507059e+37
    %v3385 = vand.u32 %v3368, 2147483648
    %v3386 = vor.u32 1.1754944e-38, %v3385
    %v3387 = vsel %vm3384, %v3386, %v3382
    %v3388 = vmul.f32 1.0, %v3387
    %v3389 = vrcp.pop %v3369
    %v3390 = vmul.f32 %v3369, %v3389
    %v3391 = vsub.f32 1.0, %v3390
    %v3392 = vmul.f32 %v3389, %v3391
    %v3393 = vadd.f32 %v3389, %v3392
    %vm3394 = vweird.f32 %v3369
    %vm3395 = vweird.f32 %v3389
    %vm3396 = vmor %vm3394, %vm3395
    %v3397 = vsel %vm3396, %v3389, %v3393
    %v3398 = vand.u32 2147483647, %v3369
    %vm3399 = vcmp.eq.f32.partialorder %v3398, 8.507059e+37
    %v3400 = vand.u32 %v3369, 2147483648
    %v3401 = vor.u32 1.1754944e-38, %v3400
    %v3402 = vsel %vm3399, %v3401, %v3397
    %v3403 = vmul.f32 1.0, %v3402
    %v3404 = vrcp.pop %v3370
    %v3405 = vmul.f32 %v3370, %v3404
    %v3406 = vsub.f32 1.0, %v3405
    %v3407 = vmul.f32 %v3404, %v3406
    %v3408 = vadd.f32 %v3404, %v3407
    %vm3409 = vweird.f32 %v3370
    %vm3410 = vweird.f32 %v3404
    %vm3411 = vmor %vm3409, %vm3410
    %v3412 = vsel %vm3411, %v3404, %v3408
    %v3413 = vand.u32 2147483647, %v3370
    %vm3414 = vcmp.eq.f32.partialorder %v3413, 8.507059e+37
    %v3415 = vand.u32 %v3370, 2147483648
    %v3416 = vor.u32 1.1754944e-38, %v3415
    %v3417 = vsel %vm3414, %v3416, %v3412
    %v3418 = vmul.f32 1.0, %v3417
    %v3419 = vrcp.pop %v3371
    %v3420 = vmul.f32 %v3371, %v3419
    %v3421 = vsub.f32 1.0, %v3420
    %v3422 = vmul.f32 %v3419, %v3421
    %v3423 = vadd.f32 %v3419, %v3422
    %vm3424 = vweird.f32 %v3371
    %vm3425 = vweird.f32 %v3419
    %vm3426 = vmor %vm3424, %vm3425
    %v3427 = vsel %vm3426, %v3419, %v3423
    %v3428 = vand.u32 2147483647, %v3371
    %vm3429 = vcmp.eq.f32.partialorder %v3428, 8.507059e+37
    %v3430 = vand.u32 %v3371, 2147483648
    %v3431 = vor.u32 1.1754944e-38, %v3430
    %v3432 = vsel %vm3429, %v3431, %v3427
    %v3433 = vmul.f32 1.0, %v3432
    %v3434 = vrcp.pop %v3372
    %v3435 = vmul.f32 %v3372, %v3434
    %v3436 = vsub.f32 1.0, %v3435
    %v3437 = vmul.f32 %v3434, %v3436
    %v3438 = vadd.f32 %v3434, %v3437
    %vm3439 = vweird.f32 %v3372
    %vm3440 = vweird.f32 %v3434
    %vm3441 = vmor %vm3439, %vm3440
    %v3442 = vsel %vm3441, %v3434, %v3438
    %v3443 = vand.u32 2147483647, %v3372
    %vm3444 = vcmp.eq.f32.partialorder %v3443, 8.507059e+37
    %v3445 = vand.u32 %v3372, 2147483648
    %v3446 = vor.u32 1.1754944e-38, %v3445
    %v3447 = vsel %vm3444, %v3446, %v3442
    %v3448 = vmul.f32 1.0, %v3447
    %v3449 = vrcp.pop %v3373
    %v3450 = vmul.f32 %v3373, %v3449
    %v3451 = vsub.f32 1.0, %v3450
    %v3452 = vmul.f32 %v3449, %v3451
    %v3453 = vadd.f32 %v3449, %v3452
    %vm3454 = vweird.f32 %v3373
    %vm3455 = vweird.f32 %v3449
    %vm3456 = vmor %vm3454, %vm3455
    %v3457 = vsel %vm3456, %v3449, %v3453
    %v3458 = vand.u32 2147483647, %v3373
    %vm3459 = vcmp.eq.f32.partialorder %v3458, 8.507059e+37
    %v3460 = vand.u32 %v3373, 2147483648
    %v3461 = vor.u32 1.1754944e-38, %v3460
    %v3462 = vsel %vm3459, %v3461, %v3457
    %v3463 = vmul.f32 1.0, %v3462
    %v3464 = vtanh.pop %v3219
    %v3465 = vtanh.pop %v3223
    %v3466 = vmul.f32 %v3403, %v3068
    %v3467 = vmul.f32 %v3448, %v3069
    %v3468 = vmul.f32 %v3388, %v3464
    %v3469 = vmul.f32 %v3433, %v3465
    %v3470 = vadd.f32 %v3466, %v3468
    %v3471 = vadd.f32 %v3467, %v3469
    %v3472 = vtanh.pop %v3470
    %v3473 = vtanh.pop %v3471
    %v3474 = vmul.f32 %v3418, %v3472
    %v3475 = vmul.f32 %v3463, %v3473
    %v3476 = vadd.f32 %v3074, %v3348
    %v3477 = vadd.f32 %v3075, %v3349
    %v3478 = vadd.f32 %v3076, %v3474
    %v3479 = vadd.f32 %v3077, %v3475
    %v3480 = vld [vmem:[#allocation2 + $0xc0] sm:$0xff]
    %v3481 = vld [vmem:[#allocation2 + $0xc8] sm:$0xff]
    %v3482 = vld [vmem:[#allocation2 + $0xd0] sm:$0xff]
    %v3483 = vld [vmem:[#allocation2 + $0xd8] sm:$0xff]
    %v3484 = vld [vmem:[#allocation2 + $0xe0] sm:$0xff]
    %v3485 = vld [vmem:[#allocation2 + $0xe8] sm:$0xff]
    %v3486 = vld [vmem:[#allocation2 + $0xf0] sm:$0xff]
    %v3487 = vld [vmem:[#allocation2 + $0xf8] sm:$0xff]
    %v3488 = vpack.c.bf16 %v3349, %v3348
    %3489 = vmatpush.bf16.msra.mxu0 %v2088
    %3490 = vmatpush.bf16.msra.mxu0 %v2084
    %3491 = vmatpush.bf16.msra.mxu0 %v2080
    %3492 = vmatpush.bf16.msra.mxu0 %v2076
    %3493 = vmatpush.bf16.msra.mxu0 %v2072
    %3494 = vmatpush.bf16.msra.mxu0 %v2068
    %3495 = vmatpush.bf16.msra.mxu0 %v2064
    %3496 = vmatpush.bf16.msra.mxu0 %v2060
    %3497 = vmatmul.bf16.gmra.mxu0 %v3488
    %v3498 = vpop.f32.mrf.mxu0
    %v3499 = vadd.f32 0.0, %v3498
    %v3500 = vpop.f32.mrf.mxu0
    %v3501 = vadd.f32 0.0, %v3500
    %3502 = vdwg.mxu0
    %3503 = vmatpush.bf16.msra.mxu0 %v2089
    %3504 = vmatpush.bf16.msra.mxu0 %v2085
    %3505 = vmatpush.bf16.msra.mxu0 %v2081
    %3506 = vmatpush.bf16.msra.mxu0 %v2077
    %3507 = vmatpush.bf16.msra.mxu0 %v2073
    %3508 = vmatpush.bf16.msra.mxu0 %v2069
    %3509 = vmatpush.bf16.msra.mxu0 %v2065
    %3510 = vmatpush.bf16.msra.mxu0 %v2061
    %3511 = vmatmul.bf16.gmra.mxu0 %v3488
    %v3512 = vpop.f32.mrf.mxu0
    %v3513 = vadd.f32 0.0, %v3512
    %v3514 = vpop.f32.mrf.mxu0
    %v3515 = vadd.f32 0.0, %v3514
    %3516 = vdwg.mxu0
    %3517 = vmatpush.bf16.msra.mxu0 %v2090
    %3518 = vmatpush.bf16.msra.mxu0 %v2086
    %3519 = vmatpush.bf16.msra.mxu0 %v2082
    %3520 = vmatpush.bf16.msra.mxu0 %v2078
    %3521 = vmatpush.bf16.msra.mxu0 %v2074
    %3522 = vmatpush.bf16.msra.mxu0 %v2070
    %3523 = vmatpush.bf16.msra.mxu0 %v2066
    %3524 = vmatpush.bf16.msra.mxu0 %v2062
    %3525 = vmatmul.bf16.gmra.mxu0 %v3488
    %v3526 = vpop.f32.mrf.mxu0
    %v3527 = vadd.f32 0.0, %v3526
    %v3528 = vpop.f32.mrf.mxu0
    %v3529 = vadd.f32 0.0, %v3528
    %3530 = vdwg.mxu0
    %3531 = vmatpush.bf16.msra.mxu0 %v2091
    %3532 = vmatpush.bf16.msra.mxu0 %v2087
    %3533 = vmatpush.bf16.msra.mxu0 %v2083
    %3534 = vmatpush.bf16.msra.mxu0 %v2079
    %3535 = vmatpush.bf16.msra.mxu0 %v2075
    %3536 = vmatpush.bf16.msra.mxu0 %v2071
    %3537 = vmatpush.bf16.msra.mxu0 %v2067
    %3538 = vmatpush.bf16.msra.mxu0 %v2063
    %3539 = vmatmul.bf16.gmra.mxu0 %v3488
    %v3540 = vpop.f32.mrf.mxu0
    %v3541 = vadd.f32 0.0, %v3540
    %v3542 = vpop.f32.mrf.mxu0
    %v3543 = vadd.f32 0.0, %v3542
    %3544 = vdwg.mxu0
    %v3545 = vadd.f32 %v3480, %v3499
    %v3546 = vadd.f32 %v3481, %v3513
    %v3547 = vadd.f32 %v3482, %v3527
    %v3548 = vadd.f32 %v3483, %v3541
    %v3549 = vadd.f32 %v3484, %v3501
    %v3550 = vadd.f32 %v3485, %v3515
    %v3551 = vadd.f32 %v3486, %v3529
    %v3552 = vadd.f32 %v3487, %v3543
    %v3553 = vld [vmem:[#allocation3 + $0x100] sm:$0xff]
    %v3554 = vld [vmem:[#allocation3 + $0x108] sm:$0xff]
    %v3555 = vld [vmem:[#allocation3 + $0x110] sm:$0xff]
    %v3556 = vld [vmem:[#allocation3 + $0x118] sm:$0xff]
    %v3557 = vld [vmem:[#allocation3 + $0x120] sm:$0xff]
    %v3558 = vld [vmem:[#allocation3 + $0x128] sm:$0xff]
    %v3559 = vld [vmem:[#allocation3 + $0x130] sm:$0xff]
    %v3560 = vld [vmem:[#allocation3 + $0x138] sm:$0xff]
    %v3561 = vpack.c.bf16 %v3475, %v3474
    %3562 = vmatpush.bf16.msra.mxu0 %v2320
    %3563 = vmatpush.bf16.msra.mxu0 %v2316
    %3564 = vmatpush.bf16.msra.mxu0 %v2312
    %3565 = vmatpush.bf16.msra.mxu0 %v2308
    %3566 = vmatpush.bf16.msra.mxu0 %v2304
    %3567 = vmatpush.bf16.msra.mxu0 %v2300
    %3568 = vmatpush.bf16.msra.mxu0 %v2296
    %3569 = vmatpush.bf16.msra.mxu0 %v2292
    %3570 = vmatmul.bf16.gmra.mxu0 %v3561
    %v3571 = vpop.f32.mrf.mxu0
    %v3572 = vadd.f32 0.0, %v3571
    %v3573 = vpop.f32.mrf.mxu0
    %v3574 = vadd.f32 0.0, %v3573
    %3575 = vdwg.mxu0
    %3576 = vmatpush.bf16.msra.mxu0 %v2321
    %3577 = vmatpush.bf16.msra.mxu0 %v2317
    %3578 = vmatpush.bf16.msra.mxu0 %v2313
    %3579 = vmatpush.bf16.msra.mxu0 %v2309
    %3580 = vmatpush.bf16.msra.mxu0 %v2305
    %3581 = vmatpush.bf16.msra.mxu0 %v2301
    %3582 = vmatpush.bf16.msra.mxu0 %v2297
    %3583 = vmatpush.bf16.msra.mxu0 %v2293
    %3584 = vmatmul.bf16.gmra.mxu0 %v3561
    %v3585 = vpop.f32.mrf.mxu0
    %v3586 = vadd.f32 0.0, %v3585
    %v3587 = vpop.f32.mrf.mxu0
    %v3588 = vadd.f32 0.0, %v3587
    %3589 = vdwg.mxu0
    %3590 = vmatpush.bf16.msra.mxu0 %v2322
    %3591 = vmatpush.bf16.msra.mxu0 %v2318
    %3592 = vmatpush.bf16.msra.mxu0 %v2314
    %3593 = vmatpush.bf16.msra.mxu0 %v2310
    %3594 = vmatpush.bf16.msra.mxu0 %v2306
    %3595 = vmatpush.bf16.msra.mxu0 %v2302
    %3596 = vmatpush.bf16.msra.mxu0 %v2298
    %3597 = vmatpush.bf16.msra.mxu0 %v2294
    %3598 = vmatmul.bf16.gmra.mxu0 %v3561
    %v3599 = vpop.f32.mrf.mxu0
    %v3600 = vadd.f32 0.0, %v3599
    %v3601 = vpop.f32.mrf.mxu0
    %v3602 = vadd.f32 0.0, %v3601
    %3603 = vdwg.mxu0
    %3604 = vmatpush.bf16.msra.mxu0 %v2323
    %3605 = vmatpush.bf16.msra.mxu0 %v2319
    %3606 = vmatpush.bf16.msra.mxu0 %v2315
    %3607 = vmatpush.bf16.msra.mxu0 %v2311
    %3608 = vmatpush.bf16.msra.mxu0 %v2307
    %3609 = vmatpush.bf16.msra.mxu0 %v2303
    %3610 = vmatpush.bf16.msra.mxu0 %v2299
    %3611 = vmatpush.bf16.msra.mxu0 %v2295
    %3612 = vmatmul.bf16.gmra.mxu0 %v3561
    %v3613 = vpop.f32.mrf.mxu0
    %v3614 = vadd.f32 0.0, %v3613
    %v3615 = vpop.f32.mrf.mxu0
    %v3616 = vadd.f32 0.0, %v3615
    %3617 = vdwg.mxu0
    %v3618 = vadd.f32 %v3553, %v3572
    %v3619 = vadd.f32 %v3554, %v3586
    %v3620 = vadd.f32 %v3555, %v3600
    %v3621 = vadd.f32 %v3556, %v3614
    %v3622 = vadd.f32 %v3557, %v3574
    %v3623 = vadd.f32 %v3558, %v3588
    %v3624 = vadd.f32 %v3559, %v3602
    %v3625 = vadd.f32 %v3560, %v3616
    %v3626 = vxor.u32 %v3545, 2147483648
    %v3627 = vxor.u32 %v3546, 2147483648
    %v3628 = vxor.u32 %v3547, 2147483648
    %v3629 = vxor.u32 %v3549, 2147483648
    %v3630 = vxor.u32 %v3550, 2147483648
    %v3631 = vxor.u32 %v3551, 2147483648
    %v3632 = vmul.f32 %v3626, 1.442695
    %v3633 = vpow.pop %v3632
    %v3634 = vmul.f32 %v3627, 1.442695
    %v3635 = vpow.pop %v3634
    %v3636 = vmul.f32 %v3628, 1.442695
    %v3637 = vpow.pop %v3636
    %v3638 = vmul.f32 %v3629, 1.442695
    %v3639 = vpow.pop %v3638
    %v3640 = vmul.f32 %v3630, 1.442695
    %v3641 = vpow.pop %v3640
    %v3642 = vmul.f32 %v3631, 1.442695
    %v3643 = vpow.pop %v3642
    %v3644 = vadd.f32 %v3633, 1.0
    %v3645 = vadd.f32 %v3635, 1.0
    %v3646 = vadd.f32 %v3637, 1.0
    %v3647 = vadd.f32 %v3639, 1.0
    %v3648 = vadd.f32 %v3641, 1.0
    %v3649 = vadd.f32 %v3643, 1.0
    %v3650 = vrcp.pop %v3644
    %v3651 = vmul.f32 %v3644, %v3650
    %v3652 = vsub.f32 1.0, %v3651
    %v3653 = vmul.f32 %v3650, %v3652
    %v3654 = vadd.f32 %v3650, %v3653
    %vm3655 = vweird.f32 %v3644
    %vm3656 = vweird.f32 %v3650
    %vm3657 = vmor %vm3655, %vm3656
    %v3658 = vsel %vm3657, %v3650, %v3654
    %v3659 = vand.u32 2147483647, %v3644
    %vm3660 = vcmp.eq.f32.partialorder %v3659, 8.507059e+37
    %v3661 = vand.u32 %v3644, 2147483648
    %v3662 = vor.u32 1.1754944e-38, %v3661
    %v3663 = vsel %vm3660, %v3662, %v3658
    %v3664 = vmul.f32 1.0, %v3663
    %v3665 = vrcp.pop %v3645
    %v3666 = vmul.f32 %v3645, %v3665
    %v3667 = vsub.f32 1.0, %v3666
    %v3668 = vmul.f32 %v3665, %v3667
    %v3669 = vadd.f32 %v3665, %v3668
    %vm3670 = vweird.f32 %v3645
    %vm3671 = vweird.f32 %v3665
    %vm3672 = vmor %vm3670, %vm3671
    %v3673 = vsel %vm3672, %v3665, %v3669
    %v3674 = vand.u32 2147483647, %v3645
    %vm3675 = vcmp.eq.f32.partialorder %v3674, 8.507059e+37
    %v3676 = vand.u32 %v3645, 2147483648
    %v3677 = vor.u32 1.1754944e-38, %v3676
    %v3678 = vsel %vm3675, %v3677, %v3673
    %v3679 = vmul.f32 1.0, %v3678
    %v3680 = vrcp.pop %v3646
    %v3681 = vmul.f32 %v3646, %v3680
    %v3682 = vsub.f32 1.0, %v3681
    %v3683 = vmul.f32 %v3680, %v3682
    %v3684 = vadd.f32 %v3680, %v3683
    %vm3685 = vweird.f32 %v3646
    %vm3686 = vweird.f32 %v3680
    %vm3687 = vmor %vm3685, %vm3686
    %v3688 = vsel %vm3687, %v3680, %v3684
    %v3689 = vand.u32 2147483647, %v3646
    %vm3690 = vcmp.eq.f32.partialorder %v3689, 8.507059e+37
    %v3691 = vand.u32 %v3646, 2147483648
    %v3692 = vor.u32 1.1754944e-38, %v3691
    %v3693 = vsel %vm3690, %v3692, %v3688
    %v3694 = vmul.f32 1.0, %v3693
    %v3695 = vrcp.pop %v3647
    %v3696 = vmul.f32 %v3647, %v3695
    %v3697 = vsub.f32 1.0, %v3696
    %v3698 = vmul.f32 %v3695, %v3697
    %v3699 = vadd.f32 %v3695, %v3698
    %vm3700 = vweird.f32 %v3647
    %vm3701 = vweird.f32 %v3695
    %vm3702 = vmor %vm3700, %vm3701
    %v3703 = vsel %vm3702, %v3695, %v3699
    %v3704 = vand.u32 2147483647, %v3647
    %vm3705 = vcmp.eq.f32.partialorder %v3704, 8.507059e+37
    %v3706 = vand.u32 %v3647, 2147483648
    %v3707 = vor.u32 1.1754944e-38, %v3706
    %v3708 = vsel %vm3705, %v3707, %v3703
    %v3709 = vmul.f32 1.0, %v3708
    %v3710 = vrcp.pop %v3648
    %v3711 = vmul.f32 %v3648, %v3710
    %v3712 = vsub.f32 1.0, %v3711
    %v3713 = vmul.f32 %v3710, %v3712
    %v3714 = vadd.f32 %v3710, %v3713
    %vm3715 = vweird.f32 %v3648
    %vm3716 = vweird.f32 %v3710
    %vm3717 = vmor %vm3715, %vm3716
    %v3718 = vsel %vm3717, %v3710, %v3714
    %v3719 = vand.u32 2147483647, %v3648
    %vm3720 = vcmp.eq.f32.partialorder %v3719, 8.507059e+37
    %v3721 = vand.u32 %v3648, 2147483648
    %v3722 = vor.u32 1.1754944e-38, %v3721
    %v3723 = vsel %vm3720, %v3722, %v3718
    %v3724 = vmul.f32 1.0, %v3723
    %v3725 = vrcp.pop %v3649
    %v3726 = vmul.f32 %v3649, %v3725
    %v3727 = vsub.f32 1.0, %v3726
    %v3728 = vmul.f32 %v3725, %v3727
    %v3729 = vadd.f32 %v3725, %v3728
    %vm3730 = vweird.f32 %v3649
    %vm3731 = vweird.f32 %v3725
    %vm3732 = vmor %vm3730, %vm3731
    %v3733 = vsel %vm3732, %v3725, %v3729
    %v3734 = vand.u32 2147483647, %v3649
    %vm3735 = vcmp.eq.f32.partialorder %v3734, 8.507059e+37
    %v3736 = vand.u32 %v3649, 2147483648
    %v3737 = vor.u32 1.1754944e-38, %v3736
    %v3738 = vsel %vm3735, %v3737, %v3733
    %v3739 = vmul.f32 1.0, %v3738
    %v3740 = vtanh.pop %v3548
    %v3741 = vtanh.pop %v3552
    %v3742 = vmul.f32 %v3679, %v3344
    %v3743 = vmul.f32 %v3724, %v3345
    %v3744 = vmul.f32 %v3664, %v3740
    %v3745 = vmul.f32 %v3709, %v3741
    %v3746 = vadd.f32 %v3742, %v3744
    %v3747 = vadd.f32 %v3743, %v3745
    %v3748 = vtanh.pop %v3746
    %v3749 = vtanh.pop %v3747
    %v3750 = vmul.f32 %v3694, %v3748
    %v3751 = vmul.f32 %v3739, %v3749
    %v3752 = vxor.u32 %v3618, 2147483648
    %v3753 = vxor.u32 %v3619, 2147483648
    %v3754 = vxor.u32 %v3620, 2147483648
    %v3755 = vxor.u32 %v3622, 2147483648
    %v3756 = vxor.u32 %v3623, 2147483648
    %v3757 = vxor.u32 %v3624, 2147483648
    %v3758 = vmul.f32 %v3752, 1.442695
    %v3759 = vpow.pop %v3758
    %v3760 = vmul.f32 %v3753, 1.442695
    %v3761 = vpow.pop %v3760
    %v3762 = vmul.f32 %v3754, 1.442695
    %v3763 = vpow.pop %v3762
    %v3764 = vmul.f32 %v3755, 1.442695
    %v3765 = vpow.pop %v3764
    %v3766 = vmul.f32 %v3756, 1.442695
    %v3767 = vpow.pop %v3766
    %v3768 = vmul.f32 %v3757, 1.442695
    %v3769 = vpow.pop %v3768
    %v3770 = vadd.f32 %v3759, 1.0
    %v3771 = vadd.f32 %v3761, 1.0
    %v3772 = vadd.f32 %v3763, 1.0
    %v3773 = vadd.f32 %v3765, 1.0
    %v3774 = vadd.f32 %v3767, 1.0
    %v3775 = vadd.f32 %v3769, 1.0
    %v3776 = vrcp.pop %v3770
    %v3777 = vmul.f32 %v3770, %v3776
    %v3778 = vsub.f32 1.0, %v3777
    %v3779 = vmul.f32 %v3776, %v3778
    %v3780 = vadd.f32 %v3776, %v3779
    %vm3781 = vweird.f32 %v3770
    %vm3782 = vweird.f32 %v3776
    %vm3783 = vmor %vm3781, %vm3782
    %v3784 = vsel %vm3783, %v3776, %v3780
    %v3785 = vand.u32 2147483647, %v3770
    %vm3786 = vcmp.eq.f32.partialorder %v3785, 8.507059e+37
    %v3787 = vand.u32 %v3770, 2147483648
    %v3788 = vor.u32 1.1754944e-38, %v3787
    %v3789 = vsel %vm3786, %v3788, %v3784
    %v3790 = vmul.f32 1.0, %v3789
    %v3791 = vrcp.pop %v3771
    %v3792 = vmul.f32 %v3771, %v3791
    %v3793 = vsub.f32 1.0, %v3792
    %v3794 = vmul.f32 %v3791, %v3793
    %v3795 = vadd.f32 %v3791, %v3794
    %vm3796 = vweird.f32 %v3771
    %vm3797 = vweird.f32 %v3791
    %vm3798 = vmor %vm3796, %vm3797
    %v3799 = vsel %vm3798, %v3791, %v3795
    %v3800 = vand.u32 2147483647, %v3771
    %vm3801 = vcmp.eq.f32.partialorder %v3800, 8.507059e+37
    %v3802 = vand.u32 %v3771, 2147483648
    %v3803 = vor.u32 1.1754944e-38, %v3802
    %v3804 = vsel %vm3801, %v3803, %v3799
    %v3805 = vmul.f32 1.0, %v3804
    %v3806 = vrcp.pop %v3772
    %v3807 = vmul.f32 %v3772, %v3806
    %v3808 = vsub.f32 1.0, %v3807
    %v3809 = vmul.f32 %v3806, %v3808
    %v3810 = vadd.f32 %v3806, %v3809
    %vm3811 = vweird.f32 %v3772
    %vm3812 = vweird.f32 %v3806
    %vm3813 = vmor %vm3811, %vm3812
    %v3814 = vsel %vm3813, %v3806, %v3810
    %v3815 = vand.u32 2147483647, %v3772
    %vm3816 = vcmp.eq.f32.partialorder %v3815, 8.507059e+37
    %v3817 = vand.u32 %v3772, 2147483648
    %v3818 = vor.u32 1.1754944e-38, %v3817
    %v3819 = vsel %vm3816, %v3818, %v3814
    %v3820 = vmul.f32 1.0, %v3819
    %v3821 = vrcp.pop %v3773
    %v3822 = vmul.f32 %v3773, %v3821
    %v3823 = vsub.f32 1.0, %v3822
    %v3824 = vmul.f32 %v3821, %v3823
    %v3825 = vadd.f32 %v3821, %v3824
    %vm3826 = vweird.f32 %v3773
    %vm3827 = vweird.f32 %v3821
    %vm3828 = vmor %vm3826, %vm3827
    %v3829 = vsel %vm3828, %v3821, %v3825
    %v3830 = vand.u32 2147483647, %v3773
    %vm3831 = vcmp.eq.f32.partialorder %v3830, 8.507059e+37
    %v3832 = vand.u32 %v3773, 2147483648
    %v3833 = vor.u32 1.1754944e-38, %v3832
    %v3834 = vsel %vm3831, %v3833, %v3829
    %v3835 = vmul.f32 1.0, %v3834
    %v3836 = vrcp.pop %v3774
    %v3837 = vmul.f32 %v3774, %v3836
    %v3838 = vsub.f32 1.0, %v3837
    %v3839 = vmul.f32 %v3836, %v3838
    %v3840 = vadd.f32 %v3836, %v3839
    %vm3841 = vweird.f32 %v3774
    %vm3842 = vweird.f32 %v3836
    %vm3843 = vmor %vm3841, %vm3842
    %v3844 = vsel %vm3843, %v3836, %v3840
    %v3845 = vand.u32 2147483647, %v3774
    %vm3846 = vcmp.eq.f32.partialorder %v3845, 8.507059e+37
    %v3847 = vand.u32 %v3774, 2147483648
    %v3848 = vor.u32 1.1754944e-38, %v3847
    %v3849 = vsel %vm3846, %v3848, %v3844
    %v3850 = vmul.f32 1.0, %v3849
    %v3851 = vrcp.pop %v3775
    %v3852 = vmul.f32 %v3775, %v3851
    %v3853 = vsub.f32 1.0, %v3852
    %v3854 = vmul.f32 %v3851, %v3853
    %v3855 = vadd.f32 %v3851, %v3854
    %vm3856 = vweird.f32 %v3775
    %vm3857 = vweird.f32 %v3851
    %vm3858 = vmor %vm3856, %vm3857
    %v3859 = vsel %vm3858, %v3851, %v3855
    %v3860 = vand.u32 2147483647, %v3775
    %vm3861 = vcmp.eq.f32.partialorder %v3860, 8.507059e+37
    %v3862 = vand.u32 %v3775, 2147483648
    %v3863 = vor.u32 1.1754944e-38, %v3862
    %v3864 = vsel %vm3861, %v3863, %v3859
    %v3865 = vmul.f32 1.0, %v3864
    %v3866 = vtanh.pop %v3621
    %v3867 = vtanh.pop %v3625
    %v3868 = vmul.f32 %v3805, %v3470
    %v3869 = vmul.f32 %v3850, %v3471
    %v3870 = vmul.f32 %v3790, %v3866
    %v3871 = vmul.f32 %v3835, %v3867
    %v3872 = vadd.f32 %v3868, %v3870
    %v3873 = vadd.f32 %v3869, %v3871
    %v3874 = vtanh.pop %v3872
    %v3875 = vtanh.pop %v3873
    %v3876 = vmul.f32 %v3820, %v3874
    %v3877 = vmul.f32 %v3865, %v3875
    %v3878 = vadd.f32 %v3476, %v3750
    %v3879 = vadd.f32 %v3477, %v3751
    %v3880 = vadd.f32 %v3478, %v3876
    %v3881 = vadd.f32 %v3479, %v3877
    %v3882 = vld [vmem:[#allocation2 + $0x100] sm:$0xff]
    %v3883 = vld [vmem:[#allocation2 + $0x108] sm:$0xff]
    %v3884 = vld [vmem:[#allocation2 + $0x110] sm:$0xff]
    %v3885 = vld [vmem:[#allocation2 + $0x118] sm:$0xff]
    %v3886 = vld [vmem:[#allocation2 + $0x120] sm:$0xff]
    %v3887 = vld [vmem:[#allocation2 + $0x128] sm:$0xff]
    %v3888 = vld [vmem:[#allocation2 + $0x130] sm:$0xff]
    %v3889 = vld [vmem:[#allocation2 + $0x138] sm:$0xff]
    %v3890 = vpack.c.bf16 %v3751, %v3750
    %3891 = vmatpush.bf16.msra.mxu0 %v2088
    %3892 = vmatpush.bf16.msra.mxu0 %v2084
    %3893 = vmatpush.bf16.msra.mxu0 %v2080
    %3894 = vmatpush.bf16.msra.mxu0 %v2076
    %3895 = vmatpush.bf16.msra.mxu0 %v2072
    %3896 = vmatpush.bf16.msra.mxu0 %v2068
    %3897 = vmatpush.bf16.msra.mxu0 %v2064
    %3898 = vmatpush.bf16.msra.mxu0 %v2060
    %3899 = vmatmul.bf16.gmra.mxu0 %v3890
    %v3900 = vpop.f32.mrf.mxu0
    %v3901 = vadd.f32 0.0, %v3900
    %v3902 = vpop.f32.mrf.mxu0
    %v3903 = vadd.f32 0.0, %v3902
    %3904 = vdwg.mxu0
    %3905 = vmatpush.bf16.msra.mxu0 %v2089
    %3906 = vmatpush.bf16.msra.mxu0 %v2085
    %3907 = vmatpush.bf16.msra.mxu0 %v2081
    %3908 = vmatpush.bf16.msra.mxu0 %v2077
    %3909 = vmatpush.bf16.msra.mxu0 %v2073
    %3910 = vmatpush.bf16.msra.mxu0 %v2069
    %3911 = vmatpush.bf16.msra.mxu0 %v2065
    %3912 = vmatpush.bf16.msra.mxu0 %v2061
    %3913 = vmatmul.bf16.gmra.mxu0 %v3890
    %v3914 = vpop.f32.mrf.mxu0
    %v3915 = vadd.f32 0.0, %v3914
    %v3916 = vpop.f32.mrf.mxu0
    %v3917 = vadd.f32 0.0, %v3916
    %3918 = vdwg.mxu0
    %3919 = vmatpush.bf16.msra.mxu0 %v2090
    %3920 = vmatpush.bf16.msra.mxu0 %v2086
    %3921 = vmatpush.bf16.msra.mxu0 %v2082
    %3922 = vmatpush.bf16.msra.mxu0 %v2078
    %3923 = vmatpush.bf16.msra.mxu0 %v2074
    %3924 = vmatpush.bf16.msra.mxu0 %v2070
    %3925 = vmatpush.bf16.msra.mxu0 %v2066
    %3926 = vmatpush.bf16.msra.mxu0 %v2062
    %3927 = vmatmul.bf16.gmra.mxu0 %v3890
    %v3928 = vpop.f32.mrf.mxu0
    %v3929 = vadd.f32 0.0, %v3928
    %v3930 = vpop.f32.mrf.mxu0
    %v3931 = vadd.f32 0.0, %v3930
    %3932 = vdwg.mxu0
    %3933 = vmatpush.bf16.msra.mxu0 %v2091
    %3934 = vmatpush.bf16.msra.mxu0 %v2087
    %3935 = vmatpush.bf16.msra.mxu0 %v2083
    %3936 = vmatpush.bf16.msra.mxu0 %v2079
    %3937 = vmatpush.bf16.msra.mxu0 %v2075
    %3938 = vmatpush.bf16.msra.mxu0 %v2071
    %3939 = vmatpush.bf16.msra.mxu0 %v2067
    %3940 = vmatpush.bf16.msra.mxu0 %v2063
    %3941 = vmatmul.bf16.gmra.mxu0 %v3890
    %v3942 = vpop.f32.mrf.mxu0
    %v3943 = vadd.f32 0.0, %v3942
    %v3944 = vpop.f32.mrf.mxu0
    %v3945 = vadd.f32 0.0, %v3944
    %3946 = vdwg.mxu0
    %v3947 = vadd.f32 %v3882, %v3901
    %v3948 = vadd.f32 %v3883, %v3915
    %v3949 = vadd.f32 %v3884, %v3929
    %v3950 = vadd.f32 %v3885, %v3943
    %v3951 = vadd.f32 %v3886, %v3903
    %v3952 = vadd.f32 %v3887, %v3917
    %v3953 = vadd.f32 %v3888, %v3931
    %v3954 = vadd.f32 %v3889, %v3945
    %v3955 = vld [vmem:[#allocation3 + $0xc0] sm:$0xff]
    %v3956 = vld [vmem:[#allocation3 + $0xc8] sm:$0xff]
    %v3957 = vld [vmem:[#allocation3 + $0xd0] sm:$0xff]
    %v3958 = vld [vmem:[#allocation3 + $0xd8] sm:$0xff]
    %v3959 = vld [vmem:[#allocation3 + $0xe0] sm:$0xff]
    %v3960 = vld [vmem:[#allocation3 + $0xe8] sm:$0xff]
    %v3961 = vld [vmem:[#allocation3 + $0xf0] sm:$0xff]
    %v3962 = vld [vmem:[#allocation3 + $0xf8] sm:$0xff]
    %v3963 = vpack.c.bf16 %v3877, %v3876
    %3964 = vmatpush.bf16.msra.mxu0 %v2320
    %3965 = vmatpush.bf16.msra.mxu0 %v2316
    %3966 = vmatpush.bf16.msra.mxu0 %v2312
    %3967 = vmatpush.bf16.msra.mxu0 %v2308
    %3968 = vmatpush.bf16.msra.mxu0 %v2304
    %3969 = vmatpush.bf16.msra.mxu0 %v2300
    %3970 = vmatpush.bf16.msra.mxu0 %v2296
    %3971 = vmatpush.bf16.msra.mxu0 %v2292
    %3972 = vmatmul.bf16.gmra.mxu0 %v3963
    %v3973 = vpop.f32.mrf.mxu0
    %v3974 = vadd.f32 0.0, %v3973
    %v3975 = vpop.f32.mrf.mxu0
    %v3976 = vadd.f32 0.0, %v3975
    %3977 = vdwg.mxu0
    %3978 = vmatpush.bf16.msra.mxu0 %v2321
    %3979 = vmatpush.bf16.msra.mxu0 %v2317
    %3980 = vmatpush.bf16.msra.mxu0 %v2313
    %3981 = vmatpush.bf16.msra.mxu0 %v2309
    %3982 = vmatpush.bf16.msra.mxu0 %v2305
    %3983 = vmatpush.bf16.msra.mxu0 %v2301
    %3984 = vmatpush.bf16.msra.mxu0 %v2297
    %3985 = vmatpush.bf16.msra.mxu0 %v2293
    %3986 = vmatmul.bf16.gmra.mxu0 %v3963
    %v3987 = vpop.f32.mrf.mxu0
    %v3988 = vadd.f32 0.0, %v3987
    %v3989 = vpop.f32.mrf.mxu0
    %v3990 = vadd.f32 0.0, %v3989
    %3991 = vdwg.mxu0
    %3992 = vmatpush.bf16.msra.mxu0 %v2322
    %3993 = vmatpush.bf16.msra.mxu0 %v2318
    %3994 = vmatpush.bf16.msra.mxu0 %v2314
    %3995 = vmatpush.bf16.msra.mxu0 %v2310
    %3996 = vmatpush.bf16.msra.mxu0 %v2306
    %3997 = vmatpush.bf16.msra.mxu0 %v2302
    %3998 = vmatpush.bf16.msra.mxu0 %v2298
    %3999 = vmatpush.bf16.msra.mxu0 %v2294
    %4000 = vmatmul.bf16.gmra.mxu0 %v3963
    %v4001 = vpop.f32.mrf.mxu0
    %v4002 = vadd.f32 0.0, %v4001
    %v4003 = vpop.f32.mrf.mxu0
    %v4004 = vadd.f32 0.0, %v4003
    %4005 = vdwg.mxu0
    %4006 = vmatpush.bf16.msra.mxu0 %v2323
    %4007 = vmatpush.bf16.msra.mxu0 %v2319
    %4008 = vmatpush.bf16.msra.mxu0 %v2315
    %4009 = vmatpush.bf16.msra.mxu0 %v2311
    %4010 = vmatpush.bf16.msra.mxu0 %v2307
    %4011 = vmatpush.bf16.msra.mxu0 %v2303
    %4012 = vmatpush.bf16.msra.mxu0 %v2299
    %4013 = vmatpush.bf16.msra.mxu0 %v2295
    %4014 = vmatmul.bf16.gmra.mxu0 %v3963
    %v4015 = vpop.f32.mrf.mxu0
    %v4016 = vadd.f32 0.0, %v4015
    %v4017 = vpop.f32.mrf.mxu0
    %v4018 = vadd.f32 0.0, %v4017
    %4019 = vdwg.mxu0
    %v4020 = vadd.f32 %v3955, %v3974
    %v4021 = vadd.f32 %v3956, %v3988
    %v4022 = vadd.f32 %v3957, %v4002
    %v4023 = vadd.f32 %v3958, %v4016
    %v4024 = vadd.f32 %v3959, %v3976
    %v4025 = vadd.f32 %v3960, %v3990
    %v4026 = vadd.f32 %v3961, %v4004
    %v4027 = vadd.f32 %v3962, %v4018
    %v4028 = vxor.u32 %v3947, 2147483648
    %v4029 = vxor.u32 %v3948, 2147483648
    %v4030 = vxor.u32 %v3949, 2147483648
    %v4031 = vxor.u32 %v3951, 2147483648
    %v4032 = vxor.u32 %v3952, 2147483648
    %v4033 = vxor.u32 %v3953, 2147483648
    %v4034 = vmul.f32 %v4028, 1.442695
    %v4035 = vpow.pop %v4034
    %v4036 = vmul.f32 %v4029, 1.442695
    %v4037 = vpow.pop %v4036
    %v4038 = vmul.f32 %v4030, 1.442695
    %v4039 = vpow.pop %v4038
    %v4040 = vmul.f32 %v4031, 1.442695
    %v4041 = vpow.pop %v4040
    %v4042 = vmul.f32 %v4032, 1.442695
    %v4043 = vpow.pop %v4042
    %v4044 = vmul.f32 %v4033, 1.442695
    %v4045 = vpow.pop %v4044
    %v4046 = vadd.f32 %v4035, 1.0
    %v4047 = vadd.f32 %v4037, 1.0
    %v4048 = vadd.f32 %v4039, 1.0
    %v4049 = vadd.f32 %v4041, 1.0
    %v4050 = vadd.f32 %v4043, 1.0
    %v4051 = vadd.f32 %v4045, 1.0
    %v4052 = vrcp.pop %v4046
    %v4053 = vmul.f32 %v4046, %v4052
    %v4054 = vsub.f32 1.0, %v4053
    %v4055 = vmul.f32 %v4052, %v4054
    %v4056 = vadd.f32 %v4052, %v4055
    %vm4057 = vweird.f32 %v4046
    %vm4058 = vweird.f32 %v4052
    %vm4059 = vmor %vm4057, %vm4058
    %v4060 = vsel %vm4059, %v4052, %v4056
    %v4061 = vand.u32 2147483647, %v4046
    %vm4062 = vcmp.eq.f32.partialorder %v4061, 8.507059e+37
    %v4063 = vand.u32 %v4046, 2147483648
    %v4064 = vor.u32 1.1754944e-38, %v4063
    %v4065 = vsel %vm4062, %v4064, %v4060
    %v4066 = vmul.f32 1.0, %v4065
    %v4067 = vrcp.pop %v4047
    %v4068 = vmul.f32 %v4047, %v4067
    %v4069 = vsub.f32 1.0, %v4068
    %v4070 = vmul.f32 %v4067, %v4069
    %v4071 = vadd.f32 %v4067, %v4070
    %vm4072 = vweird.f32 %v4047
    %vm4073 = vweird.f32 %v4067
    %vm4074 = vmor %vm4072, %vm4073
    %v4075 = vsel %vm4074, %v4067, %v4071
    %v4076 = vand.u32 2147483647, %v4047
    %vm4077 = vcmp.eq.f32.partialorder %v4076, 8.507059e+37
    %v4078 = vand.u32 %v4047, 2147483648
    %v4079 = vor.u32 1.1754944e-38, %v4078
    %v4080 = vsel %vm4077, %v4079, %v4075
    %v4081 = vmul.f32 1.0, %v4080
    %v4082 = vrcp.pop %v4048
    %v4083 = vmul.f32 %v4048, %v4082
    %v4084 = vsub.f32 1.0, %v4083
    %v4085 = vmul.f32 %v4082, %v4084
    %v4086 = vadd.f32 %v4082, %v4085
    %vm4087 = vweird.f32 %v4048
    %vm4088 = vweird.f32 %v4082
    %vm4089 = vmor %vm4087, %vm4088
    %v4090 = vsel %vm4089, %v4082, %v4086
    %v4091 = vand.u32 2147483647, %v4048
    %vm4092 = vcmp.eq.f32.partialorder %v4091, 8.507059e+37
    %v4093 = vand.u32 %v4048, 2147483648
    %v4094 = vor.u32 1.1754944e-38, %v4093
    %v4095 = vsel %vm4092, %v4094, %v4090
    %v4096 = vmul.f32 1.0, %v4095
    %v4097 = vrcp.pop %v4049
    %v4098 = vmul.f32 %v4049, %v4097
    %v4099 = vsub.f32 1.0, %v4098
    %v4100 = vmul.f32 %v4097, %v4099
    %v4101 = vadd.f32 %v4097, %v4100
    %vm4102 = vweird.f32 %v4049
    %vm4103 = vweird.f32 %v4097
    %vm4104 = vmor %vm4102, %vm4103
    %v4105 = vsel %vm4104, %v4097, %v4101
    %v4106 = vand.u32 2147483647, %v4049
    %vm4107 = vcmp.eq.f32.partialorder %v4106, 8.507059e+37
    %v4108 = vand.u32 %v4049, 2147483648
    %v4109 = vor.u32 1.1754944e-38, %v4108
    %v4110 = vsel %vm4107, %v4109, %v4105
    %v4111 = vmul.f32 1.0, %v4110
    %v4112 = vrcp.pop %v4050
    %v4113 = vmul.f32 %v4050, %v4112
    %v4114 = vsub.f32 1.0, %v4113
    %v4115 = vmul.f32 %v4112, %v4114
    %v4116 = vadd.f32 %v4112, %v4115
    %vm4117 = vweird.f32 %v4050
    %vm4118 = vweird.f32 %v4112
    %vm4119 = vmor %vm4117, %vm4118
    %v4120 = vsel %vm4119, %v4112, %v4116
    %v4121 = vand.u32 2147483647, %v4050
    %vm4122 = vcmp.eq.f32.partialorder %v4121, 8.507059e+37
    %v4123 = vand.u32 %v4050, 2147483648
    %v4124 = vor.u32 1.1754944e-38, %v4123
    %v4125 = vsel %vm4122, %v4124, %v4120
    %v4126 = vmul.f32 1.0, %v4125
    %v4127 = vrcp.pop %v4051
    %v4128 = vmul.f32 %v4051, %v4127
    %v4129 = vsub.f32 1.0, %v4128
    %v4130 = vmul.f32 %v4127, %v4129
    %v4131 = vadd.f32 %v4127, %v4130
    %vm4132 = vweird.f32 %v4051
    %vm4133 = vweird.f32 %v4127
    %vm4134 = vmor %vm4132, %vm4133
    %v4135 = vsel %vm4134, %v4127, %v4131
    %v4136 = vand.u32 2147483647, %v4051
    %vm4137 = vcmp.eq.f32.partialorder %v4136, 8.507059e+37
    %v4138 = vand.u32 %v4051, 2147483648
    %v4139 = vor.u32 1.1754944e-38, %v4138
    %v4140 = vsel %vm4137, %v4139, %v4135
    %v4141 = vmul.f32 1.0, %v4140
    %v4142 = vtanh.pop %v3950
    %v4143 = vtanh.pop %v3954
    %v4144 = vmul.f32 %v4081, %v3746
    %v4145 = vmul.f32 %v4126, %v3747
    %v4146 = vmul.f32 %v4066, %v4142
    %v4147 = vmul.f32 %v4111, %v4143
    %v4148 = vadd.f32 %v4144, %v4146
    %v4149 = vadd.f32 %v4145, %v4147
    %v4150 = vtanh.pop %v4148
    %v4151 = vtanh.pop %v4149
    %v4152 = vmul.f32 %v4096, %v4150
    %v4153 = vmul.f32 %v4141, %v4151
    %v4154 = vxor.u32 %v4020, 2147483648
    %v4155 = vxor.u32 %v4021, 2147483648
    %v4156 = vxor.u32 %v4022, 2147483648
    %v4157 = vxor.u32 %v4024, 2147483648
    %v4158 = vxor.u32 %v4025, 2147483648
    %v4159 = vxor.u32 %v4026, 2147483648
    %v4160 = vmul.f32 %v4154, 1.442695
    %v4161 = vpow.pop %v4160
    %v4162 = vmul.f32 %v4155, 1.442695
    %v4163 = vpow.pop %v4162
    %v4164 = vmul.f32 %v4156, 1.442695
    %v4165 = vpow.pop %v4164
    %v4166 = vmul.f32 %v4157, 1.442695
    %v4167 = vpow.pop %v4166
    %v4168 = vmul.f32 %v4158, 1.442695
    %v4169 = vpow.pop %v4168
    %v4170 = vmul.f32 %v4159, 1.442695
    %v4171 = vpow.pop %v4170
    %v4172 = vadd.f32 %v4161, 1.0
    %v4173 = vadd.f32 %v4163, 1.0
    %v4174 = vadd.f32 %v4165, 1.0
    %v4175 = vadd.f32 %v4167, 1.0
    %v4176 = vadd.f32 %v4169, 1.0
    %v4177 = vadd.f32 %v4171, 1.0
    %v4178 = vrcp.pop %v4172
    %v4179 = vmul.f32 %v4172, %v4178
    %v4180 = vsub.f32 1.0, %v4179
    %v4181 = vmul.f32 %v4178, %v4180
    %v4182 = vadd.f32 %v4178, %v4181
    %vm4183 = vweird.f32 %v4172
    %vm4184 = vweird.f32 %v4178
    %vm4185 = vmor %vm4183, %vm4184
    %v4186 = vsel %vm4185, %v4178, %v4182
    %v4187 = vand.u32 2147483647, %v4172
    %vm4188 = vcmp.eq.f32.partialorder %v4187, 8.507059e+37
    %v4189 = vand.u32 %v4172, 2147483648
    %v4190 = vor.u32 1.1754944e-38, %v4189
    %v4191 = vsel %vm4188, %v4190, %v4186
    %v4192 = vmul.f32 1.0, %v4191
    %v4193 = vrcp.pop %v4173
    %v4194 = vmul.f32 %v4173, %v4193
    %v4195 = vsub.f32 1.0, %v4194
    %v4196 = vmul.f32 %v4193, %v4195
    %v4197 = vadd.f32 %v4193, %v4196
    %vm4198 = vweird.f32 %v4173
    %vm4199 = vweird.f32 %v4193
    %vm4200 = vmor %vm4198, %vm4199
    %v4201 = vsel %vm4200, %v4193, %v4197
    %v4202 = vand.u32 2147483647, %v4173
    %vm4203 = vcmp.eq.f32.partialorder %v4202, 8.507059e+37
    %v4204 = vand.u32 %v4173, 2147483648
    %v4205 = vor.u32 1.1754944e-38, %v4204
    %v4206 = vsel %vm4203, %v4205, %v4201
    %v4207 = vmul.f32 1.0, %v4206
    %v4208 = vrcp.pop %v4174
    %v4209 = vmul.f32 %v4174, %v4208
    %v4210 = vsub.f32 1.0, %v4209
    %v4211 = vmul.f32 %v4208, %v4210
    %v4212 = vadd.f32 %v4208, %v4211
    %vm4213 = vweird.f32 %v4174
    %vm4214 = vweird.f32 %v4208
    %vm4215 = vmor %vm4213, %vm4214
    %v4216 = vsel %vm4215, %v4208, %v4212
    %v4217 = vand.u32 2147483647, %v4174
    %vm4218 = vcmp.eq.f32.partialorder %v4217, 8.507059e+37
    %v4219 = vand.u32 %v4174, 2147483648
    %v4220 = vor.u32 1.1754944e-38, %v4219
    %v4221 = vsel %vm4218, %v4220, %v4216
    %v4222 = vmul.f32 1.0, %v4221
    %v4223 = vrcp.pop %v4175
    %v4224 = vmul.f32 %v4175, %v4223
    %v4225 = vsub.f32 1.0, %v4224
    %v4226 = vmul.f32 %v4223, %v4225
    %v4227 = vadd.f32 %v4223, %v4226
    %vm4228 = vweird.f32 %v4175
    %vm4229 = vweird.f32 %v4223
    %vm4230 = vmor %vm4228, %vm4229
    %v4231 = vsel %vm4230, %v4223, %v4227
    %v4232 = vand.u32 2147483647, %v4175
    %vm4233 = vcmp.eq.f32.partialorder %v4232, 8.507059e+37
    %v4234 = vand.u32 %v4175, 2147483648
    %v4235 = vor.u32 1.1754944e-38, %v4234
    %v4236 = vsel %vm4233, %v4235, %v4231
    %v4237 = vmul.f32 1.0, %v4236
    %v4238 = vrcp.pop %v4176
    %v4239 = vmul.f32 %v4176, %v4238
    %v4240 = vsub.f32 1.0, %v4239
    %v4241 = vmul.f32 %v4238, %v4240
    %v4242 = vadd.f32 %v4238, %v4241
    %vm4243 = vweird.f32 %v4176
    %vm4244 = vweird.f32 %v4238
    %vm4245 = vmor %vm4243, %vm4244
    %v4246 = vsel %vm4245, %v4238, %v4242
    %v4247 = vand.u32 2147483647, %v4176
    %vm4248 = vcmp.eq.f32.partialorder %v4247, 8.507059e+37
    %v4249 = vand.u32 %v4176, 2147483648
    %v4250 = vor.u32 1.1754944e-38, %v4249
    %v4251 = vsel %vm4248, %v4250, %v4246
    %v4252 = vmul.f32 1.0, %v4251
    %v4253 = vrcp.pop %v4177
    %v4254 = vmul.f32 %v4177, %v4253
    %v4255 = vsub.f32 1.0, %v4254
    %v4256 = vmul.f32 %v4253, %v4255
    %v4257 = vadd.f32 %v4253, %v4256
    %vm4258 = vweird.f32 %v4177
    %vm4259 = vweird.f32 %v4253
    %vm4260 = vmor %vm4258, %vm4259
    %v4261 = vsel %vm4260, %v4253, %v4257
    %v4262 = vand.u32 2147483647, %v4177
    %vm4263 = vcmp.eq.f32.partialorder %v4262, 8.507059e+37
    %v4264 = vand.u32 %v4177, 2147483648
    %v4265 = vor.u32 1.1754944e-38, %v4264
    %v4266 = vsel %vm4263, %v4265, %v4261
    %v4267 = vmul.f32 1.0, %v4266
    %v4268 = vtanh.pop %v4023
    %v4269 = vtanh.pop %v4027
    %v4270 = vmul.f32 %v4207, %v3872
    %v4271 = vmul.f32 %v4252, %v3873
    %v4272 = vmul.f32 %v4192, %v4268
    %v4273 = vmul.f32 %v4237, %v4269
    %v4274 = vadd.f32 %v4270, %v4272
    %v4275 = vadd.f32 %v4271, %v4273
    %v4276 = vtanh.pop %v4274
    %v4277 = vtanh.pop %v4275
    %v4278 = vmul.f32 %v4222, %v4276
    %v4279 = vmul.f32 %v4267, %v4277
    %v4280 = vadd.f32 %v3878, %v4152
    %v4281 = vadd.f32 %v3879, %v4153
    %v4282 = vadd.f32 %v3880, %v4278
    %v4283 = vadd.f32 %v3881, %v4279
    %v4284 = vld [vmem:[#allocation2 + $0x140] sm:$0xff]
    %v4285 = vld [vmem:[#allocation2 + $0x148] sm:$0xff]
    %v4286 = vld [vmem:[#allocation2 + $0x150] sm:$0xff]
    %v4287 = vld [vmem:[#allocation2 + $0x158] sm:$0xff]
    %v4288 = vld [vmem:[#allocation2 + $0x160] sm:$0xff]
    %v4289 = vld [vmem:[#allocation2 + $0x168] sm:$0xff]
    %v4290 = vld [vmem:[#allocation2 + $0x170] sm:$0xff]
    %v4291 = vld [vmem:[#allocation2 + $0x178] sm:$0xff]
    %v4292 = vpack.c.bf16 %v4153, %v4152
    %4293 = vmatpush.bf16.msra.mxu0 %v2088
    %4294 = vmatpush.bf16.msra.mxu0 %v2084
    %4295 = vmatpush.bf16.msra.mxu0 %v2080
    %4296 = vmatpush.bf16.msra.mxu0 %v2076
    %4297 = vmatpush.bf16.msra.mxu0 %v2072
    %4298 = vmatpush.bf16.msra.mxu0 %v2068
    %4299 = vmatpush.bf16.msra.mxu0 %v2064
    %4300 = vmatpush.bf16.msra.mxu0 %v2060
    %4301 = vmatmul.bf16.gmra.mxu0 %v4292
    %v4302 = vpop.f32.mrf.mxu0
    %v4303 = vadd.f32 0.0, %v4302
    %v4304 = vpop.f32.mrf.mxu0
    %v4305 = vadd.f32 0.0, %v4304
    %4306 = vdwg.mxu0
    %4307 = vmatpush.bf16.msra.mxu0 %v2089
    %4308 = vmatpush.bf16.msra.mxu0 %v2085
    %4309 = vmatpush.bf16.msra.mxu0 %v2081
    %4310 = vmatpush.bf16.msra.mxu0 %v2077
    %4311 = vmatpush.bf16.msra.mxu0 %v2073
    %4312 = vmatpush.bf16.msra.mxu0 %v2069
    %4313 = vmatpush.bf16.msra.mxu0 %v2065
    %4314 = vmatpush.bf16.msra.mxu0 %v2061
    %4315 = vmatmul.bf16.gmra.mxu0 %v4292
    %v4316 = vpop.f32.mrf.mxu0
    %v4317 = vadd.f32 0.0, %v4316
    %v4318 = vpop.f32.mrf.mxu0
    %v4319 = vadd.f32 0.0, %v4318
    %4320 = vdwg.mxu0
    %4321 = vmatpush.bf16.msra.mxu0 %v2090
    %4322 = vmatpush.bf16.msra.mxu0 %v2086
    %4323 = vmatpush.bf16.msra.mxu0 %v2082
    %4324 = vmatpush.bf16.msra.mxu0 %v2078
    %4325 = vmatpush.bf16.msra.mxu0 %v2074
    %4326 = vmatpush.bf16.msra.mxu0 %v2070
    %4327 = vmatpush.bf16.msra.mxu0 %v2066
    %4328 = vmatpush.bf16.msra.mxu0 %v2062
    %4329 = vmatmul.bf16.gmra.mxu0 %v4292
    %v4330 = vpop.f32.mrf.mxu0
    %v4331 = vadd.f32 0.0, %v4330
    %v4332 = vpop.f32.mrf.mxu0
    %v4333 = vadd.f32 0.0, %v4332
    %4334 = vdwg.mxu0
    %4335 = vmatpush.bf16.msra.mxu0 %v2091
    %4336 = vmatpush.bf16.msra.mxu0 %v2087
    %4337 = vmatpush.bf16.msra.mxu0 %v2083
    %4338 = vmatpush.bf16.msra.mxu0 %v2079
    %4339 = vmatpush.bf16.msra.mxu0 %v2075
    %4340 = vmatpush.bf16.msra.mxu0 %v2071
    %4341 = vmatpush.bf16.msra.mxu0 %v2067
    %4342 = vmatpush.bf16.msra.mxu0 %v2063
    %4343 = vmatmul.bf16.gmra.mxu0 %v4292
    %v4344 = vpop.f32.mrf.mxu0
    %v4345 = vadd.f32 0.0, %v4344
    %v4346 = vpop.f32.mrf.mxu0
    %v4347 = vadd.f32 0.0, %v4346
    %4348 = vdwg.mxu0
    %v4349 = vadd.f32 %v4284, %v4303
    %v4350 = vadd.f32 %v4285, %v4317
    %v4351 = vadd.f32 %v4286, %v4331
    %v4352 = vadd.f32 %v4287, %v4345
    %v4353 = vadd.f32 %v4288, %v4305
    %v4354 = vadd.f32 %v4289, %v4319
    %v4355 = vadd.f32 %v4290, %v4333
    %v4356 = vadd.f32 %v4291, %v4347
    %v4357 = vld [vmem:[#allocation3 + $0x80] sm:$0xff]
    %v4358 = vld [vmem:[#allocation3 + $0x88] sm:$0xff]
    %v4359 = vld [vmem:[#allocation3 + $0x90] sm:$0xff]
    %v4360 = vld [vmem:[#allocation3 + $0x98] sm:$0xff]
    %v4361 = vld [vmem:[#allocation3 + $0xa0] sm:$0xff]
    %v4362 = vld [vmem:[#allocation3 + $0xa8] sm:$0xff]
    %v4363 = vld [vmem:[#allocation3 + $0xb0] sm:$0xff]
    %v4364 = vld [vmem:[#allocation3 + $0xb8] sm:$0xff]
    %v4365 = vpack.c.bf16 %v4279, %v4278
    %4366 = vmatpush.bf16.msra.mxu0 %v2320
    %4367 = vmatpush.bf16.msra.mxu0 %v2316
    %4368 = vmatpush.bf16.msra.mxu0 %v2312
    %4369 = vmatpush.bf16.msra.mxu0 %v2308
    %4370 = vmatpush.bf16.msra.mxu0 %v2304
    %4371 = vmatpush.bf16.msra.mxu0 %v2300
    %4372 = vmatpush.bf16.msra.mxu0 %v2296
    %4373 = vmatpush.bf16.msra.mxu0 %v2292
    %4374 = vmatmul.bf16.gmra.mxu0 %v4365
    %v4375 = vpop.f32.mrf.mxu0
    %v4376 = vadd.f32 0.0, %v4375
    %v4377 = vpop.f32.mrf.mxu0
    %v4378 = vadd.f32 0.0, %v4377
    %4379 = vdwg.mxu0
    %4380 = vmatpush.bf16.msra.mxu0 %v2321
    %4381 = vmatpush.bf16.msra.mxu0 %v2317
    %4382 = vmatpush.bf16.msra.mxu0 %v2313
    %4383 = vmatpush.bf16.msra.mxu0 %v2309
    %4384 = vmatpush.bf16.msra.mxu0 %v2305
    %4385 = vmatpush.bf16.msra.mxu0 %v2301
    %4386 = vmatpush.bf16.msra.mxu0 %v2297
    %4387 = vmatpush.bf16.msra.mxu0 %v2293
    %4388 = vmatmul.bf16.gmra.mxu0 %v4365
    %v4389 = vpop.f32.mrf.mxu0
    %v4390 = vadd.f32 0.0, %v4389
    %v4391 = vpop.f32.mrf.mxu0
    %v4392 = vadd.f32 0.0, %v4391
    %4393 = vdwg.mxu0
    %4394 = vmatpush.bf16.msra.mxu0 %v2322
    %4395 = vmatpush.bf16.msra.mxu0 %v2318
    %4396 = vmatpush.bf16.msra.mxu0 %v2314
    %4397 = vmatpush.bf16.msra.mxu0 %v2310
    %4398 = vmatpush.bf16.msra.mxu0 %v2306
    %4399 = vmatpush.bf16.msra.mxu0 %v2302
    %4400 = vmatpush.bf16.msra.mxu0 %v2298
    %4401 = vmatpush.bf16.msra.mxu0 %v2294
    %4402 = vmatmul.bf16.gmra.mxu0 %v4365
    %v4403 = vpop.f32.mrf.mxu0
    %v4404 = vadd.f32 0.0, %v4403
    %v4405 = vpop.f32.mrf.mxu0
    %v4406 = vadd.f32 0.0, %v4405
    %4407 = vdwg.mxu0
    %4408 = vmatpush.bf16.msra.mxu0 %v2323
    %4409 = vmatpush.bf16.msra.mxu0 %v2319
    %4410 = vmatpush.bf16.msra.mxu0 %v2315
    %4411 = vmatpush.bf16.msra.mxu0 %v2311
    %4412 = vmatpush.bf16.msra.mxu0 %v2307
    %4413 = vmatpush.bf16.msra.mxu0 %v2303
    %4414 = vmatpush.bf16.msra.mxu0 %v2299
    %4415 = vmatpush.bf16.msra.mxu0 %v2295
    %4416 = vmatmul.bf16.gmra.mxu0 %v4365
    %v4417 = vpop.f32.mrf.mxu0
    %v4418 = vadd.f32 0.0, %v4417
    %v4419 = vpop.f32.mrf.mxu0
    %v4420 = vadd.f32 0.0, %v4419
    %4421 = vdwg.mxu0
    %v4422 = vadd.f32 %v4357, %v4376
    %v4423 = vadd.f32 %v4358, %v4390
    %v4424 = vadd.f32 %v4359, %v4404
    %v4425 = vadd.f32 %v4360, %v4418
    %v4426 = vadd.f32 %v4361, %v4378
    %v4427 = vadd.f32 %v4362, %v4392
    %v4428 = vadd.f32 %v4363, %v4406
    %v4429 = vadd.f32 %v4364, %v4420
    %v4430 = vxor.u32 %v4349, 2147483648
    %v4431 = vxor.u32 %v4350, 2147483648
    %v4432 = vxor.u32 %v4351, 2147483648
    %v4433 = vxor.u32 %v4353, 2147483648
    %v4434 = vxor.u32 %v4354, 2147483648
    %v4435 = vxor.u32 %v4355, 2147483648
    %v4436 = vmul.f32 %v4430, 1.442695
    %v4437 = vpow.pop %v4436
    %v4438 = vmul.f32 %v4431, 1.442695
    %v4439 = vpow.pop %v4438
    %v4440 = vmul.f32 %v4432, 1.442695
    %v4441 = vpow.pop %v4440
    %v4442 = vmul.f32 %v4433, 1.442695
    %v4443 = vpow.pop %v4442
    %v4444 = vmul.f32 %v4434, 1.442695
    %v4445 = vpow.pop %v4444
    %v4446 = vmul.f32 %v4435, 1.442695
    %v4447 = vpow.pop %v4446
    %v4448 = vadd.f32 %v4437, 1.0
    %v4449 = vadd.f32 %v4439, 1.0
    %v4450 = vadd.f32 %v4441, 1.0
    %v4451 = vadd.f32 %v4443, 1.0
    %v4452 = vadd.f32 %v4445, 1.0
    %v4453 = vadd.f32 %v4447, 1.0
    %v4454 = vrcp.pop %v4448
    %v4455 = vmul.f32 %v4448, %v4454
    %v4456 = vsub.f32 1.0, %v4455
    %v4457 = vmul.f32 %v4454, %v4456
    %v4458 = vadd.f32 %v4454, %v4457
    %vm4459 = vweird.f32 %v4448
    %vm4460 = vweird.f32 %v4454
    %vm4461 = vmor %vm4459, %vm4460
    %v4462 = vsel %vm4461, %v4454, %v4458
    %v4463 = vand.u32 2147483647, %v4448
    %vm4464 = vcmp.eq.f32.partialorder %v4463, 8.507059e+37
    %v4465 = vand.u32 %v4448, 2147483648
    %v4466 = vor.u32 1.1754944e-38, %v4465
    %v4467 = vsel %vm4464, %v4466, %v4462
    %v4468 = vmul.f32 1.0, %v4467
    %v4469 = vrcp.pop %v4449
    %v4470 = vmul.f32 %v4449, %v4469
    %v4471 = vsub.f32 1.0, %v4470
    %v4472 = vmul.f32 %v4469, %v4471
    %v4473 = vadd.f32 %v4469, %v4472
    %vm4474 = vweird.f32 %v4449
    %vm4475 = vweird.f32 %v4469
    %vm4476 = vmor %vm4474, %vm4475
    %v4477 = vsel %vm4476, %v4469, %v4473
    %v4478 = vand.u32 2147483647, %v4449
    %vm4479 = vcmp.eq.f32.partialorder %v4478, 8.507059e+37
    %v4480 = vand.u32 %v4449, 2147483648
    %v4481 = vor.u32 1.1754944e-38, %v4480
    %v4482 = vsel %vm4479, %v4481, %v4477
    %v4483 = vmul.f32 1.0, %v4482
    %v4484 = vrcp.pop %v4450
    %v4485 = vmul.f32 %v4450, %v4484
    %v4486 = vsub.f32 1.0, %v4485
    %v4487 = vmul.f32 %v4484, %v4486
    %v4488 = vadd.f32 %v4484, %v4487
    %vm4489 = vweird.f32 %v4450
    %vm4490 = vweird.f32 %v4484
    %vm4491 = vmor %vm4489, %vm4490
    %v4492 = vsel %vm4491, %v4484, %v4488
    %v4493 = vand.u32 2147483647, %v4450
    %vm4494 = vcmp.eq.f32.partialorder %v4493, 8.507059e+37
    %v4495 = vand.u32 %v4450, 2147483648
    %v4496 = vor.u32 1.1754944e-38, %v4495
    %v4497 = vsel %vm4494, %v4496, %v4492
    %v4498 = vmul.f32 1.0, %v4497
    %v4499 = vrcp.pop %v4451
    %v4500 = vmul.f32 %v4451, %v4499
    %v4501 = vsub.f32 1.0, %v4500
    %v4502 = vmul.f32 %v4499, %v4501
    %v4503 = vadd.f32 %v4499, %v4502
    %vm4504 = vweird.f32 %v4451
    %vm4505 = vweird.f32 %v4499
    %vm4506 = vmor %vm4504, %vm4505
    %v4507 = vsel %vm4506, %v4499, %v4503
    %v4508 = vand.u32 2147483647, %v4451
    %vm4509 = vcmp.eq.f32.partialorder %v4508, 8.507059e+37
    %v4510 = vand.u32 %v4451, 2147483648
    %v4511 = vor.u32 1.1754944e-38, %v4510
    %v4512 = vsel %vm4509, %v4511, %v4507
    %v4513 = vmul.f32 1.0, %v4512
    %v4514 = vrcp.pop %v4452
    %v4515 = vmul.f32 %v4452, %v4514
    %v4516 = vsub.f32 1.0, %v4515
    %v4517 = vmul.f32 %v4514, %v4516
    %v4518 = vadd.f32 %v4514, %v4517
    %vm4519 = vweird.f32 %v4452
    %vm4520 = vweird.f32 %v4514
    %vm4521 = vmor %vm4519, %vm4520
    %v4522 = vsel %vm4521, %v4514, %v4518
    %v4523 = vand.u32 2147483647, %v4452
    %vm4524 = vcmp.eq.f32.partialorder %v4523, 8.507059e+37
    %v4525 = vand.u32 %v4452, 2147483648
    %v4526 = vor.u32 1.1754944e-38, %v4525
    %v4527 = vsel %vm4524, %v4526, %v4522
    %v4528 = vmul.f32 1.0, %v4527
    %v4529 = vrcp.pop %v4453
    %v4530 = vmul.f32 %v4453, %v4529
    %v4531 = vsub.f32 1.0, %v4530
    %v4532 = vmul.f32 %v4529, %v4531
    %v4533 = vadd.f32 %v4529, %v4532
    %vm4534 = vweird.f32 %v4453
    %vm4535 = vweird.f32 %v4529
    %vm4536 = vmor %vm4534, %vm4535
    %v4537 = vsel %vm4536, %v4529, %v4533
    %v4538 = vand.u32 2147483647, %v4453
    %vm4539 = vcmp.eq.f32.partialorder %v4538, 8.507059e+37
    %v4540 = vand.u32 %v4453, 2147483648
    %v4541 = vor.u32 1.1754944e-38, %v4540
    %v4542 = vsel %vm4539, %v4541, %v4537
    %v4543 = vmul.f32 1.0, %v4542
    %v4544 = vtanh.pop %v4352
    %v4545 = vtanh.pop %v4356
    %v4546 = vmul.f32 %v4483, %v4148
    %v4547 = vmul.f32 %v4528, %v4149
    %v4548 = vmul.f32 %v4468, %v4544
    %v4549 = vmul.f32 %v4513, %v4545
    %v4550 = vadd.f32 %v4546, %v4548
    %v4551 = vadd.f32 %v4547, %v4549
    %v4552 = vtanh.pop %v4550
    %v4553 = vtanh.pop %v4551
    %v4554 = vmul.f32 %v4498, %v4552
    %v4555 = vmul.f32 %v4543, %v4553
    %v4556 = vxor.u32 %v4422, 2147483648
    %v4557 = vxor.u32 %v4423, 2147483648
    %v4558 = vxor.u32 %v4424, 2147483648
    %v4559 = vxor.u32 %v4426, 2147483648
    %v4560 = vxor.u32 %v4427, 2147483648
    %v4561 = vxor.u32 %v4428, 2147483648
    %v4562 = vmul.f32 %v4556, 1.442695
    %v4563 = vpow.pop %v4562
    %v4564 = vmul.f32 %v4557, 1.442695
    %v4565 = vpow.pop %v4564
    %v4566 = vmul.f32 %v4558, 1.442695
    %v4567 = vpow.pop %v4566
    %v4568 = vmul.f32 %v4559, 1.442695
    %v4569 = vpow.pop %v4568
    %v4570 = vmul.f32 %v4560, 1.442695
    %v4571 = vpow.pop %v4570
    %v4572 = vmul.f32 %v4561, 1.442695
    %v4573 = vpow.pop %v4572
    %v4574 = vadd.f32 %v4563, 1.0
    %v4575 = vadd.f32 %v4565, 1.0
    %v4576 = vadd.f32 %v4567, 1.0
    %v4577 = vadd.f32 %v4569, 1.0
    %v4578 = vadd.f32 %v4571, 1.0
    %v4579 = vadd.f32 %v4573, 1.0
    %v4580 = vrcp.pop %v4574
    %v4581 = vmul.f32 %v4574, %v4580
    %v4582 = vsub.f32 1.0, %v4581
    %v4583 = vmul.f32 %v4580, %v4582
    %v4584 = vadd.f32 %v4580, %v4583
    %vm4585 = vweird.f32 %v4574
    %vm4586 = vweird.f32 %v4580
    %vm4587 = vmor %vm4585, %vm4586
    %v4588 = vsel %vm4587, %v4580, %v4584
    %v4589 = vand.u32 2147483647, %v4574
    %vm4590 = vcmp.eq.f32.partialorder %v4589, 8.507059e+37
    %v4591 = vand.u32 %v4574, 2147483648
    %v4592 = vor.u32 1.1754944e-38, %v4591
    %v4593 = vsel %vm4590, %v4592, %v4588
    %v4594 = vmul.f32 1.0, %v4593
    %v4595 = vrcp.pop %v4575
    %v4596 = vmul.f32 %v4575, %v4595
    %v4597 = vsub.f32 1.0, %v4596
    %v4598 = vmul.f32 %v4595, %v4597
    %v4599 = vadd.f32 %v4595, %v4598
    %vm4600 = vweird.f32 %v4575
    %vm4601 = vweird.f32 %v4595
    %vm4602 = vmor %vm4600, %vm4601
    %v4603 = vsel %vm4602, %v4595, %v4599
    %v4604 = vand.u32 2147483647, %v4575
    %vm4605 = vcmp.eq.f32.partialorder %v4604, 8.507059e+37
    %v4606 = vand.u32 %v4575, 2147483648
    %v4607 = vor.u32 1.1754944e-38, %v4606
    %v4608 = vsel %vm4605, %v4607, %v4603
    %v4609 = vmul.f32 1.0, %v4608
    %v4610 = vrcp.pop %v4576
    %v4611 = vmul.f32 %v4576, %v4610
    %v4612 = vsub.f32 1.0, %v4611
    %v4613 = vmul.f32 %v4610, %v4612
    %v4614 = vadd.f32 %v4610, %v4613
    %vm4615 = vweird.f32 %v4576
    %vm4616 = vweird.f32 %v4610
    %vm4617 = vmor %vm4615, %vm4616
    %v4618 = vsel %vm4617, %v4610, %v4614
    %v4619 = vand.u32 2147483647, %v4576
    %vm4620 = vcmp.eq.f32.partialorder %v4619, 8.507059e+37
    %v4621 = vand.u32 %v4576, 2147483648
    %v4622 = vor.u32 1.1754944e-38, %v4621
    %v4623 = vsel %vm4620, %v4622, %v4618
    %v4624 = vmul.f32 1.0, %v4623
    %v4625 = vrcp.pop %v4577
    %v4626 = vmul.f32 %v4577, %v4625
    %v4627 = vsub.f32 1.0, %v4626
    %v4628 = vmul.f32 %v4625, %v4627
    %v4629 = vadd.f32 %v4625, %v4628
    %vm4630 = vweird.f32 %v4577
    %vm4631 = vweird.f32 %v4625
    %vm4632 = vmor %vm4630, %vm4631
    %v4633 = vsel %vm4632, %v4625, %v4629
    %v4634 = vand.u32 2147483647, %v4577
    %vm4635 = vcmp.eq.f32.partialorder %v4634, 8.507059e+37
    %v4636 = vand.u32 %v4577, 2147483648
    %v4637 = vor.u32 1.1754944e-38, %v4636
    %v4638 = vsel %vm4635, %v4637, %v4633
    %v4639 = vmul.f32 1.0, %v4638
    %v4640 = vrcp.pop %v4578
    %v4641 = vmul.f32 %v4578, %v4640
    %v4642 = vsub.f32 1.0, %v4641
    %v4643 = vmul.f32 %v4640, %v4642
    %v4644 = vadd.f32 %v4640, %v4643
    %vm4645 = vweird.f32 %v4578
    %vm4646 = vweird.f32 %v4640
    %vm4647 = vmor %vm4645, %vm4646
    %v4648 = vsel %vm4647, %v4640, %v4644
    %v4649 = vand.u32 2147483647, %v4578
    %vm4650 = vcmp.eq.f32.partialorder %v4649, 8.507059e+37
    %v4651 = vand.u32 %v4578, 2147483648
    %v4652 = vor.u32 1.1754944e-38, %v4651
    %v4653 = vsel %vm4650, %v4652, %v4648
    %v4654 = vmul.f32 1.0, %v4653
    %v4655 = vrcp.pop %v4579
    %v4656 = vmul.f32 %v4579, %v4655
    %v4657 = vsub.f32 1.0, %v4656
    %v4658 = vmul.f32 %v4655, %v4657
    %v4659 = vadd.f32 %v4655, %v4658
    %vm4660 = vweird.f32 %v4579
    %vm4661 = vweird.f32 %v4655
    %vm4662 = vmor %vm4660, %vm4661
    %v4663 = vsel %vm4662, %v4655, %v4659
    %v4664 = vand.u32 2147483647, %v4579
    %vm4665 = vcmp.eq.f32.partialorder %v4664, 8.507059e+37
    %v4666 = vand.u32 %v4579, 2147483648
    %v4667 = vor.u32 1.1754944e-38, %v4666
    %v4668 = vsel %vm4665, %v4667, %v4663
    %v4669 = vmul.f32 1.0, %v4668
    %v4670 = vtanh.pop %v4425
    %v4671 = vtanh.pop %v4429
    %v4672 = vmul.f32 %v4609, %v4274
    %v4673 = vmul.f32 %v4654, %v4275
    %v4674 = vmul.f32 %v4594, %v4670
    %v4675 = vmul.f32 %v4639, %v4671
    %v4676 = vadd.f32 %v4672, %v4674
    %v4677 = vadd.f32 %v4673, %v4675
    %v4678 = vtanh.pop %v4676
    %v4679 = vtanh.pop %v4677
    %v4680 = vmul.f32 %v4624, %v4678
    %v4681 = vmul.f32 %v4669, %v4679
    %v4682 = vadd.f32 %v4280, %v4554
    %v4683 = vadd.f32 %v4281, %v4555
    %v4684 = vadd.f32 %v4282, %v4680
    %v4685 = vadd.f32 %v4283, %v4681
    %v4686 = vld [vmem:[#allocation2 + $0x180] sm:$0xff]
    %v4687 = vld [vmem:[#allocation2 + $0x188] sm:$0xff]
    %v4688 = vld [vmem:[#allocation2 + $0x190] sm:$0xff]
    %v4689 = vld [vmem:[#allocation2 + $0x198] sm:$0xff]
    %v4690 = vld [vmem:[#allocation2 + $0x1a0] sm:$0xff]
    %v4691 = vld [vmem:[#allocation2 + $0x1a8] sm:$0xff]
    %v4692 = vld [vmem:[#allocation2 + $0x1b0] sm:$0xff]
    %v4693 = vld [vmem:[#allocation2 + $0x1b8] sm:$0xff]
    %v4694 = vpack.c.bf16 %v4555, %v4554
    %4695 = vmatpush.bf16.msra.mxu0 %v2088
    %4696 = vmatpush.bf16.msra.mxu0 %v2084
    %4697 = vmatpush.bf16.msra.mxu0 %v2080
    %4698 = vmatpush.bf16.msra.mxu0 %v2076
    %4699 = vmatpush.bf16.msra.mxu0 %v2072
    %4700 = vmatpush.bf16.msra.mxu0 %v2068
    %4701 = vmatpush.bf16.msra.mxu0 %v2064
    %4702 = vmatpush.bf16.msra.mxu0 %v2060
    %4703 = vmatmul.bf16.gmra.mxu0 %v4694
    %v4704 = vpop.f32.mrf.mxu0
    %v4705 = vadd.f32 0.0, %v4704
    %v4706 = vpop.f32.mrf.mxu0
    %v4707 = vadd.f32 0.0, %v4706
    %4708 = vdwg.mxu0
    %4709 = vmatpush.bf16.msra.mxu0 %v2089
    %4710 = vmatpush.bf16.msra.mxu0 %v2085
    %4711 = vmatpush.bf16.msra.mxu0 %v2081
    %4712 = vmatpush.bf16.msra.mxu0 %v2077
    %4713 = vmatpush.bf16.msra.mxu0 %v2073
    %4714 = vmatpush.bf16.msra.mxu0 %v2069
    %4715 = vmatpush.bf16.msra.mxu0 %v2065
    %4716 = vmatpush.bf16.msra.mxu0 %v2061
    %4717 = vmatmul.bf16.gmra.mxu0 %v4694
    %v4718 = vpop.f32.mrf.mxu0
    %v4719 = vadd.f32 0.0, %v4718
    %v4720 = vpop.f32.mrf.mxu0
    %v4721 = vadd.f32 0.0, %v4720
    %4722 = vdwg.mxu0
    %4723 = vmatpush.bf16.msra.mxu0 %v2090
    %4724 = vmatpush.bf16.msra.mxu0 %v2086
    %4725 = vmatpush.bf16.msra.mxu0 %v2082
    %4726 = vmatpush.bf16.msra.mxu0 %v2078
    %4727 = vmatpush.bf16.msra.mxu0 %v2074
    %4728 = vmatpush.bf16.msra.mxu0 %v2070
    %4729 = vmatpush.bf16.msra.mxu0 %v2066
    %4730 = vmatpush.bf16.msra.mxu0 %v2062
    %4731 = vmatmul.bf16.gmra.mxu0 %v4694
    %v4732 = vpop.f32.mrf.mxu0
    %v4733 = vadd.f32 0.0, %v4732
    %v4734 = vpop.f32.mrf.mxu0
    %v4735 = vadd.f32 0.0, %v4734
    %4736 = vdwg.mxu0
    %4737 = vmatpush.bf16.msra.mxu0 %v2091
    %4738 = vmatpush.bf16.msra.mxu0 %v2087
    %4739 = vmatpush.bf16.msra.mxu0 %v2083
    %4740 = vmatpush.bf16.msra.mxu0 %v2079
    %4741 = vmatpush.bf16.msra.mxu0 %v2075
    %4742 = vmatpush.bf16.msra.mxu0 %v2071
    %4743 = vmatpush.bf16.msra.mxu0 %v2067
    %4744 = vmatpush.bf16.msra.mxu0 %v2063
    %4745 = vmatmul.bf16.gmra.mxu0 %v4694
    %v4746 = vpop.f32.mrf.mxu0
    %v4747 = vadd.f32 0.0, %v4746
    %v4748 = vpop.f32.mrf.mxu0
    %v4749 = vadd.f32 0.0, %v4748
    %4750 = vdwg.mxu0
    %v4751 = vadd.f32 %v4686, %v4705
    %v4752 = vadd.f32 %v4687, %v4719
    %v4753 = vadd.f32 %v4688, %v4733
    %v4754 = vadd.f32 %v4689, %v4747
    %v4755 = vadd.f32 %v4690, %v4707
    %v4756 = vadd.f32 %v4691, %v4721
    %v4757 = vadd.f32 %v4692, %v4735
    %v4758 = vadd.f32 %v4693, %v4749
    %v4759 = vld [vmem:[#allocation3 + $0x40] sm:$0xff]
    %v4760 = vld [vmem:[#allocation3 + $0x48] sm:$0xff]
    %v4761 = vld [vmem:[#allocation3 + $0x50] sm:$0xff]
    %v4762 = vld [vmem:[#allocation3 + $0x58] sm:$0xff]
    %v4763 = vld [vmem:[#allocation3 + $0x60] sm:$0xff]
    %v4764 = vld [vmem:[#allocation3 + $0x68] sm:$0xff]
    %v4765 = vld [vmem:[#allocation3 + $0x70] sm:$0xff]
    %v4766 = vld [vmem:[#allocation3 + $0x78] sm:$0xff]
    %v4767 = vpack.c.bf16 %v4681, %v4680
    %4768 = vmatpush.bf16.msra.mxu0 %v2320
    %4769 = vmatpush.bf16.msra.mxu0 %v2316
    %4770 = vmatpush.bf16.msra.mxu0 %v2312
    %4771 = vmatpush.bf16.msra.mxu0 %v2308
    %4772 = vmatpush.bf16.msra.mxu0 %v2304
    %4773 = vmatpush.bf16.msra.mxu0 %v2300
    %4774 = vmatpush.bf16.msra.mxu0 %v2296
    %4775 = vmatpush.bf16.msra.mxu0 %v2292
    %4776 = vmatmul.bf16.gmra.mxu0 %v4767
    %v4777 = vpop.f32.mrf.mxu0
    %v4778 = vadd.f32 0.0, %v4777
    %v4779 = vpop.f32.mrf.mxu0
    %v4780 = vadd.f32 0.0, %v4779
    %4781 = vdwg.mxu0
    %4782 = vmatpush.bf16.msra.mxu0 %v2321
    %4783 = vmatpush.bf16.msra.mxu0 %v2317
    %4784 = vmatpush.bf16.msra.mxu0 %v2313
    %4785 = vmatpush.bf16.msra.mxu0 %v2309
    %4786 = vmatpush.bf16.msra.mxu0 %v2305
    %4787 = vmatpush.bf16.msra.mxu0 %v2301
    %4788 = vmatpush.bf16.msra.mxu0 %v2297
    %4789 = vmatpush.bf16.msra.mxu0 %v2293
    %4790 = vmatmul.bf16.gmra.mxu0 %v4767
    %v4791 = vpop.f32.mrf.mxu0
    %v4792 = vadd.f32 0.0, %v4791
    %v4793 = vpop.f32.mrf.mxu0
    %v4794 = vadd.f32 0.0, %v4793
    %4795 = vdwg.mxu0
    %4796 = vmatpush.bf16.msra.mxu0 %v2322
    %4797 = vmatpush.bf16.msra.mxu0 %v2318
    %4798 = vmatpush.bf16.msra.mxu0 %v2314
    %4799 = vmatpush.bf16.msra.mxu0 %v2310
    %4800 = vmatpush.bf16.msra.mxu0 %v2306
    %4801 = vmatpush.bf16.msra.mxu0 %v2302
    %4802 = vmatpush.bf16.msra.mxu0 %v2298
    %4803 = vmatpush.bf16.msra.mxu0 %v2294
    %4804 = vmatmul.bf16.gmra.mxu0 %v4767
    %v4805 = vpop.f32.mrf.mxu0
    %v4806 = vadd.f32 0.0, %v4805
    %v4807 = vpop.f32.mrf.mxu0
    %v4808 = vadd.f32 0.0, %v4807
    %4809 = vdwg.mxu0
    %4810 = vmatpush.bf16.msra.mxu0 %v2323
    %4811 = vmatpush.bf16.msra.mxu0 %v2319
    %4812 = vmatpush.bf16.msra.mxu0 %v2315
    %4813 = vmatpush.bf16.msra.mxu0 %v2311
    %4814 = vmatpush.bf16.msra.mxu0 %v2307
    %4815 = vmatpush.bf16.msra.mxu0 %v2303
    %4816 = vmatpush.bf16.msra.mxu0 %v2299
    %4817 = vmatpush.bf16.msra.mxu0 %v2295
    %4818 = vmatmul.bf16.gmra.mxu0 %v4767
    %v4819 = vpop.f32.mrf.mxu0
    %v4820 = vadd.f32 0.0, %v4819
    %v4821 = vpop.f32.mrf.mxu0
    %v4822 = vadd.f32 0.0, %v4821
    %4823 = vdwg.mxu0
    %v4824 = vadd.f32 %v4759, %v4778
    %v4825 = vadd.f32 %v4760, %v4792
    %v4826 = vadd.f32 %v4761, %v4806
    %v4827 = vadd.f32 %v4762, %v4820
    %v4828 = vadd.f32 %v4763, %v4780
    %v4829 = vadd.f32 %v4764, %v4794
    %v4830 = vadd.f32 %v4765, %v4808
    %v4831 = vadd.f32 %v4766, %v4822
    %v4832 = vxor.u32 %v4751, 2147483648
    %v4833 = vxor.u32 %v4752, 2147483648
    %v4834 = vxor.u32 %v4753, 2147483648
    %v4835 = vxor.u32 %v4755, 2147483648
    %v4836 = vxor.u32 %v4756, 2147483648
    %v4837 = vxor.u32 %v4757, 2147483648
    %v4838 = vmul.f32 %v4832, 1.442695
    %v4839 = vpow.pop %v4838
    %v4840 = vmul.f32 %v4833, 1.442695
    %v4841 = vpow.pop %v4840
    %v4842 = vmul.f32 %v4834, 1.442695
    %v4843 = vpow.pop %v4842
    %v4844 = vmul.f32 %v4835, 1.442695
    %v4845 = vpow.pop %v4844
    %v4846 = vmul.f32 %v4836, 1.442695
    %v4847 = vpow.pop %v4846
    %v4848 = vmul.f32 %v4837, 1.442695
    %v4849 = vpow.pop %v4848
    %v4850 = vadd.f32 %v4839, 1.0
    %v4851 = vadd.f32 %v4841, 1.0
    %v4852 = vadd.f32 %v4843, 1.0
    %v4853 = vadd.f32 %v4845, 1.0
    %v4854 = vadd.f32 %v4847, 1.0
    %v4855 = vadd.f32 %v4849, 1.0
    %v4856 = vrcp.pop %v4850
    %v4857 = vmul.f32 %v4850, %v4856
    %v4858 = vsub.f32 1.0, %v4857
    %v4859 = vmul.f32 %v4856, %v4858
    %v4860 = vadd.f32 %v4856, %v4859
    %vm4861 = vweird.f32 %v4850
    %vm4862 = vweird.f32 %v4856
    %vm4863 = vmor %vm4861, %vm4862
    %v4864 = vsel %vm4863, %v4856, %v4860
    %v4865 = vand.u32 2147483647, %v4850
    %vm4866 = vcmp.eq.f32.partialorder %v4865, 8.507059e+37
    %v4867 = vand.u32 %v4850, 2147483648
    %v4868 = vor.u32 1.1754944e-38, %v4867
    %v4869 = vsel %vm4866, %v4868, %v4864
    %v4870 = vmul.f32 1.0, %v4869
    %v4871 = vrcp.pop %v4851
    %v4872 = vmul.f32 %v4851, %v4871
    %v4873 = vsub.f32 1.0, %v4872
    %v4874 = vmul.f32 %v4871, %v4873
    %v4875 = vadd.f32 %v4871, %v4874
    %vm4876 = vweird.f32 %v4851
    %vm4877 = vweird.f32 %v4871
    %vm4878 = vmor %vm4876, %vm4877
    %v4879 = vsel %vm4878, %v4871, %v4875
    %v4880 = vand.u32 2147483647, %v4851
    %vm4881 = vcmp.eq.f32.partialorder %v4880, 8.507059e+37
    %v4882 = vand.u32 %v4851, 2147483648
    %v4883 = vor.u32 1.1754944e-38, %v4882
    %v4884 = vsel %vm4881, %v4883, %v4879
    %v4885 = vmul.f32 1.0, %v4884
    %v4886 = vrcp.pop %v4852
    %v4887 = vmul.f32 %v4852, %v4886
    %v4888 = vsub.f32 1.0, %v4887
    %v4889 = vmul.f32 %v4886, %v4888
    %v4890 = vadd.f32 %v4886, %v4889
    %vm4891 = vweird.f32 %v4852
    %vm4892 = vweird.f32 %v4886
    %vm4893 = vmor %vm4891, %vm4892
    %v4894 = vsel %vm4893, %v4886, %v4890
    %v4895 = vand.u32 2147483647, %v4852
    %vm4896 = vcmp.eq.f32.partialorder %v4895, 8.507059e+37
    %v4897 = vand.u32 %v4852, 2147483648
    %v4898 = vor.u32 1.1754944e-38, %v4897
    %v4899 = vsel %vm4896, %v4898, %v4894
    %v4900 = vmul.f32 1.0, %v4899
    %v4901 = vrcp.pop %v4853
    %v4902 = vmul.f32 %v4853, %v4901
    %v4903 = vsub.f32 1.0, %v4902
    %v4904 = vmul.f32 %v4901, %v4903
    %v4905 = vadd.f32 %v4901, %v4904
    %vm4906 = vweird.f32 %v4853
    %vm4907 = vweird.f32 %v4901
    %vm4908 = vmor %vm4906, %vm4907
    %v4909 = vsel %vm4908, %v4901, %v4905
    %v4910 = vand.u32 2147483647, %v4853
    %vm4911 = vcmp.eq.f32.partialorder %v4910, 8.507059e+37
    %v4912 = vand.u32 %v4853, 2147483648
    %v4913 = vor.u32 1.1754944e-38, %v4912
    %v4914 = vsel %vm4911, %v4913, %v4909
    %v4915 = vmul.f32 1.0, %v4914
    %v4916 = vrcp.pop %v4854
    %v4917 = vmul.f32 %v4854, %v4916
    %v4918 = vsub.f32 1.0, %v4917
    %v4919 = vmul.f32 %v4916, %v4918
    %v4920 = vadd.f32 %v4916, %v4919
    %vm4921 = vweird.f32 %v4854
    %vm4922 = vweird.f32 %v4916
    %vm4923 = vmor %vm4921, %vm4922
    %v4924 = vsel %vm4923, %v4916, %v4920
    %v4925 = vand.u32 2147483647, %v4854
    %vm4926 = vcmp.eq.f32.partialorder %v4925, 8.507059e+37
    %v4927 = vand.u32 %v4854, 2147483648
    %v4928 = vor.u32 1.1754944e-38, %v4927
    %v4929 = vsel %vm4926, %v4928, %v4924
    %v4930 = vmul.f32 1.0, %v4929
    %v4931 = vrcp.pop %v4855
    %v4932 = vmul.f32 %v4855, %v4931
    %v4933 = vsub.f32 1.0, %v4932
    %v4934 = vmul.f32 %v4931, %v4933
    %v4935 = vadd.f32 %v4931, %v4934
    %vm4936 = vweird.f32 %v4855
    %vm4937 = vweird.f32 %v4931
    %vm4938 = vmor %vm4936, %vm4937
    %v4939 = vsel %vm4938, %v4931, %v4935
    %v4940 = vand.u32 2147483647, %v4855
    %vm4941 = vcmp.eq.f32.partialorder %v4940, 8.507059e+37
    %v4942 = vand.u32 %v4855, 2147483648
    %v4943 = vor.u32 1.1754944e-38, %v4942
    %v4944 = vsel %vm4941, %v4943, %v4939
    %v4945 = vmul.f32 1.0, %v4944
    %v4946 = vtanh.pop %v4754
    %v4947 = vtanh.pop %v4758
    %v4948 = vmul.f32 %v4885, %v4550
    %v4949 = vmul.f32 %v4930, %v4551
    %v4950 = vmul.f32 %v4870, %v4946
    %v4951 = vmul.f32 %v4915, %v4947
    %v4952 = vadd.f32 %v4948, %v4950
    %v4953 = vadd.f32 %v4949, %v4951
    %v4954 = vtanh.pop %v4952
    %v4955 = vtanh.pop %v4953
    %v4956 = vmul.f32 %v4900, %v4954
    %v4957 = vmul.f32 %v4945, %v4955
    %v4958 = vxor.u32 %v4824, 2147483648
    %v4959 = vxor.u32 %v4825, 2147483648
    %v4960 = vxor.u32 %v4826, 2147483648
    %v4961 = vxor.u32 %v4828, 2147483648
    %v4962 = vxor.u32 %v4829, 2147483648
    %v4963 = vxor.u32 %v4830, 2147483648
    %v4964 = vmul.f32 %v4958, 1.442695
    %v4965 = vpow.pop %v4964
    %v4966 = vmul.f32 %v4959, 1.442695
    %v4967 = vpow.pop %v4966
    %v4968 = vmul.f32 %v4960, 1.442695
    %v4969 = vpow.pop %v4968
    %v4970 = vmul.f32 %v4961, 1.442695
    %v4971 = vpow.pop %v4970
    %v4972 = vmul.f32 %v4962, 1.442695
    %v4973 = vpow.pop %v4972
    %v4974 = vmul.f32 %v4963, 1.442695
    %v4975 = vpow.pop %v4974
    %v4976 = vadd.f32 %v4965, 1.0
    %v4977 = vadd.f32 %v4967, 1.0
    %v4978 = vadd.f32 %v4969, 1.0
    %v4979 = vadd.f32 %v4971, 1.0
    %v4980 = vadd.f32 %v4973, 1.0
    %v4981 = vadd.f32 %v4975, 1.0
    %v4982 = vrcp.pop %v4976
    %v4983 = vmul.f32 %v4976, %v4982
    %v4984 = vsub.f32 1.0, %v4983
    %v4985 = vmul.f32 %v4982, %v4984
    %v4986 = vadd.f32 %v4982, %v4985
    %vm4987 = vweird.f32 %v4976
    %vm4988 = vweird.f32 %v4982
    %vm4989 = vmor %vm4987, %vm4988
    %v4990 = vsel %vm4989, %v4982, %v4986
    %v4991 = vand.u32 2147483647, %v4976
    %vm4992 = vcmp.eq.f32.partialorder %v4991, 8.507059e+37
    %v4993 = vand.u32 %v4976, 2147483648
    %v4994 = vor.u32 1.1754944e-38, %v4993
    %v4995 = vsel %vm4992, %v4994, %v4990
    %v4996 = vmul.f32 1.0, %v4995
    %v4997 = vrcp.pop %v4977
    %v4998 = vmul.f32 %v4977, %v4997
    %v4999 = vsub.f32 1.0, %v4998
    %v5000 = vmul.f32 %v4997, %v4999
    %v5001 = vadd.f32 %v4997, %v5000
    %vm5002 = vweird.f32 %v4977
    %vm5003 = vweird.f32 %v4997
    %vm5004 = vmor %vm5002, %vm5003
    %v5005 = vsel %vm5004, %v4997, %v5001
    %v5006 = vand.u32 2147483647, %v4977
    %vm5007 = vcmp.eq.f32.partialorder %v5006, 8.507059e+37
    %v5008 = vand.u32 %v4977, 2147483648
    %v5009 = vor.u32 1.1754944e-38, %v5008
    %v5010 = vsel %vm5007, %v5009, %v5005
    %v5011 = vmul.f32 1.0, %v5010
    %v5012 = vrcp.pop %v4978
    %v5013 = vmul.f32 %v4978, %v5012
    %v5014 = vsub.f32 1.0, %v5013
    %v5015 = vmul.f32 %v5012, %v5014
    %v5016 = vadd.f32 %v5012, %v5015
    %vm5017 = vweird.f32 %v4978
    %vm5018 = vweird.f32 %v5012
    %vm5019 = vmor %vm5017, %vm5018
    %v5020 = vsel %vm5019, %v5012, %v5016
    %v5021 = vand.u32 2147483647, %v4978
    %vm5022 = vcmp.eq.f32.partialorder %v5021, 8.507059e+37
    %v5023 = vand.u32 %v4978, 2147483648
    %v5024 = vor.u32 1.1754944e-38, %v5023
    %v5025 = vsel %vm5022, %v5024, %v5020
    %v5026 = vmul.f32 1.0, %v5025
    %v5027 = vrcp.pop %v4979
    %v5028 = vmul.f32 %v4979, %v5027
    %v5029 = vsub.f32 1.0, %v5028
    %v5030 = vmul.f32 %v5027, %v5029
    %v5031 = vadd.f32 %v5027, %v5030
    %vm5032 = vweird.f32 %v4979
    %vm5033 = vweird.f32 %v5027
    %vm5034 = vmor %vm5032, %vm5033
    %v5035 = vsel %vm5034, %v5027, %v5031
    %v5036 = vand.u32 2147483647, %v4979
    %vm5037 = vcmp.eq.f32.partialorder %v5036, 8.507059e+37
    %v5038 = vand.u32 %v4979, 2147483648
    %v5039 = vor.u32 1.1754944e-38, %v5038
    %v5040 = vsel %vm5037, %v5039, %v5035
    %v5041 = vmul.f32 1.0, %v5040
    %v5042 = vrcp.pop %v4980
    %v5043 = vmul.f32 %v4980, %v5042
    %v5044 = vsub.f32 1.0, %v5043
    %v5045 = vmul.f32 %v5042, %v5044
    %v5046 = vadd.f32 %v5042, %v5045
    %vm5047 = vweird.f32 %v4980
    %vm5048 = vweird.f32 %v5042
    %vm5049 = vmor %vm5047, %vm5048
    %v5050 = vsel %vm5049, %v5042, %v5046
    %v5051 = vand.u32 2147483647, %v4980
    %vm5052 = vcmp.eq.f32.partialorder %v5051, 8.507059e+37
    %v5053 = vand.u32 %v4980, 2147483648
    %v5054 = vor.u32 1.1754944e-38, %v5053
    %v5055 = vsel %vm5052, %v5054, %v5050
    %v5056 = vmul.f32 1.0, %v5055
    %v5057 = vrcp.pop %v4981
    %v5058 = vmul.f32 %v4981, %v5057
    %v5059 = vsub.f32 1.0, %v5058
    %v5060 = vmul.f32 %v5057, %v5059
    %v5061 = vadd.f32 %v5057, %v5060
    %vm5062 = vweird.f32 %v4981
    %vm5063 = vweird.f32 %v5057
    %vm5064 = vmor %vm5062, %vm5063
    %v5065 = vsel %vm5064, %v5057, %v5061
    %v5066 = vand.u32 2147483647, %v4981
    %vm5067 = vcmp.eq.f32.partialorder %v5066, 8.507059e+37
    %v5068 = vand.u32 %v4981, 2147483648
    %v5069 = vor.u32 1.1754944e-38, %v5068
    %v5070 = vsel %vm5067, %v5069, %v5065
    %v5071 = vmul.f32 1.0, %v5070
    %v5072 = vtanh.pop %v4827
    %v5073 = vtanh.pop %v4831
    %v5074 = vmul.f32 %v5011, %v4676
    %v5075 = vmul.f32 %v5056, %v4677
    %v5076 = vmul.f32 %v4996, %v5072
    %v5077 = vmul.f32 %v5041, %v5073
    %v5078 = vadd.f32 %v5074, %v5076
    %v5079 = vadd.f32 %v5075, %v5077
    %v5080 = vtanh.pop %v5078
    %v5081 = vtanh.pop %v5079
    %v5082 = vmul.f32 %v5026, %v5080
    %v5083 = vmul.f32 %v5071, %v5081
    %v5084 = vadd.f32 %v4682, %v4956
    %v5085 = vadd.f32 %v4683, %v4957
    %v5086 = vadd.f32 %v4684, %v5082
    %v5087 = vadd.f32 %v4685, %v5083
    %v5088 = vld [vmem:[#allocation2 + $0x1c0] sm:$0xff]
    %v5089 = vld [vmem:[#allocation2 + $0x1c8] sm:$0xff]
    %v5090 = vld [vmem:[#allocation2 + $0x1d0] sm:$0xff]
    %v5091 = vld [vmem:[#allocation2 + $0x1d8] sm:$0xff]
    %v5092 = vld [vmem:[#allocation2 + $0x1e0] sm:$0xff]
    %v5093 = vld [vmem:[#allocation2 + $0x1e8] sm:$0xff]
    %v5094 = vld [vmem:[#allocation2 + $0x1f0] sm:$0xff]
    %v5095 = vld [vmem:[#allocation2 + $0x1f8] sm:$0xff]
    %v5096 = vpack.c.bf16 %v4957, %v4956
    %5097 = vmatpush.bf16.msra.mxu0 %v2088
    %5098 = vmatpush.bf16.msra.mxu0 %v2084
    %5099 = vmatpush.bf16.msra.mxu0 %v2080
    %5100 = vmatpush.bf16.msra.mxu0 %v2076
    %5101 = vmatpush.bf16.msra.mxu0 %v2072
    %5102 = vmatpush.bf16.msra.mxu0 %v2068
    %5103 = vmatpush.bf16.msra.mxu0 %v2064
    %5104 = vmatpush.bf16.msra.mxu0 %v2060
    %5105 = vmatmul.bf16.gmra.mxu0 %v5096
    %v5106 = vpop.f32.mrf.mxu0
    %v5107 = vadd.f32 0.0, %v5106
    %v5108 = vpop.f32.mrf.mxu0
    %v5109 = vadd.f32 0.0, %v5108
    %5110 = vdwg.mxu0
    %5111 = vmatpush.bf16.msra.mxu0 %v2089
    %5112 = vmatpush.bf16.msra.mxu0 %v2085
    %5113 = vmatpush.bf16.msra.mxu0 %v2081
    %5114 = vmatpush.bf16.msra.mxu0 %v2077
    %5115 = vmatpush.bf16.msra.mxu0 %v2073
    %5116 = vmatpush.bf16.msra.mxu0 %v2069
    %5117 = vmatpush.bf16.msra.mxu0 %v2065
    %5118 = vmatpush.bf16.msra.mxu0 %v2061
    %5119 = vmatmul.bf16.gmra.mxu0 %v5096
    %v5120 = vpop.f32.mrf.mxu0
    %v5121 = vadd.f32 0.0, %v5120
    %v5122 = vpop.f32.mrf.mxu0
    %v5123 = vadd.f32 0.0, %v5122
    %5124 = vdwg.mxu0
    %5125 = vmatpush.bf16.msra.mxu0 %v2090
    %5126 = vmatpush.bf16.msra.mxu0 %v2086
    %5127 = vmatpush.bf16.msra.mxu0 %v2082
    %5128 = vmatpush.bf16.msra.mxu0 %v2078
    %5129 = vmatpush.bf16.msra.mxu0 %v2074
    %5130 = vmatpush.bf16.msra.mxu0 %v2070
    %5131 = vmatpush.bf16.msra.mxu0 %v2066
    %5132 = vmatpush.bf16.msra.mxu0 %v2062
    %5133 = vmatmul.bf16.gmra.mxu0 %v5096
    %v5134 = vpop.f32.mrf.mxu0
    %v5135 = vadd.f32 0.0, %v5134
    %v5136 = vpop.f32.mrf.mxu0
    %v5137 = vadd.f32 0.0, %v5136
    %5138 = vdwg.mxu0
    %5139 = vmatpush.bf16.msra.mxu0 %v2091
    %5140 = vmatpush.bf16.msra.mxu0 %v2087
    %5141 = vmatpush.bf16.msra.mxu0 %v2083
    %5142 = vmatpush.bf16.msra.mxu0 %v2079
    %5143 = vmatpush.bf16.msra.mxu0 %v2075
    %5144 = vmatpush.bf16.msra.mxu0 %v2071
    %5145 = vmatpush.bf16.msra.mxu0 %v2067
    %5146 = vmatpush.bf16.msra.mxu0 %v2063
    %5147 = vmatmul.bf16.gmra.mxu0 %v5096
    %v5148 = vpop.f32.mrf.mxu0
    %v5149 = vadd.f32 0.0, %v5148
    %v5150 = vpop.f32.mrf.mxu0
    %v5151 = vadd.f32 0.0, %v5150
    %5152 = vdwg.mxu0
    %v5153 = vadd.f32 %v5088, %v5107
    %v5154 = vadd.f32 %v5089, %v5121
    %v5155 = vadd.f32 %v5090, %v5135
    %v5156 = vadd.f32 %v5091, %v5149
    %v5157 = vadd.f32 %v5092, %v5109
    %v5158 = vadd.f32 %v5093, %v5123
    %v5159 = vadd.f32 %v5094, %v5137
    %v5160 = vadd.f32 %v5095, %v5151
    %v5161 = vld [vmem:[#allocation3] sm:$0xff]
    %v5162 = vld [vmem:[#allocation3 + $0x8] sm:$0xff]
    %v5163 = vld [vmem:[#allocation3 + $0x10] sm:$0xff]
    %v5164 = vld [vmem:[#allocation3 + $0x18] sm:$0xff]
    %v5165 = vld [vmem:[#allocation3 + $0x20] sm:$0xff]
    %v5166 = vld [vmem:[#allocation3 + $0x28] sm:$0xff]
    %v5167 = vld [vmem:[#allocation3 + $0x30] sm:$0xff]
    %v5168 = vld [vmem:[#allocation3 + $0x38] sm:$0xff]
    %v5169 = vpack.c.bf16 %v5083, %v5082
    %5170 = vmatpush.bf16.msra.mxu0 %v2320
    %5171 = vmatpush.bf16.msra.mxu0 %v2316
    %5172 = vmatpush.bf16.msra.mxu0 %v2312
    %5173 = vmatpush.bf16.msra.mxu0 %v2308
    %5174 = vmatpush.bf16.msra.mxu0 %v2304
    %5175 = vmatpush.bf16.msra.mxu0 %v2300
    %5176 = vmatpush.bf16.msra.mxu0 %v2296
    %5177 = vmatpush.bf16.msra.mxu0 %v2292
    %5178 = vmatmul.bf16.gmra.mxu0 %v5169
    %v5179 = vpop.f32.mrf.mxu0
    %v5180 = vadd.f32 0.0, %v5179
    %v5181 = vpop.f32.mrf.mxu0
    %v5182 = vadd.f32 0.0, %v5181
    %5183 = vdwg.mxu0
    %5184 = vmatpush.bf16.msra.mxu0 %v2321
    %5185 = vmatpush.bf16.msra.mxu0 %v2317
    %5186 = vmatpush.bf16.msra.mxu0 %v2313
    %5187 = vmatpush.bf16.msra.mxu0 %v2309
    %5188 = vmatpush.bf16.msra.mxu0 %v2305
    %5189 = vmatpush.bf16.msra.mxu0 %v2301
    %5190 = vmatpush.bf16.msra.mxu0 %v2297
    %5191 = vmatpush.bf16.msra.mxu0 %v2293
    %5192 = vmatmul.bf16.gmra.mxu0 %v5169
    %v5193 = vpop.f32.mrf.mxu0
    %v5194 = vadd.f32 0.0, %v5193
    %v5195 = vpop.f32.mrf.mxu0
    %v5196 = vadd.f32 0.0, %v5195
    %5197 = vdwg.mxu0
    %5198 = vmatpush.bf16.msra.mxu0 %v2322
    %5199 = vmatpush.bf16.msra.mxu0 %v2318
    %5200 = vmatpush.bf16.msra.mxu0 %v2314
    %5201 = vmatpush.bf16.msra.mxu0 %v2310
    %5202 = vmatpush.bf16.msra.mxu0 %v2306
    %5203 = vmatpush.bf16.msra.mxu0 %v2302
    %5204 = vmatpush.bf16.msra.mxu0 %v2298
    %5205 = vmatpush.bf16.msra.mxu0 %v2294
    %5206 = vmatmul.bf16.gmra.mxu0 %v5169
    %v5207 = vpop.f32.mrf.mxu0
    %v5208 = vadd.f32 0.0, %v5207
    %v5209 = vpop.f32.mrf.mxu0
    %v5210 = vadd.f32 0.0, %v5209
    %5211 = vdwg.mxu0
    %5212 = vmatpush.bf16.msra.mxu0 %v2323
    %5213 = vmatpush.bf16.msra.mxu0 %v2319
    %5214 = vmatpush.bf16.msra.mxu0 %v2315
    %5215 = vmatpush.bf16.msra.mxu0 %v2311
    %5216 = vmatpush.bf16.msra.mxu0 %v2307
    %5217 = vmatpush.bf16.msra.mxu0 %v2303
    %5218 = vmatpush.bf16.msra.mxu0 %v2299
    %5219 = vmatpush.bf16.msra.mxu0 %v2295
    %5220 = vmatmul.bf16.gmra.mxu0 %v5169
    %v5221 = vpop.f32.mrf.mxu0
    %v5222 = vadd.f32 0.0, %v5221
    %v5223 = vpop.f32.mrf.mxu0
    %v5224 = vadd.f32 0.0, %v5223
    %5225 = vdwg.mxu0
    %v5226 = vadd.f32 %v5161, %v5180
    %v5227 = vadd.f32 %v5162, %v5194
    %v5228 = vadd.f32 %v5163, %v5208
    %v5229 = vadd.f32 %v5164, %v5222
    %v5230 = vadd.f32 %v5165, %v5182
    %v5231 = vadd.f32 %v5166, %v5196
    %v5232 = vadd.f32 %v5167, %v5210
    %v5233 = vadd.f32 %v5168, %v5224
    %v5234 = vxor.u32 %v5153, 2147483648
    %v5235 = vxor.u32 %v5154, 2147483648
    %v5236 = vxor.u32 %v5155, 2147483648
    %v5237 = vxor.u32 %v5157, 2147483648
    %v5238 = vxor.u32 %v5158, 2147483648
    %v5239 = vxor.u32 %v5159, 2147483648
    %v5240 = vmul.f32 %v5234, 1.442695
    %v5241 = vpow.pop %v5240
    %v5242 = vmul.f32 %v5235, 1.442695
    %v5243 = vpow.pop %v5242
    %v5244 = vmul.f32 %v5236, 1.442695
    %v5245 = vpow.pop %v5244
    %v5246 = vmul.f32 %v5237, 1.442695
    %v5247 = vpow.pop %v5246
    %v5248 = vmul.f32 %v5238, 1.442695
    %v5249 = vpow.pop %v5248
    %v5250 = vmul.f32 %v5239, 1.442695
    %v5251 = vpow.pop %v5250
    %v5252 = vadd.f32 %v5241, 1.0
    %v5253 = vadd.f32 %v5243, 1.0
    %v5254 = vadd.f32 %v5245, 1.0
    %v5255 = vadd.f32 %v5247, 1.0
    %v5256 = vadd.f32 %v5249, 1.0
    %v5257 = vadd.f32 %v5251, 1.0
    %v5258 = vrcp.pop %v5252
    %v5259 = vmul.f32 %v5252, %v5258
    %v5260 = vsub.f32 1.0, %v5259
    %v5261 = vmul.f32 %v5258, %v5260
    %v5262 = vadd.f32 %v5258, %v5261
    %vm5263 = vweird.f32 %v5252
    %vm5264 = vweird.f32 %v5258
    %vm5265 = vmor %vm5263, %vm5264
    %v5266 = vsel %vm5265, %v5258, %v5262
    %v5267 = vand.u32 2147483647, %v5252
    %vm5268 = vcmp.eq.f32.partialorder %v5267, 8.507059e+37
    %v5269 = vand.u32 %v5252, 2147483648
    %v5270 = vor.u32 1.1754944e-38, %v5269
    %v5271 = vsel %vm5268, %v5270, %v5266
    %v5272 = vmul.f32 1.0, %v5271
    %v5273 = vrcp.pop %v5253
    %v5274 = vmul.f32 %v5253, %v5273
    %v5275 = vsub.f32 1.0, %v5274
    %v5276 = vmul.f32 %v5273, %v5275
    %v5277 = vadd.f32 %v5273, %v5276
    %vm5278 = vweird.f32 %v5253
    %vm5279 = vweird.f32 %v5273
    %vm5280 = vmor %vm5278, %vm5279
    %v5281 = vsel %vm5280, %v5273, %v5277
    %v5282 = vand.u32 2147483647, %v5253
    %vm5283 = vcmp.eq.f32.partialorder %v5282, 8.507059e+37
    %v5284 = vand.u32 %v5253, 2147483648
    %v5285 = vor.u32 1.1754944e-38, %v5284
    %v5286 = vsel %vm5283, %v5285, %v5281
    %v5287 = vmul.f32 1.0, %v5286
    %v5288 = vrcp.pop %v5254
    %v5289 = vmul.f32 %v5254, %v5288
    %v5290 = vsub.f32 1.0, %v5289
    %v5291 = vmul.f32 %v5288, %v5290
    %v5292 = vadd.f32 %v5288, %v5291
    %vm5293 = vweird.f32 %v5254
    %vm5294 = vweird.f32 %v5288
    %vm5295 = vmor %vm5293, %vm5294
    %v5296 = vsel %vm5295, %v5288, %v5292
    %v5297 = vand.u32 2147483647, %v5254
    %vm5298 = vcmp.eq.f32.partialorder %v5297, 8.507059e+37
    %v5299 = vand.u32 %v5254, 2147483648
    %v5300 = vor.u32 1.1754944e-38, %v5299
    %v5301 = vsel %vm5298, %v5300, %v5296
    %v5302 = vmul.f32 1.0, %v5301
    %v5303 = vrcp.pop %v5255
    %v5304 = vmul.f32 %v5255, %v5303
    %v5305 = vsub.f32 1.0, %v5304
    %v5306 = vmul.f32 %v5303, %v5305
    %v5307 = vadd.f32 %v5303, %v5306
    %vm5308 = vweird.f32 %v5255
    %vm5309 = vweird.f32 %v5303
    %vm5310 = vmor %vm5308, %vm5309
    %v5311 = vsel %vm5310, %v5303, %v5307
    %v5312 = vand.u32 2147483647, %v5255
    %vm5313 = vcmp.eq.f32.partialorder %v5312, 8.507059e+37
    %v5314 = vand.u32 %v5255, 2147483648
    %v5315 = vor.u32 1.1754944e-38, %v5314
    %v5316 = vsel %vm5313, %v5315, %v5311
    %v5317 = vmul.f32 1.0, %v5316
    %v5318 = vrcp.pop %v5256
    %v5319 = vmul.f32 %v5256, %v5318
    %v5320 = vsub.f32 1.0, %v5319
    %v5321 = vmul.f32 %v5318, %v5320
    %v5322 = vadd.f32 %v5318, %v5321
    %vm5323 = vweird.f32 %v5256
    %vm5324 = vweird.f32 %v5318
    %vm5325 = vmor %vm5323, %vm5324
    %v5326 = vsel %vm5325, %v5318, %v5322
    %v5327 = vand.u32 2147483647, %v5256
    %vm5328 = vcmp.eq.f32.partialorder %v5327, 8.507059e+37
    %v5329 = vand.u32 %v5256, 2147483648
    %v5330 = vor.u32 1.1754944e-38, %v5329
    %v5331 = vsel %vm5328, %v5330, %v5326
    %v5332 = vmul.f32 1.0, %v5331
    %v5333 = vrcp.pop %v5257
    %v5334 = vmul.f32 %v5257, %v5333
    %v5335 = vsub.f32 1.0, %v5334
    %v5336 = vmul.f32 %v5333, %v5335
    %v5337 = vadd.f32 %v5333, %v5336
    %vm5338 = vweird.f32 %v5257
    %vm5339 = vweird.f32 %v5333
    %vm5340 = vmor %vm5338, %vm5339
    %v5341 = vsel %vm5340, %v5333, %v5337
    %v5342 = vand.u32 2147483647, %v5257
    %vm5343 = vcmp.eq.f32.partialorder %v5342, 8.507059e+37
    %v5344 = vand.u32 %v5257, 2147483648
    %v5345 = vor.u32 1.1754944e-38, %v5344
    %v5346 = vsel %vm5343, %v5345, %v5341
    %v5347 = vmul.f32 1.0, %v5346
    %v5348 = vtanh.pop %v5156
    %v5349 = vtanh.pop %v5160
    %v5350 = vmul.f32 %v5287, %v4952
    %v5351 = vmul.f32 %v5332, %v4953
    %v5352 = vmul.f32 %v5272, %v5348
    %v5353 = vmul.f32 %v5317, %v5349
    %v5354 = vadd.f32 %v5350, %v5352
    %v5355 = vadd.f32 %v5351, %v5353
    %v5356 = vtanh.pop %v5354
    %v5357 = vtanh.pop %v5355
    %v5358 = vmul.f32 %v5302, %v5356
    %v5359 = vmul.f32 %v5347, %v5357
    %v5360 = vxor.u32 %v5226, 2147483648
    %v5361 = vxor.u32 %v5227, 2147483648
    %v5362 = vxor.u32 %v5228, 2147483648
    %v5363 = vxor.u32 %v5230, 2147483648
    %v5364 = vxor.u32 %v5231, 2147483648
    %v5365 = vxor.u32 %v5232, 2147483648
    %v5366 = vmul.f32 %v5360, 1.442695
    %v5367 = vpow.pop %v5366
    %v5368 = vmul.f32 %v5361, 1.442695
    %v5369 = vpow.pop %v5368
    %v5370 = vmul.f32 %v5362, 1.442695
    %v5371 = vpow.pop %v5370
    %v5372 = vmul.f32 %v5363, 1.442695
    %v5373 = vpow.pop %v5372
    %v5374 = vmul.f32 %v5364, 1.442695
    %v5375 = vpow.pop %v5374
    %v5376 = vmul.f32 %v5365, 1.442695
    %v5377 = vpow.pop %v5376
    %v5378 = vadd.f32 %v5367, 1.0
    %v5379 = vadd.f32 %v5369, 1.0
    %v5380 = vadd.f32 %v5371, 1.0
    %v5381 = vadd.f32 %v5373, 1.0
    %v5382 = vadd.f32 %v5375, 1.0
    %v5383 = vadd.f32 %v5377, 1.0
    %v5384 = vrcp.pop %v5378
    %v5385 = vmul.f32 %v5378, %v5384
    %v5386 = vsub.f32 1.0, %v5385
    %v5387 = vmul.f32 %v5384, %v5386
    %v5388 = vadd.f32 %v5384, %v5387
    %vm5389 = vweird.f32 %v5378
    %vm5390 = vweird.f32 %v5384
    %vm5391 = vmor %vm5389, %vm5390
    %v5392 = vsel %vm5391, %v5384, %v5388
    %v5393 = vand.u32 2147483647, %v5378
    %vm5394 = vcmp.eq.f32.partialorder %v5393, 8.507059e+37
    %v5395 = vand.u32 %v5378, 2147483648
    %v5396 = vor.u32 1.1754944e-38, %v5395
    %v5397 = vsel %vm5394, %v5396, %v5392
    %v5398 = vmul.f32 1.0, %v5397
    %v5399 = vrcp.pop %v5379
    %v5400 = vmul.f32 %v5379, %v5399
    %v5401 = vsub.f32 1.0, %v5400
    %v5402 = vmul.f32 %v5399, %v5401
    %v5403 = vadd.f32 %v5399, %v5402
    %vm5404 = vweird.f32 %v5379
    %vm5405 = vweird.f32 %v5399
    %vm5406 = vmor %vm5404, %vm5405
    %v5407 = vsel %vm5406, %v5399, %v5403
    %v5408 = vand.u32 2147483647, %v5379
    %vm5409 = vcmp.eq.f32.partialorder %v5408, 8.507059e+37
    %v5410 = vand.u32 %v5379, 2147483648
    %v5411 = vor.u32 1.1754944e-38, %v5410
    %v5412 = vsel %vm5409, %v5411, %v5407
    %v5413 = vmul.f32 1.0, %v5412
    %v5414 = vrcp.pop %v5380
    %v5415 = vmul.f32 %v5380, %v5414
    %v5416 = vsub.f32 1.0, %v5415
    %v5417 = vmul.f32 %v5414, %v5416
    %v5418 = vadd.f32 %v5414, %v5417
    %vm5419 = vweird.f32 %v5380
    %vm5420 = vweird.f32 %v5414
    %vm5421 = vmor %vm5419, %vm5420
    %v5422 = vsel %vm5421, %v5414, %v5418
    %v5423 = vand.u32 2147483647, %v5380
    %vm5424 = vcmp.eq.f32.partialorder %v5423, 8.507059e+37
    %v5425 = vand.u32 %v5380, 2147483648
    %v5426 = vor.u32 1.1754944e-38, %v5425
    %v5427 = vsel %vm5424, %v5426, %v5422
    %v5428 = vmul.f32 1.0, %v5427
    %v5429 = vrcp.pop %v5381
    %v5430 = vmul.f32 %v5381, %v5429
    %v5431 = vsub.f32 1.0, %v5430
    %v5432 = vmul.f32 %v5429, %v5431
    %v5433 = vadd.f32 %v5429, %v5432
    %vm5434 = vweird.f32 %v5381
    %vm5435 = vweird.f32 %v5429
    %vm5436 = vmor %vm5434, %vm5435
    %v5437 = vsel %vm5436, %v5429, %v5433
    %v5438 = vand.u32 2147483647, %v5381
    %vm5439 = vcmp.eq.f32.partialorder %v5438, 8.507059e+37
    %v5440 = vand.u32 %v5381, 2147483648
    %v5441 = vor.u32 1.1754944e-38, %v5440
    %v5442 = vsel %vm5439, %v5441, %v5437
    %v5443 = vmul.f32 1.0, %v5442
    %v5444 = vrcp.pop %v5382
    %v5445 = vmul.f32 %v5382, %v5444
    %v5446 = vsub.f32 1.0, %v5445
    %v5447 = vmul.f32 %v5444, %v5446
    %v5448 = vadd.f32 %v5444, %v5447
    %vm5449 = vweird.f32 %v5382
    %vm5450 = vweird.f32 %v5444
    %vm5451 = vmor %vm5449, %vm5450
    %v5452 = vsel %vm5451, %v5444, %v5448
    %v5453 = vand.u32 2147483647, %v5382
    %vm5454 = vcmp.eq.f32.partialorder %v5453, 8.507059e+37
    %v5455 = vand.u32 %v5382, 2147483648
    %v5456 = vor.u32 1.1754944e-38, %v5455
    %v5457 = vsel %vm5454, %v5456, %v5452
    %v5458 = vmul.f32 1.0, %v5457
    %v5459 = vrcp.pop %v5383
    %v5460 = vmul.f32 %v5383, %v5459
    %v5461 = vsub.f32 1.0, %v5460
    %v5462 = vmul.f32 %v5459, %v5461
    %v5463 = vadd.f32 %v5459, %v5462
    %vm5464 = vweird.f32 %v5383
    %vm5465 = vweird.f32 %v5459
    %vm5466 = vmor %vm5464, %vm5465
    %v5467 = vsel %vm5466, %v5459, %v5463
    %v5468 = vand.u32 2147483647, %v5383
    %vm5469 = vcmp.eq.f32.partialorder %v5468, 8.507059e+37
    %v5470 = vand.u32 %v5383, 2147483648
    %v5471 = vor.u32 1.1754944e-38, %v5470
    %v5472 = vsel %vm5469, %v5471, %v5467
    %v5473 = vmul.f32 1.0, %v5472
    %v5474 = vtanh.pop %v5229
    %v5475 = vtanh.pop %v5233
    %v5476 = vmul.f32 %v5413, %v5078
    %v5477 = vmul.f32 %v5458, %v5079
    %v5478 = vmul.f32 %v5398, %v5474
    %v5479 = vmul.f32 %v5443, %v5475
    %v5480 = vadd.f32 %v5476, %v5478
    %v5481 = vadd.f32 %v5477, %v5479
    %v5482 = vtanh.pop %v5480
    %v5483 = vtanh.pop %v5481
    %v5484 = vmul.f32 %v5428, %v5482
    %v5485 = vmul.f32 %v5473, %v5483
    %v5486 = vadd.f32 %v5084, %v5358
    %v5487 = vadd.f32 %v5085, %v5359
    %v5488 = vadd.f32 %v5086, %v5484
    %v5489 = vadd.f32 %v5087, %v5485
    %5490 = vst [vmem:[#allocation13] sm:$0xff] %v5486
    %5491 = vst [vmem:[#allocation13 + $0x10] sm:$0xff] %v5487
    %5492 = vst [vmem:[#allocation13 + $0x8] sm:$0xff] %v5488
    %5493 = vst [vmem:[#allocation13 + $0x18] sm:$0xff] %v5489
    // Predicated region
    $region42: #{tpu_custom_call.1} parent=1 // pred_check
      _
    $region43: #{tpu_custom_call.1} parent=1 // pred_check_branch
      %5495 = sbr.rel (0) target = $region45
    $region44: #{tpu_custom_call.1} parent=1 // pred_region
      %5497 = vsyncadd [#allocation6], 0
      %s5498 = sshll.u32 [#allocation13], 4
      %s5499 = int_to_ptr.vmem [resolvable:$true] %s5498
      %s5500 = sshll.u32 %s5, 4
      %s5501 = int_to_ptr.hbm [resolvable:$true] %s5500
      %5506 = dma.vmem_to_hbm [thread:$0]  %s5499, 512, %s5501, [#allocation6], 256, 256, 16
    $region45: #{tpu_custom_call.1} parent=1 // pred_fallthru
      _
    // Predicated region
    $region46: #{tpu_custom_call.1} parent=1 // pred_check
      _
    $region47: #{tpu_custom_call.1} parent=1 // pred_check_branch
      %5508 = sbr.rel (0) target = $region49
    $region48: #{tpu_custom_call.1} parent=1 // pred_region
      %5510 = dma.done [#allocation6], 512
    $region49: #{tpu_custom_call.1} parent=1 // pred_fallthru
      _
    %5511 = vsyncpa [#allocation5], 1
    %5512 = vsyncpa [#allocation8], 1
    %5513 = vsyncpa [#allocation11], 1
    %5514 = vsyncpa [#allocation6], 1

</llo_original>
